<compile_context>
chip_gen: v7x
topology: tpu7x:2x2x1
jax: 0.10.0
libtpu: 0.0.40
codegen_flags: <defaults>
</compile_context>

<pallas_src>
import math
import jax
import jax.numpy as jnp
from jax.experimental import pallas as pl
from jax.experimental.pallas import tpu as pltpu

# ----- mini-BERT config (real bert-base-uncased: H=768, L=12, nh=12, V=30522) -----
VOCAB = 128
MAX_SEQ = 8
HIDDEN = 128                       # lane-dense: multiple of 128
NUM_HEADS = 4
HEAD_DIM = HIDDEN // NUM_HEADS     # 32
INTERMEDIATE = 4 * HIDDEN          # 512
NUM_LAYERS = 2
LN_EPS = 1e-12                     # BERT layer-norm epsilon


# ----------------------------- in-kernel helpers -----------------------------
def _layernorm(x, gamma, beta):
    # f32 LayerNorm over the hidden (lane) axis; rsqrt lowers to the EUP.
    mu = jnp.mean(x, axis=-1, keepdims=True)
    var = jnp.mean((x - mu) ** 2, axis=-1, keepdims=True)
    return (x - mu) * jax.lax.rsqrt(var + LN_EPS) * gamma + beta


def _gelu(x):
    # TODO(synk): HF BERT uses exact erf-GELU; tanh approximation used here.
    c = math.sqrt(2.0 / math.pi)
    return 0.5 * x * (1.0 + jnp.tanh(c * (x + 0.044715 * x * x * x)))


# --------------------------------- kernel ------------------------------------
def bert_encoder_kernel(x_ref, mask_ref, eg_ref, eb_ref,
                        wqkv_ref, bqkv_ref, wo_ref, bo_ref, g1_ref, b1_ref,
                        w1_ref, bi1_ref, w2_ref, bi2_ref, g2_ref, b2_ref,
                        o_ref):
    """One grid step = one batch row; all layers run in-kernel."""
    S, H = MAX_SEQ, HIDDEN

    # embeddings LayerNorm (dropout = identity in eval)
    x = _layernorm(x_ref[0], eg_ref[...], eb_ref[...])            # (S, H) f32

    # additive attention mask, kept in f32 (bf16 -1e9 would lose padding guarantee)
    neg = (1.0 - mask_ref[0]) * jnp.float32(-1e9)                 # (1, S)
    scale = jnp.float32(1.0 / math.sqrt(HEAD_DIM))

    # statically-unrolled layer loop; weights stacked (L, ...) stay resident in VMEM
    for l in range(NUM_LAYERS):
        xb = x.astype(jnp.bfloat16)
        # fused QKV projection: one (S,H)x(H,3H) MXU matmul, f32 accumulation
        qkv = jnp.dot(xb, wqkv_ref[l],
                      preferred_element_type=jnp.float32) + bqkv_ref[l]   # (S, 3H)

        # per-head attention as pure 2-D MXU dots; context built as values and
        # concatenated along lanes (no scratch writes, no masked stores)
        ctx_parts = []
        for h in range(NUM_HEADS):
            lo = h * HEAD_DIM
            qh = qkv[:, lo:lo + HEAD_DIM].astype(jnp.bfloat16)            # (S, d)
            kh = qkv[:, H + lo:H + lo + HEAD_DIM].astype(jnp.bfloat16)    # (S, d)
            vh = qkv[:, 2 * H + lo:2 * H + lo + HEAD_DIM].astype(jnp.bfloat16)
            # s = q @ k^T  (contract head dim of both operands)
            s = jax.lax.dot_general(qh, kh, (((1,), (1,)), ((), ())),
                                    preferred_element_type=jnp.float32)   # (S, S)
            s = s * scale + neg
            s = s - jnp.max(s, axis=-1, keepdims=True)
            p = jnp.exp(s)
            # divide -> EUP reciprocal (frees the VALU slot)
            p = p * pl.reciprocal(jnp.sum(p, axis=-1, keepdims=True), approx=True)
            ctx_parts.append(jnp.dot(p.astype(jnp.bfloat16), vh,
                                     preferred_element_type=jnp.float32))  # (S, d)
        ctx = jnp.concatenate(ctx_parts, axis=-1)                          # (S, H)

        attn = jnp.dot(ctx.astype(jnp.bfloat16), wo_ref[l],
                       preferred_element_type=jnp.float32) + bo_ref[l]
        h1 = _layernorm(x + attn, g1_ref[l], b1_ref[l])                    # post-attn LN

        ff = _gelu(jnp.dot(h1.astype(jnp.bfloat16), w1_ref[l],
                           preferred_element_type=jnp.float32) + bi1_ref[l])
        ff = jnp.dot(ff.astype(jnp.bfloat16), w2_ref[l],
                     preferred_element_type=jnp.float32) + bi2_ref[l]
        x = _layernorm(h1 + ff, g2_ref[l], b2_ref[l])                      # post-FFN LN

    # only the CLS-token hidden state goes back to HBM
    o_ref[0] = x[0:1, :]                                                   # (1, H)


# -------------------------------- wrapper ------------------------------------
def _full_spec(arr):
    # whole array resident in VMEM; constant block index => fetched once.
    return pl.BlockSpec(arr.shape, lambda b, _nd=arr.ndim: (0,) * _nd)


def bert_encoder(emb, mask3, params):
    """emb: (B, S, H) f32 summed embeddings; mask3: (B, 1, S) f32 1/0.
    Returns CLS hidden states (B, H) f32."""
    B, S, H = emb.shape
    st = params['stacks']
    args = (emb, mask3, params['emb_ln_g'], params['emb_ln_b'],
            st['wqkv'], st['bqkv'], st['wo'], st['bo'], st['ln1_g'], st['ln1_b'],
            st['w1'], st['b1'], st['w2'], st['b2'], st['ln2_g'], st['ln2_b'])

    in_specs = ([pl.BlockSpec((1, S, H), lambda b: (b, 0, 0)),
                 pl.BlockSpec((1, 1, S), lambda b: (b, 0, 0))]
                + [_full_spec(a) for a in args[2:]])

    out = pl.pallas_call(
        bert_encoder_kernel,
        out_shape=jax.ShapeDtypeStruct((B, 1, H), jnp.float32),
        grid=(B,),
        in_specs=in_specs,
        out_specs=pl.BlockSpec((1, 1, H), lambda b: (b, 0, 0)),
        compiler_params=pltpu.CompilerParams(
            dimension_semantics=("parallel",)),   # shards batch across v7x's 2 TCs
    )(*args)
    return out.reshape(B, H)


# ------------------------------ parameter init --------------------------------
def init_params(key):
    keys = iter(jax.random.split(key, 3 + 4 * NUM_LAYERS))

    def w(shape, dtype=jnp.float32):
        return (0.02 * jax.random.normal(next(keys), shape)).astype(dtype)

    L, H, I = NUM_LAYERS, HIDDEN, INTERMEDIATE
    ones = lambda shape: jnp.ones(shape, jnp.float32)
    zeros = lambda shape: jnp.zeros(shape, jnp.float32)

    params = {
        'word_emb': w((VOCAB, H)),
        'pos_emb':  w((MAX_SEQ, H)),
        'type_emb': w((2, H)),
        'emb_ln_g': ones((1, H)),
        'emb_ln_b': zeros((1, H)),
        'stacks': {
            # weight matrices stored bf16 (MXU inputs); biases/LN params f32
            'wqkv': jnp.stack([w((H, 3 * H), jnp.bfloat16) for _ in range(L)]),
            'bqkv': zeros((L, 1, 3 * H)),
            'wo':   jnp.stack([w((H, H), jnp.bfloat16) for _ in range(L)]),
            'bo':   zeros((L, 1, H)),
            'ln1_g': ones((L, 1, H)),
            'ln1_b': zeros((L, 1, H)),
            'w1':   jnp.stack([w((H, I), jnp.bfloat16) for _ in range(L)]),
            'b1':   zeros((L, 1, I)),
            'w2':   jnp.stack([w((I, H), jnp.bfloat16) for _ in range(L)]),
            'b2':   zeros((L, 1, H)),
            'ln2_g': ones((L, 1, H)),
            'ln2_b': zeros((L, 1, H)),
        },
    }
    return params


# ------------------------------ forward (module) -------------------------------
def bert_labeler_forward(params, source_padded, attention_mask):
    """source_padded: int32 (B, S) token ids; attention_mask: (B, S) 1/0.
    Returns cls_hidden: float32 (B, HIDDEN)."""
    B, S = source_padded.shape
    # embedding gather + position/type embeddings (glue, plain JAX)
    # TODO(synk): at real vocab size (30522x768) move this gather in-kernel via
    #             PrefetchScalarGridSpec row gather instead of jnp.take.
    word = jnp.take(params['word_emb'], source_padded, axis=0)        # (B, S, H)
    pos = params['pos_emb'][:S][None, :, :]                           # (1, S, H)
    typ = params['type_emb'][0][None, None, :]                        # token_type_ids = 0
    emb = (word + pos + typ).astype(jnp.float32)

    mask3 = attention_mask.astype(jnp.float32).reshape(B, 1, S)
    cls_hidden = bert_encoder(emb, mask3, params)                     # (B, H)
    return cls_hidden


if __name__ == "__main__":
    key = jax.random.PRNGKey(0)
    pkey, ikey = jax.random.split(key)
    params = init_params(pkey)

    B, S = 2, MAX_SEQ
    source_padded = jax.random.randint(ikey, (B, S), 0, VOCAB, dtype=jnp.int32)
    attention_mask = jnp.array([[1] * S, [1] * (S - 3) + [0] * 3], dtype=jnp.int32)

    out = bert_labeler_forward(params, source_padded, attention_mask)
    out = jax.block_until_ready(out)
    assert out.shape == (B, HIDDEN) and out.dtype == jnp.float32
    print("KERNEL_OK")
</pallas_src>

<mosaic_0001>
module attributes {stable_mosaic.version = 11 : i64} {
  func.func @bert_encoder_kernel(%arg0: i32, %arg1: memref<1x8x128xf32, #tpu.memory_space<vmem>>, %arg2: memref<1x1x8xf32, #tpu.memory_space<vmem>>, %arg3: memref<1x128xf32, #tpu.memory_space<vmem>>, %arg4: memref<1x128xf32, #tpu.memory_space<vmem>>, %arg5: memref<2x128x384xbf16, #tpu.memory_space<vmem>>, %arg6: memref<2x1x384xf32, #tpu.memory_space<vmem>>, %arg7: memref<2x128x128xbf16, #tpu.memory_space<vmem>>, %arg8: memref<2x1x128xf32, #tpu.memory_space<vmem>>, %arg9: memref<2x1x128xf32, #tpu.memory_space<vmem>>, %arg10: memref<2x1x128xf32, #tpu.memory_space<vmem>>, %arg11: memref<2x128x512xbf16, #tpu.memory_space<vmem>>, %arg12: memref<2x1x512xf32, #tpu.memory_space<vmem>>, %arg13: memref<2x512x128xbf16, #tpu.memory_space<vmem>>, %arg14: memref<2x1x128xf32, #tpu.memory_space<vmem>>, %arg15: memref<2x1x128xf32, #tpu.memory_space<vmem>>, %arg16: memref<2x1x128xf32, #tpu.memory_space<vmem>>, %arg17: memref<1x1x128xf32, #tpu.memory_space<vmem>>) attributes {dimension_semantics = [#tpu.dimension_semantics<parallel>], iteration_bounds = array<i64: 2>, scalar_prefetch = 0 : i64, scratch_operands = 0 : i64, tpu.core_type = #tpu.core_type<tc>, window_params = [{transform_indices = @transform_0, window_bounds = array<i64: 1, 8, 128>}, {transform_indices = @transform_1, window_bounds = array<i64: 1, 1, 8>}, {pipeline_mode = #tpu.pipeline_mode<synchronous>, transform_indices = @transform_2, window_bounds = array<i64: 1, 128>}, {pipeline_mode = #tpu.pipeline_mode<synchronous>, transform_indices = @transform_3, window_bounds = array<i64: 1, 128>}, {pipeline_mode = #tpu.pipeline_mode<synchronous>, transform_indices = @transform_4, window_bounds = array<i64: 2, 128, 384>}, {pipeline_mode = #tpu.pipeline_mode<synchronous>, transform_indices = @transform_5, window_bounds = array<i64: 2, 1, 384>}, {pipeline_mode = #tpu.pipeline_mode<synchronous>, transform_indices = @transform_6, window_bounds = array<i64: 2, 128, 128>}, {pipeline_mode = #tpu.pipeline_mode<synchronous>, transform_indices = @transform_7, window_bounds = array<i64: 2, 1, 128>}, {pipeline_mode = #tpu.pipeline_mode<synchronous>, transform_indices = @transform_8, window_bounds = array<i64: 2, 1, 128>}, {pipeline_mode = #tpu.pipeline_mode<synchronous>, transform_indices = @transform_9, window_bounds = array<i64: 2, 1, 128>}, {pipeline_mode = #tpu.pipeline_mode<synchronous>, transform_indices = @transform_10, window_bounds = array<i64: 2, 128, 512>}, {pipeline_mode = #tpu.pipeline_mode<synchronous>, transform_indices = @transform_11, window_bounds = array<i64: 2, 1, 512>}, {pipeline_mode = #tpu.pipeline_mode<synchronous>, transform_indices = @transform_12, window_bounds = array<i64: 2, 512, 128>}, {pipeline_mode = #tpu.pipeline_mode<synchronous>, transform_indices = @transform_13, window_bounds = array<i64: 2, 1, 128>}, {pipeline_mode = #tpu.pipeline_mode<synchronous>, transform_indices = @transform_14, window_bounds = array<i64: 2, 1, 128>}, {pipeline_mode = #tpu.pipeline_mode<synchronous>, transform_indices = @transform_15, window_bounds = array<i64: 2, 1, 128>}, {transform_indices = @transform_16, window_bounds = array<i64: 1, 1, 128>}]} {
    %c0 = arith.constant 0 : index
    %c0_0 = arith.constant 0 : index
    %c0_1 = arith.constant 0 : index
    %0 = vector.load %arg1[%c0, %c0_0, %c0_1] : memref<1x8x128xf32, #tpu.memory_space<vmem>>, vector<1x8x128xf32>
    %1 = vector.shape_cast %0 : vector<1x8x128xf32> to vector<8x128xf32>
    %c0_2 = arith.constant 0 : index
    %c0_3 = arith.constant 0 : index
    %2 = vector.load %arg3[%c0_2, %c0_3] : memref<1x128xf32, #tpu.memory_space<vmem>>, vector<1x128xf32>
    %c0_4 = arith.constant 0 : index
    %c0_5 = arith.constant 0 : index
    %3 = vector.load %arg4[%c0_4, %c0_5] : memref<1x128xf32, #tpu.memory_space<vmem>>, vector<1x128xf32>
    %cst = arith.constant dense<0.000000e+00> : vector<8xf32>
    %4 = vector.multi_reduction <add>, %1, %cst [1] : vector<8x128xf32> to vector<8xf32>
    %5 = vector.shape_cast %4 : vector<8xf32> to vector<8x1xf32>
    %cst_6 = arith.constant 1.280000e+02 : f32
    %6 = vector.broadcast %cst_6 : f32 to vector<8x1xf32>
    %7 = arith.divf %5, %6 : vector<8x1xf32>
    %8 = vector.broadcast %7 : vector<8x1xf32> to vector<8x128xf32>
    %9 = arith.subf %1, %8 : vector<8x128xf32>
    %10 = arith.mulf %9, %9 : vector<8x128xf32>
    %cst_7 = arith.constant dense<0.000000e+00> : vector<8xf32>
    %11 = vector.multi_reduction <add>, %10, %cst_7 [1] : vector<8x128xf32> to vector<8xf32>
    %12 = vector.shape_cast %11 : vector<8xf32> to vector<8x1xf32>
    %cst_8 = arith.constant 1.280000e+02 : f32
    %13 = vector.broadcast %cst_8 : f32 to vector<8x1xf32>
    %14 = arith.divf %12, %13 : vector<8x1xf32>
    %15 = vector.broadcast %7 : vector<8x1xf32> to vector<8x128xf32>
    %16 = arith.subf %1, %15 : vector<8x128xf32>
    %cst_9 = arith.constant 9.99999996E-13 : f32
    %17 = vector.broadcast %cst_9 : f32 to vector<8x1xf32>
    %18 = arith.addf %14, %17 : vector<8x1xf32>
    %19 = math.rsqrt %18 : vector<8x1xf32>
    %20 = vector.broadcast %19 : vector<8x1xf32> to vector<8x128xf32>
    %21 = arith.mulf %16, %20 : vector<8x128xf32>
    %22 = vector.broadcast %2 : vector<1x128xf32> to vector<8x128xf32>
    %23 = arith.mulf %21, %22 : vector<8x128xf32>
    %24 = vector.broadcast %3 : vector<1x128xf32> to vector<8x128xf32>
    %25 = arith.addf %23, %24 : vector<8x128xf32>
    %c0_10 = arith.constant 0 : index
    %c0_11 = arith.constant 0 : index
    %c0_12 = arith.constant 0 : index
    %26 = vector.load %arg2[%c0_10, %c0_11, %c0_12] : memref<1x1x8xf32, #tpu.memory_space<vmem>>, vector<1x1x8xf32>
    %27 = vector.shape_cast %26 : vector<1x1x8xf32> to vector<1x8xf32>
    %cst_13 = arith.constant 1.000000e+00 : f32
    %28 = vector.broadcast %cst_13 : f32 to vector<1x8xf32>
    %29 = arith.subf %28, %27 : vector<1x8xf32>
    %cst_14 = arith.constant -1.000000e+09 : f32
    %30 = vector.broadcast %cst_14 : f32 to vector<1x8xf32>
    %31 = arith.mulf %29, %30 : vector<1x8xf32>
    %32 = arith.truncf %25 : vector<8x128xf32> to vector<8x128xbf16>
    %c0_15 = arith.constant 0 : index
    %c0_16 = arith.constant 0 : index
    %c0_17 = arith.constant 0 : index
    %33 = vector.load %arg5[%c0_15, %c0_16, %c0_17] : memref<2x128x384xbf16, #tpu.memory_space<vmem>>, vector<1x128x384xbf16>
    %34 = vector.shape_cast %33 : vector<1x128x384xbf16> to vector<128x384xbf16>
    %cst_18 = arith.constant dense<0.000000e+00> : vector<8x384xf32>
    %35 = tpu.matmul %32, %34, %cst_18 {dimension_numbers = #tpu.dot_dimension_numbers<[1], [0], [0], [1], [0, 0, 1, 1], [], []>} : vector<8x128xbf16>, vector<128x384xbf16>, vector<8x384xf32> -> vector<8x384xf32>
    %c0_19 = arith.constant 0 : index
    %c0_20 = arith.constant 0 : index
    %c0_21 = arith.constant 0 : index
    %36 = vector.load %arg6[%c0_19, %c0_20, %c0_21] : memref<2x1x384xf32, #tpu.memory_space<vmem>>, vector<1x1x384xf32>
    %37 = vector.shape_cast %36 : vector<1x1x384xf32> to vector<1x384xf32>
    %38 = vector.broadcast %37 : vector<1x384xf32> to vector<8x384xf32>
    %39 = arith.addf %35, %38 : vector<8x384xf32>
    %40 = vector.extract_strided_slice %39 {offsets = [0, 0], sizes = [8, 32], strides = [1, 1]} : vector<8x384xf32> to vector<8x32xf32>
    %41 = arith.truncf %40 : vector<8x32xf32> to vector<8x32xbf16>
    %42 = vector.extract_strided_slice %39 {offsets = [0, 128], sizes = [8, 32], strides = [1, 1]} : vector<8x384xf32> to vector<8x32xf32>
    %43 = arith.truncf %42 : vector<8x32xf32> to vector<8x32xbf16>
    %44 = vector.extract_strided_slice %39 {offsets = [0, 256], sizes = [8, 32], strides = [1, 1]} : vector<8x384xf32> to vector<8x32xf32>
    %45 = arith.truncf %44 : vector<8x32xf32> to vector<8x32xbf16>
    %cst_22 = arith.constant dense<0.000000e+00> : vector<8x8xf32>
    %46 = tpu.matmul %41, %43, %cst_22 {dimension_numbers = #tpu.dot_dimension_numbers<[1], [1], [0], [0], [0, 0, 1, 0], [], []>} : vector<8x32xbf16>, vector<8x32xbf16>, vector<8x8xf32> -> vector<8x8xf32>
    %cst_23 = arith.constant 0.176776692 : f32
    %47 = vector.broadcast %cst_23 : f32 to vector<8x8xf32>
    %48 = arith.mulf %46, %47 : vector<8x8xf32>
    %49 = vector.broadcast %31 : vector<1x8xf32> to vector<8x8xf32>
    %50 = arith.addf %48, %49 : vector<8x8xf32>
    %cst_24 = arith.constant dense<0xFF800000> : vector<8xf32>
    %51 = vector.multi_reduction <maximumf>, %50, %cst_24 [1] : vector<8x8xf32> to vector<8xf32>
    %52 = vector.shape_cast %51 : vector<8xf32> to vector<8x1xf32>
    %53 = vector.broadcast %52 : vector<8x1xf32> to vector<8x8xf32>
    %54 = arith.subf %50, %53 : vector<8x8xf32>
    %55 = math.exp %54 : vector<8x8xf32>
    %cst_25 = arith.constant dense<0.000000e+00> : vector<8xf32>
    %56 = vector.multi_reduction <add>, %55, %cst_25 [1] : vector<8x8xf32> to vector<8xf32>
    %57 = vector.shape_cast %56 : vector<8xf32> to vector<8x1xf32>
    %58 = tpu.reciprocal %57 {approx = true} : vector<8x1xf32> -> vector<8x1xf32>
    %59 = vector.broadcast %58 : vector<8x1xf32> to vector<8x8xf32>
    %60 = arith.mulf %55, %59 : vector<8x8xf32>
    %61 = arith.truncf %60 : vector<8x8xf32> to vector<8x8xbf16>
    %cst_26 = arith.constant dense<0.000000e+00> : vector<8x32xf32>
    %62 = tpu.matmul %61, %45, %cst_26 {dimension_numbers = #tpu.dot_dimension_numbers<[1], [0], [0], [1], [0, 0, 1, 1], [], []>} : vector<8x8xbf16>, vector<8x32xbf16>, vector<8x32xf32> -> vector<8x32xf32>
    %63 = vector.extract_strided_slice %39 {offsets = [0, 32], sizes = [8, 32], strides = [1, 1]} : vector<8x384xf32> to vector<8x32xf32>
    %64 = arith.truncf %63 : vector<8x32xf32> to vector<8x32xbf16>
    %65 = vector.extract_strided_slice %39 {offsets = [0, 160], sizes = [8, 32], strides = [1, 1]} : vector<8x384xf32> to vector<8x32xf32>
    %66 = arith.truncf %65 : vector<8x32xf32> to vector<8x32xbf16>
    %67 = vector.extract_strided_slice %39 {offsets = [0, 288], sizes = [8, 32], strides = [1, 1]} : vector<8x384xf32> to vector<8x32xf32>
    %68 = arith.truncf %67 : vector<8x32xf32> to vector<8x32xbf16>
    %cst_27 = arith.constant dense<0.000000e+00> : vector<8x8xf32>
    %69 = tpu.matmul %64, %66, %cst_27 {dimension_numbers = #tpu.dot_dimension_numbers<[1], [1], [0], [0], [0, 0, 1, 0], [], []>} : vector<8x32xbf16>, vector<8x32xbf16>, vector<8x8xf32> -> vector<8x8xf32>
    %cst_28 = arith.constant 0.176776692 : f32
    %70 = vector.broadcast %cst_28 : f32 to vector<8x8xf32>
    %71 = arith.mulf %69, %70 : vector<8x8xf32>
    %72 = vector.broadcast %31 : vector<1x8xf32> to vector<8x8xf32>
    %73 = arith.addf %71, %72 : vector<8x8xf32>
    %cst_29 = arith.constant dense<0xFF800000> : vector<8xf32>
    %74 = vector.multi_reduction <maximumf>, %73, %cst_29 [1] : vector<8x8xf32> to vector<8xf32>
    %75 = vector.shape_cast %74 : vector<8xf32> to vector<8x1xf32>
    %76 = vector.broadcast %75 : vector<8x1xf32> to vector<8x8xf32>
    %77 = arith.subf %73, %76 : vector<8x8xf32>
    %78 = math.exp %77 : vector<8x8xf32>
    %cst_30 = arith.constant dense<0.000000e+00> : vector<8xf32>
    %79 = vector.multi_reduction <add>, %78, %cst_30 [1] : vector<8x8xf32> to vector<8xf32>
    %80 = vector.shape_cast %79 : vector<8xf32> to vector<8x1xf32>
    %81 = tpu.reciprocal %80 {approx = true} : vector<8x1xf32> -> vector<8x1xf32>
    %82 = vector.broadcast %81 : vector<8x1xf32> to vector<8x8xf32>
    %83 = arith.mulf %78, %82 : vector<8x8xf32>
    %84 = arith.truncf %83 : vector<8x8xf32> to vector<8x8xbf16>
    %cst_31 = arith.constant dense<0.000000e+00> : vector<8x32xf32>
    %85 = tpu.matmul %84, %68, %cst_31 {dimension_numbers = #tpu.dot_dimension_numbers<[1], [0], [0], [1], [0, 0, 1, 1], [], []>} : vector<8x8xbf16>, vector<8x32xbf16>, vector<8x32xf32> -> vector<8x32xf32>
    %86 = vector.extract_strided_slice %39 {offsets = [0, 64], sizes = [8, 32], strides = [1, 1]} : vector<8x384xf32> to vector<8x32xf32>
    %87 = arith.truncf %86 : vector<8x32xf32> to vector<8x32xbf16>
    %88 = vector.extract_strided_slice %39 {offsets = [0, 192], sizes = [8, 32], strides = [1, 1]} : vector<8x384xf32> to vector<8x32xf32>
    %89 = arith.truncf %88 : vector<8x32xf32> to vector<8x32xbf16>
    %90 = vector.extract_strided_slice %39 {offsets = [0, 320], sizes = [8, 32], strides = [1, 1]} : vector<8x384xf32> to vector<8x32xf32>
    %91 = arith.truncf %90 : vector<8x32xf32> to vector<8x32xbf16>
    %cst_32 = arith.constant dense<0.000000e+00> : vector<8x8xf32>
    %92 = tpu.matmul %87, %89, %cst_32 {dimension_numbers = #tpu.dot_dimension_numbers<[1], [1], [0], [0], [0, 0, 1, 0], [], []>} : vector<8x32xbf16>, vector<8x32xbf16>, vector<8x8xf32> -> vector<8x8xf32>
    %cst_33 = arith.constant 0.176776692 : f32
    %93 = vector.broadcast %cst_33 : f32 to vector<8x8xf32>
    %94 = arith.mulf %92, %93 : vector<8x8xf32>
    %95 = vector.broadcast %31 : vector<1x8xf32> to vector<8x8xf32>
    %96 = arith.addf %94, %95 : vector<8x8xf32>
    %cst_34 = arith.constant dense<0xFF800000> : vector<8xf32>
    %97 = vector.multi_reduction <maximumf>, %96, %cst_34 [1] : vector<8x8xf32> to vector<8xf32>
    %98 = vector.shape_cast %97 : vector<8xf32> to vector<8x1xf32>
    %99 = vector.broadcast %98 : vector<8x1xf32> to vector<8x8xf32>
    %100 = arith.subf %96, %99 : vector<8x8xf32>
    %101 = math.exp %100 : vector<8x8xf32>
    %cst_35 = arith.constant dense<0.000000e+00> : vector<8xf32>
    %102 = vector.multi_reduction <add>, %101, %cst_35 [1] : vector<8x8xf32> to vector<8xf32>
    %103 = vector.shape_cast %102 : vector<8xf32> to vector<8x1xf32>
    %104 = tpu.reciprocal %103 {approx = true} : vector<8x1xf32> -> vector<8x1xf32>
    %105 = vector.broadcast %104 : vector<8x1xf32> to vector<8x8xf32>
    %106 = arith.mulf %101, %105 : vector<8x8xf32>
    %107 = arith.truncf %106 : vector<8x8xf32> to vector<8x8xbf16>
    %cst_36 = arith.constant dense<0.000000e+00> : vector<8x32xf32>
    %108 = tpu.matmul %107, %91, %cst_36 {dimension_numbers = #tpu.dot_dimension_numbers<[1], [0], [0], [1], [0, 0, 1, 1], [], []>} : vector<8x8xbf16>, vector<8x32xbf16>, vector<8x32xf32> -> vector<8x32xf32>
    %109 = vector.extract_strided_slice %39 {offsets = [0, 96], sizes = [8, 32], strides = [1, 1]} : vector<8x384xf32> to vector<8x32xf32>
    %110 = arith.truncf %109 : vector<8x32xf32> to vector<8x32xbf16>
    %111 = vector.extract_strided_slice %39 {offsets = [0, 224], sizes = [8, 32], strides = [1, 1]} : vector<8x384xf32> to vector<8x32xf32>
    %112 = arith.truncf %111 : vector<8x32xf32> to vector<8x32xbf16>
    %113 = vector.extract_strided_slice %39 {offsets = [0, 352], sizes = [8, 32], strides = [1, 1]} : vector<8x384xf32> to vector<8x32xf32>
    %114 = arith.truncf %113 : vector<8x32xf32> to vector<8x32xbf16>
    %cst_37 = arith.constant dense<0.000000e+00> : vector<8x8xf32>
    %115 = tpu.matmul %110, %112, %cst_37 {dimension_numbers = #tpu.dot_dimension_numbers<[1], [1], [0], [0], [0, 0, 1, 0], [], []>} : vector<8x32xbf16>, vector<8x32xbf16>, vector<8x8xf32> -> vector<8x8xf32>
    %cst_38 = arith.constant 0.176776692 : f32
    %116 = vector.broadcast %cst_38 : f32 to vector<8x8xf32>
    %117 = arith.mulf %115, %116 : vector<8x8xf32>
    %118 = vector.broadcast %31 : vector<1x8xf32> to vector<8x8xf32>
    %119 = arith.addf %117, %118 : vector<8x8xf32>
    %cst_39 = arith.constant dense<0xFF800000> : vector<8xf32>
    %120 = vector.multi_reduction <maximumf>, %119, %cst_39 [1] : vector<8x8xf32> to vector<8xf32>
    %121 = vector.shape_cast %120 : vector<8xf32> to vector<8x1xf32>
    %122 = vector.broadcast %121 : vector<8x1xf32> to vector<8x8xf32>
    %123 = arith.subf %119, %122 : vector<8x8xf32>
    %124 = math.exp %123 : vector<8x8xf32>
    %cst_40 = arith.constant dense<0.000000e+00> : vector<8xf32>
    %125 = vector.multi_reduction <add>, %124, %cst_40 [1] : vector<8x8xf32> to vector<8xf32>
    %126 = vector.shape_cast %125 : vector<8xf32> to vector<8x1xf32>
    %127 = tpu.reciprocal %126 {approx = true} : vector<8x1xf32> -> vector<8x1xf32>
    %128 = vector.broadcast %127 : vector<8x1xf32> to vector<8x8xf32>
    %129 = arith.mulf %124, %128 : vector<8x8xf32>
    %130 = arith.truncf %129 : vector<8x8xf32> to vector<8x8xbf16>
    %cst_41 = arith.constant dense<0.000000e+00> : vector<8x32xf32>
    %131 = tpu.matmul %130, %114, %cst_41 {dimension_numbers = #tpu.dot_dimension_numbers<[1], [0], [0], [1], [0, 0, 1, 1], [], []>} : vector<8x8xbf16>, vector<8x32xbf16>, vector<8x32xf32> -> vector<8x32xf32>
    %132 = tpu.concatenate %62, %85, %108, %131 in 1 : vector<8x32xf32>, vector<8x32xf32>, vector<8x32xf32>, vector<8x32xf32> -> vector<8x128xf32>
    %133 = arith.truncf %132 : vector<8x128xf32> to vector<8x128xbf16>
    %c0_42 = arith.constant 0 : index
    %c0_43 = arith.constant 0 : index
    %c0_44 = arith.constant 0 : index
    %134 = vector.load %arg7[%c0_42, %c0_43, %c0_44] : memref<2x128x128xbf16, #tpu.memory_space<vmem>>, vector<1x128x128xbf16>
    %135 = vector.shape_cast %134 : vector<1x128x128xbf16> to vector<128x128xbf16>
    %cst_45 = arith.constant dense<0.000000e+00> : vector<8x128xf32>
    %136 = tpu.matmul %133, %135, %cst_45 {dimension_numbers = #tpu.dot_dimension_numbers<[1], [0], [0], [1], [0, 0, 1, 1], [], []>} : vector<8x128xbf16>, vector<128x128xbf16>, vector<8x128xf32> -> vector<8x128xf32>
    %c0_46 = arith.constant 0 : index
    %c0_47 = arith.constant 0 : index
    %c0_48 = arith.constant 0 : index
    %137 = vector.load %arg8[%c0_46, %c0_47, %c0_48] : memref<2x1x128xf32, #tpu.memory_space<vmem>>, vector<1x1x128xf32>
    %138 = vector.shape_cast %137 : vector<1x1x128xf32> to vector<1x128xf32>
    %139 = vector.broadcast %138 : vector<1x128xf32> to vector<8x128xf32>
    %140 = arith.addf %136, %139 : vector<8x128xf32>
    %141 = arith.addf %25, %140 : vector<8x128xf32>
    %c0_49 = arith.constant 0 : index
    %c0_50 = arith.constant 0 : index
    %c0_51 = arith.constant 0 : index
    %142 = vector.load %arg9[%c0_49, %c0_50, %c0_51] : memref<2x1x128xf32, #tpu.memory_space<vmem>>, vector<1x1x128xf32>
    %143 = vector.shape_cast %142 : vector<1x1x128xf32> to vector<1x128xf32>
    %c0_52 = arith.constant 0 : index
    %c0_53 = arith.constant 0 : index
    %c0_54 = arith.constant 0 : index
    %144 = vector.load %arg10[%c0_52, %c0_53, %c0_54] : memref<2x1x128xf32, #tpu.memory_space<vmem>>, vector<1x1x128xf32>
    %145 = vector.shape_cast %144 : vector<1x1x128xf32> to vector<1x128xf32>
    %cst_55 = arith.constant dense<0.000000e+00> : vector<8xf32>
    %146 = vector.multi_reduction <add>, %141, %cst_55 [1] : vector<8x128xf32> to vector<8xf32>
    %147 = vector.shape_cast %146 : vector<8xf32> to vector<8x1xf32>
    %cst_56 = arith.constant 1.280000e+02 : f32
    %148 = vector.broadcast %cst_56 : f32 to vector<8x1xf32>
    %149 = arith.divf %147, %148 : vector<8x1xf32>
    %150 = vector.broadcast %149 : vector<8x1xf32> to vector<8x128xf32>
    %151 = arith.subf %141, %150 : vector<8x128xf32>
    %152 = arith.mulf %151, %151 : vector<8x128xf32>
    %cst_57 = arith.constant dense<0.000000e+00> : vector<8xf32>
    %153 = vector.multi_reduction <add>, %152, %cst_57 [1] : vector<8x128xf32> to vector<8xf32>
    %154 = vector.shape_cast %153 : vector<8xf32> to vector<8x1xf32>
    %cst_58 = arith.constant 1.280000e+02 : f32
    %155 = vector.broadcast %cst_58 : f32 to vector<8x1xf32>
    %156 = arith.divf %154, %155 : vector<8x1xf32>
    %157 = vector.broadcast %149 : vector<8x1xf32> to vector<8x128xf32>
    %158 = arith.subf %141, %157 : vector<8x128xf32>
    %cst_59 = arith.constant 9.99999996E-13 : f32
    %159 = vector.broadcast %cst_59 : f32 to vector<8x1xf32>
    %160 = arith.addf %156, %159 : vector<8x1xf32>
    %161 = math.rsqrt %160 : vector<8x1xf32>
    %162 = vector.broadcast %161 : vector<8x1xf32> to vector<8x128xf32>
    %163 = arith.mulf %158, %162 : vector<8x128xf32>
    %164 = vector.broadcast %143 : vector<1x128xf32> to vector<8x128xf32>
    %165 = arith.mulf %163, %164 : vector<8x128xf32>
    %166 = vector.broadcast %145 : vector<1x128xf32> to vector<8x128xf32>
    %167 = arith.addf %165, %166 : vector<8x128xf32>
    %168 = arith.truncf %167 : vector<8x128xf32> to vector<8x128xbf16>
    %c0_60 = arith.constant 0 : index
    %c0_61 = arith.constant 0 : index
    %c0_62 = arith.constant 0 : index
    %169 = vector.load %arg11[%c0_60, %c0_61, %c0_62] : memref<2x128x512xbf16, #tpu.memory_space<vmem>>, vector<1x128x512xbf16>
    %170 = vector.shape_cast %169 : vector<1x128x512xbf16> to vector<128x512xbf16>
    %cst_63 = arith.constant dense<0.000000e+00> : vector<8x512xf32>
    %171 = tpu.matmul %168, %170, %cst_63 {dimension_numbers = #tpu.dot_dimension_numbers<[1], [0], [0], [1], [0, 0, 1, 1], [], []>} : vector<8x128xbf16>, vector<128x512xbf16>, vector<8x512xf32> -> vector<8x512xf32>
    %c0_64 = arith.constant 0 : index
    %c0_65 = arith.constant 0 : index
    %c0_66 = arith.constant 0 : index
    %172 = vector.load %arg12[%c0_64, %c0_65, %c0_66] : memref<2x1x512xf32, #tpu.memory_space<vmem>>, vector<1x1x512xf32>
    %173 = vector.shape_cast %172 : vector<1x1x512xf32> to vector<1x512xf32>
    %174 = vector.broadcast %173 : vector<1x512xf32> to vector<8x512xf32>
    %175 = arith.addf %171, %174 : vector<8x512xf32>
    %cst_67 = arith.constant 5.000000e-01 : f32
    %176 = vector.broadcast %cst_67 : f32 to vector<8x512xf32>
    %177 = arith.mulf %176, %175 : vector<8x512xf32>
    %cst_68 = arith.constant 4.471500e-02 : f32
    %178 = vector.broadcast %cst_68 : f32 to vector<8x512xf32>
    %179 = arith.mulf %178, %175 : vector<8x512xf32>
    %180 = arith.mulf %179, %175 : vector<8x512xf32>
    %181 = arith.mulf %180, %175 : vector<8x512xf32>
    %182 = arith.addf %175, %181 : vector<8x512xf32>
    %cst_69 = arith.constant 0.797884583 : f32
    %183 = vector.broadcast %cst_69 : f32 to vector<8x512xf32>
    %184 = arith.mulf %183, %182 : vector<8x512xf32>
    %185 = math.tanh %184 : vector<8x512xf32>
    %cst_70 = arith.constant 1.000000e+00 : f32
    %186 = vector.broadcast %cst_70 : f32 to vector<8x512xf32>
    %187 = arith.addf %186, %185 : vector<8x512xf32>
    %188 = arith.mulf %177, %187 : vector<8x512xf32>
    %189 = arith.truncf %188 : vector<8x512xf32> to vector<8x512xbf16>
    %c0_71 = arith.constant 0 : index
    %c0_72 = arith.constant 0 : index
    %c0_73 = arith.constant 0 : index
    %190 = vector.load %arg13[%c0_71, %c0_72, %c0_73] : memref<2x512x128xbf16, #tpu.memory_space<vmem>>, vector<1x512x128xbf16>
    %191 = vector.shape_cast %190 : vector<1x512x128xbf16> to vector<512x128xbf16>
    %cst_74 = arith.constant dense<0.000000e+00> : vector<8x128xf32>
    %192 = tpu.matmul %189, %191, %cst_74 {dimension_numbers = #tpu.dot_dimension_numbers<[1], [0], [0], [1], [0, 0, 1, 1], [], []>} : vector<8x512xbf16>, vector<512x128xbf16>, vector<8x128xf32> -> vector<8x128xf32>
    %c0_75 = arith.constant 0 : index
    %c0_76 = arith.constant 0 : index
    %c0_77 = arith.constant 0 : index
    %193 = vector.load %arg14[%c0_75, %c0_76, %c0_77] : memref<2x1x128xf32, #tpu.memory_space<vmem>>, vector<1x1x128xf32>
    %194 = vector.shape_cast %193 : vector<1x1x128xf32> to vector<1x128xf32>
    %195 = vector.broadcast %194 : vector<1x128xf32> to vector<8x128xf32>
    %196 = arith.addf %192, %195 : vector<8x128xf32>
    %197 = arith.addf %167, %196 : vector<8x128xf32>
    %c0_78 = arith.constant 0 : index
    %c0_79 = arith.constant 0 : index
    %c0_80 = arith.constant 0 : index
    %198 = vector.load %arg15[%c0_78, %c0_79, %c0_80] : memref<2x1x128xf32, #tpu.memory_space<vmem>>, vector<1x1x128xf32>
    %199 = vector.shape_cast %198 : vector<1x1x128xf32> to vector<1x128xf32>
    %c0_81 = arith.constant 0 : index
    %c0_82 = arith.constant 0 : index
    %c0_83 = arith.constant 0 : index
    %200 = vector.load %arg16[%c0_81, %c0_82, %c0_83] : memref<2x1x128xf32, #tpu.memory_space<vmem>>, vector<1x1x128xf32>
    %201 = vector.shape_cast %200 : vector<1x1x128xf32> to vector<1x128xf32>
    %cst_84 = arith.constant dense<0.000000e+00> : vector<8xf32>
    %202 = vector.multi_reduction <add>, %197, %cst_84 [1] : vector<8x128xf32> to vector<8xf32>
    %203 = vector.shape_cast %202 : vector<8xf32> to vector<8x1xf32>
    %cst_85 = arith.constant 1.280000e+02 : f32
    %204 = vector.broadcast %cst_85 : f32 to vector<8x1xf32>
    %205 = arith.divf %203, %204 : vector<8x1xf32>
    %206 = vector.broadcast %205 : vector<8x1xf32> to vector<8x128xf32>
    %207 = arith.subf %197, %206 : vector<8x128xf32>
    %208 = arith.mulf %207, %207 : vector<8x128xf32>
    %cst_86 = arith.constant dense<0.000000e+00> : vector<8xf32>
    %209 = vector.multi_reduction <add>, %208, %cst_86 [1] : vector<8x128xf32> to vector<8xf32>
    %210 = vector.shape_cast %209 : vector<8xf32> to vector<8x1xf32>
    %cst_87 = arith.constant 1.280000e+02 : f32
    %211 = vector.broadcast %cst_87 : f32 to vector<8x1xf32>
    %212 = arith.divf %210, %211 : vector<8x1xf32>
    %213 = vector.broadcast %205 : vector<8x1xf32> to vector<8x128xf32>
    %214 = arith.subf %197, %213 : vector<8x128xf32>
    %cst_88 = arith.constant 9.99999996E-13 : f32
    %215 = vector.broadcast %cst_88 : f32 to vector<8x1xf32>
    %216 = arith.addf %212, %215 : vector<8x1xf32>
    %217 = math.rsqrt %216 : vector<8x1xf32>
    %218 = vector.broadcast %217 : vector<8x1xf32> to vector<8x128xf32>
    %219 = arith.mulf %214, %218 : vector<8x128xf32>
    %220 = vector.broadcast %199 : vector<1x128xf32> to vector<8x128xf32>
    %221 = arith.mulf %219, %220 : vector<8x128xf32>
    %222 = vector.broadcast %201 : vector<1x128xf32> to vector<8x128xf32>
    %223 = arith.addf %221, %222 : vector<8x128xf32>
    %224 = arith.truncf %223 : vector<8x128xf32> to vector<8x128xbf16>
    %c1 = arith.constant 1 : index
    %c0_89 = arith.constant 0 : index
    %c0_90 = arith.constant 0 : index
    %225 = vector.load %arg5[%c1, %c0_89, %c0_90] : memref<2x128x384xbf16, #tpu.memory_space<vmem>>, vector<1x128x384xbf16>
    %226 = vector.shape_cast %225 : vector<1x128x384xbf16> to vector<128x384xbf16>
    %cst_91 = arith.constant dense<0.000000e+00> : vector<8x384xf32>
    %227 = tpu.matmul %224, %226, %cst_91 {dimension_numbers = #tpu.dot_dimension_numbers<[1], [0], [0], [1], [0, 0, 1, 1], [], []>} : vector<8x128xbf16>, vector<128x384xbf16>, vector<8x384xf32> -> vector<8x384xf32>
    %c1_92 = arith.constant 1 : index
    %c0_93 = arith.constant 0 : index
    %c0_94 = arith.constant 0 : index
    %228 = vector.load %arg6[%c1_92, %c0_93, %c0_94] : memref<2x1x384xf32, #tpu.memory_space<vmem>>, vector<1x1x384xf32>
    %229 = vector.shape_cast %228 : vector<1x1x384xf32> to vector<1x384xf32>
    %230 = vector.broadcast %229 : vector<1x384xf32> to vector<8x384xf32>
    %231 = arith.addf %227, %230 : vector<8x384xf32>
    %232 = vector.extract_strided_slice %231 {offsets = [0, 0], sizes = [8, 32], strides = [1, 1]} : vector<8x384xf32> to vector<8x32xf32>
    %233 = arith.truncf %232 : vector<8x32xf32> to vector<8x32xbf16>
    %234 = vector.extract_strided_slice %231 {offsets = [0, 128], sizes = [8, 32], strides = [1, 1]} : vector<8x384xf32> to vector<8x32xf32>
    %235 = arith.truncf %234 : vector<8x32xf32> to vector<8x32xbf16>
    %236 = vector.extract_strided_slice %231 {offsets = [0, 256], sizes = [8, 32], strides = [1, 1]} : vector<8x384xf32> to vector<8x32xf32>
    %237 = arith.truncf %236 : vector<8x32xf32> to vector<8x32xbf16>
    %cst_95 = arith.constant dense<0.000000e+00> : vector<8x8xf32>
    %238 = tpu.matmul %233, %235, %cst_95 {dimension_numbers = #tpu.dot_dimension_numbers<[1], [1], [0], [0], [0, 0, 1, 0], [], []>} : vector<8x32xbf16>, vector<8x32xbf16>, vector<8x8xf32> -> vector<8x8xf32>
    %cst_96 = arith.constant 0.176776692 : f32
    %239 = vector.broadcast %cst_96 : f32 to vector<8x8xf32>
    %240 = arith.mulf %238, %239 : vector<8x8xf32>
    %241 = vector.broadcast %31 : vector<1x8xf32> to vector<8x8xf32>
    %242 = arith.addf %240, %241 : vector<8x8xf32>
    %cst_97 = arith.constant dense<0xFF800000> : vector<8xf32>
    %243 = vector.multi_reduction <maximumf>, %242, %cst_97 [1] : vector<8x8xf32> to vector<8xf32>
    %244 = vector.shape_cast %243 : vector<8xf32> to vector<8x1xf32>
    %245 = vector.broadcast %244 : vector<8x1xf32> to vector<8x8xf32>
    %246 = arith.subf %242, %245 : vector<8x8xf32>
    %247 = math.exp %246 : vector<8x8xf32>
    %cst_98 = arith.constant dense<0.000000e+00> : vector<8xf32>
    %248 = vector.multi_reduction <add>, %247, %cst_98 [1] : vector<8x8xf32> to vector<8xf32>
    %249 = vector.shape_cast %248 : vector<8xf32> to vector<8x1xf32>
    %250 = tpu.reciprocal %249 {approx = true} : vector<8x1xf32> -> vector<8x1xf32>
    %251 = vector.broadcast %250 : vector<8x1xf32> to vector<8x8xf32>
    %252 = arith.mulf %247, %251 : vector<8x8xf32>
    %253 = arith.truncf %252 : vector<8x8xf32> to vector<8x8xbf16>
    %cst_99 = arith.constant dense<0.000000e+00> : vector<8x32xf32>
    %254 = tpu.matmul %253, %237, %cst_99 {dimension_numbers = #tpu.dot_dimension_numbers<[1], [0], [0], [1], [0, 0, 1, 1], [], []>} : vector<8x8xbf16>, vector<8x32xbf16>, vector<8x32xf32> -> vector<8x32xf32>
    %255 = vector.extract_strided_slice %231 {offsets = [0, 32], sizes = [8, 32], strides = [1, 1]} : vector<8x384xf32> to vector<8x32xf32>
    %256 = arith.truncf %255 : vector<8x32xf32> to vector<8x32xbf16>
    %257 = vector.extract_strided_slice %231 {offsets = [0, 160], sizes = [8, 32], strides = [1, 1]} : vector<8x384xf32> to vector<8x32xf32>
    %258 = arith.truncf %257 : vector<8x32xf32> to vector<8x32xbf16>
    %259 = vector.extract_strided_slice %231 {offsets = [0, 288], sizes = [8, 32], strides = [1, 1]} : vector<8x384xf32> to vector<8x32xf32>
    %260 = arith.truncf %259 : vector<8x32xf32> to vector<8x32xbf16>
    %cst_100 = arith.constant dense<0.000000e+00> : vector<8x8xf32>
    %261 = tpu.matmul %256, %258, %cst_100 {dimension_numbers = #tpu.dot_dimension_numbers<[1], [1], [0], [0], [0, 0, 1, 0], [], []>} : vector<8x32xbf16>, vector<8x32xbf16>, vector<8x8xf32> -> vector<8x8xf32>
    %cst_101 = arith.constant 0.176776692 : f32
    %262 = vector.broadcast %cst_101 : f32 to vector<8x8xf32>
    %263 = arith.mulf %261, %262 : vector<8x8xf32>
    %264 = vector.broadcast %31 : vector<1x8xf32> to vector<8x8xf32>
    %265 = arith.addf %263, %264 : vector<8x8xf32>
    %cst_102 = arith.constant dense<0xFF800000> : vector<8xf32>
    %266 = vector.multi_reduction <maximumf>, %265, %cst_102 [1] : vector<8x8xf32> to vector<8xf32>
    %267 = vector.shape_cast %266 : vector<8xf32> to vector<8x1xf32>
    %268 = vector.broadcast %267 : vector<8x1xf32> to vector<8x8xf32>
    %269 = arith.subf %265, %268 : vector<8x8xf32>
    %270 = math.exp %269 : vector<8x8xf32>
    %cst_103 = arith.constant dense<0.000000e+00> : vector<8xf32>
    %271 = vector.multi_reduction <add>, %270, %cst_103 [1] : vector<8x8xf32> to vector<8xf32>
    %272 = vector.shape_cast %271 : vector<8xf32> to vector<8x1xf32>
    %273 = tpu.reciprocal %272 {approx = true} : vector<8x1xf32> -> vector<8x1xf32>
    %274 = vector.broadcast %273 : vector<8x1xf32> to vector<8x8xf32>
    %275 = arith.mulf %270, %274 : vector<8x8xf32>
    %276 = arith.truncf %275 : vector<8x8xf32> to vector<8x8xbf16>
    %cst_104 = arith.constant dense<0.000000e+00> : vector<8x32xf32>
    %277 = tpu.matmul %276, %260, %cst_104 {dimension_numbers = #tpu.dot_dimension_numbers<[1], [0], [0], [1], [0, 0, 1, 1], [], []>} : vector<8x8xbf16>, vector<8x32xbf16>, vector<8x32xf32> -> vector<8x32xf32>
    %278 = vector.extract_strided_slice %231 {offsets = [0, 64], sizes = [8, 32], strides = [1, 1]} : vector<8x384xf32> to vector<8x32xf32>
    %279 = arith.truncf %278 : vector<8x32xf32> to vector<8x32xbf16>
    %280 = vector.extract_strided_slice %231 {offsets = [0, 192], sizes = [8, 32], strides = [1, 1]} : vector<8x384xf32> to vector<8x32xf32>
    %281 = arith.truncf %280 : vector<8x32xf32> to vector<8x32xbf16>
    %282 = vector.extract_strided_slice %231 {offsets = [0, 320], sizes = [8, 32], strides = [1, 1]} : vector<8x384xf32> to vector<8x32xf32>
    %283 = arith.truncf %282 : vector<8x32xf32> to vector<8x32xbf16>
    %cst_105 = arith.constant dense<0.000000e+00> : vector<8x8xf32>
    %284 = tpu.matmul %279, %281, %cst_105 {dimension_numbers = #tpu.dot_dimension_numbers<[1], [1], [0], [0], [0, 0, 1, 0], [], []>} : vector<8x32xbf16>, vector<8x32xbf16>, vector<8x8xf32> -> vector<8x8xf32>
    %cst_106 = arith.constant 0.176776692 : f32
    %285 = vector.broadcast %cst_106 : f32 to vector<8x8xf32>
    %286 = arith.mulf %284, %285 : vector<8x8xf32>
    %287 = vector.broadcast %31 : vector<1x8xf32> to vector<8x8xf32>
    %288 = arith.addf %286, %287 : vector<8x8xf32>
    %cst_107 = arith.constant dense<0xFF800000> : vector<8xf32>
    %289 = vector.multi_reduction <maximumf>, %288, %cst_107 [1] : vector<8x8xf32> to vector<8xf32>
    %290 = vector.shape_cast %289 : vector<8xf32> to vector<8x1xf32>
    %291 = vector.broadcast %290 : vector<8x1xf32> to vector<8x8xf32>
    %292 = arith.subf %288, %291 : vector<8x8xf32>
    %293 = math.exp %292 : vector<8x8xf32>
    %cst_108 = arith.constant dense<0.000000e+00> : vector<8xf32>
    %294 = vector.multi_reduction <add>, %293, %cst_108 [1] : vector<8x8xf32> to vector<8xf32>
    %295 = vector.shape_cast %294 : vector<8xf32> to vector<8x1xf32>
    %296 = tpu.reciprocal %295 {approx = true} : vector<8x1xf32> -> vector<8x1xf32>
    %297 = vector.broadcast %296 : vector<8x1xf32> to vector<8x8xf32>
    %298 = arith.mulf %293, %297 : vector<8x8xf32>
    %299 = arith.truncf %298 : vector<8x8xf32> to vector<8x8xbf16>
    %cst_109 = arith.constant dense<0.000000e+00> : vector<8x32xf32>
    %300 = tpu.matmul %299, %283, %cst_109 {dimension_numbers = #tpu.dot_dimension_numbers<[1], [0], [0], [1], [0, 0, 1, 1], [], []>} : vector<8x8xbf16>, vector<8x32xbf16>, vector<8x32xf32> -> vector<8x32xf32>
    %301 = vector.extract_strided_slice %231 {offsets = [0, 96], sizes = [8, 32], strides = [1, 1]} : vector<8x384xf32> to vector<8x32xf32>
    %302 = arith.truncf %301 : vector<8x32xf32> to vector<8x32xbf16>
    %303 = vector.extract_strided_slice %231 {offsets = [0, 224], sizes = [8, 32], strides = [1, 1]} : vector<8x384xf32> to vector<8x32xf32>
    %304 = arith.truncf %303 : vector<8x32xf32> to vector<8x32xbf16>
    %305 = vector.extract_strided_slice %231 {offsets = [0, 352], sizes = [8, 32], strides = [1, 1]} : vector<8x384xf32> to vector<8x32xf32>
    %306 = arith.truncf %305 : vector<8x32xf32> to vector<8x32xbf16>
    %cst_110 = arith.constant dense<0.000000e+00> : vector<8x8xf32>
    %307 = tpu.matmul %302, %304, %cst_110 {dimension_numbers = #tpu.dot_dimension_numbers<[1], [1], [0], [0], [0, 0, 1, 0], [], []>} : vector<8x32xbf16>, vector<8x32xbf16>, vector<8x8xf32> -> vector<8x8xf32>
    %cst_111 = arith.constant 0.176776692 : f32
    %308 = vector.broadcast %cst_111 : f32 to vector<8x8xf32>
    %309 = arith.mulf %307, %308 : vector<8x8xf32>
    %310 = vector.broadcast %31 : vector<1x8xf32> to vector<8x8xf32>
    %311 = arith.addf %309, %310 : vector<8x8xf32>
    %cst_112 = arith.constant dense<0xFF800000> : vector<8xf32>
    %312 = vector.multi_reduction <maximumf>, %311, %cst_112 [1] : vector<8x8xf32> to vector<8xf32>
    %313 = vector.shape_cast %312 : vector<8xf32> to vector<8x1xf32>
    %314 = vector.broadcast %313 : vector<8x1xf32> to vector<8x8xf32>
    %315 = arith.subf %311, %314 : vector<8x8xf32>
    %316 = math.exp %315 : vector<8x8xf32>
    %cst_113 = arith.constant dense<0.000000e+00> : vector<8xf32>
    %317 = vector.multi_reduction <add>, %316, %cst_113 [1] : vector<8x8xf32> to vector<8xf32>
    %318 = vector.shape_cast %317 : vector<8xf32> to vector<8x1xf32>
    %319 = tpu.reciprocal %318 {approx = true} : vector<8x1xf32> -> vector<8x1xf32>
    %320 = vector.broadcast %319 : vector<8x1xf32> to vector<8x8xf32>
    %321 = arith.mulf %316, %320 : vector<8x8xf32>
    %322 = arith.truncf %321 : vector<8x8xf32> to vector<8x8xbf16>
    %cst_114 = arith.constant dense<0.000000e+00> : vector<8x32xf32>
    %323 = tpu.matmul %322, %306, %cst_114 {dimension_numbers = #tpu.dot_dimension_numbers<[1], [0], [0], [1], [0, 0, 1, 1], [], []>} : vector<8x8xbf16>, vector<8x32xbf16>, vector<8x32xf32> -> vector<8x32xf32>
    %324 = tpu.concatenate %254, %277, %300, %323 in 1 : vector<8x32xf32>, vector<8x32xf32>, vector<8x32xf32>, vector<8x32xf32> -> vector<8x128xf32>
    %325 = arith.truncf %324 : vector<8x128xf32> to vector<8x128xbf16>
    %c1_115 = arith.constant 1 : index
    %c0_116 = arith.constant 0 : index
    %c0_117 = arith.constant 0 : index
    %326 = vector.load %arg7[%c1_115, %c0_116, %c0_117] : memref<2x128x128xbf16, #tpu.memory_space<vmem>>, vector<1x128x128xbf16>
    %327 = vector.shape_cast %326 : vector<1x128x128xbf16> to vector<128x128xbf16>
    %cst_118 = arith.constant dense<0.000000e+00> : vector<8x128xf32>
    %328 = tpu.matmul %325, %327, %cst_118 {dimension_numbers = #tpu.dot_dimension_numbers<[1], [0], [0], [1], [0, 0, 1, 1], [], []>} : vector<8x128xbf16>, vector<128x128xbf16>, vector<8x128xf32> -> vector<8x128xf32>
    %c1_119 = arith.constant 1 : index
    %c0_120 = arith.constant 0 : index
    %c0_121 = arith.constant 0 : index
    %329 = vector.load %arg8[%c1_119, %c0_120, %c0_121] : memref<2x1x128xf32, #tpu.memory_space<vmem>>, vector<1x1x128xf32>
    %330 = vector.shape_cast %329 : vector<1x1x128xf32> to vector<1x128xf32>
    %331 = vector.broadcast %330 : vector<1x128xf32> to vector<8x128xf32>
    %332 = arith.addf %328, %331 : vector<8x128xf32>
    %333 = arith.addf %223, %332 : vector<8x128xf32>
    %c1_122 = arith.constant 1 : index
    %c0_123 = arith.constant 0 : index
    %c0_124 = arith.constant 0 : index
    %334 = vector.load %arg9[%c1_122, %c0_123, %c0_124] : memref<2x1x128xf32, #tpu.memory_space<vmem>>, vector<1x1x128xf32>
    %335 = vector.shape_cast %334 : vector<1x1x128xf32> to vector<1x128xf32>
    %c1_125 = arith.constant 1 : index
    %c0_126 = arith.constant 0 : index
    %c0_127 = arith.constant 0 : index
    %336 = vector.load %arg10[%c1_125, %c0_126, %c0_127] : memref<2x1x128xf32, #tpu.memory_space<vmem>>, vector<1x1x128xf32>
    %337 = vector.shape_cast %336 : vector<1x1x128xf32> to vector<1x128xf32>
    %cst_128 = arith.constant dense<0.000000e+00> : vector<8xf32>
    %338 = vector.multi_reduction <add>, %333, %cst_128 [1] : vector<8x128xf32> to vector<8xf32>
    %339 = vector.shape_cast %338 : vector<8xf32> to vector<8x1xf32>
    %cst_129 = arith.constant 1.280000e+02 : f32
    %340 = vector.broadcast %cst_129 : f32 to vector<8x1xf32>
    %341 = arith.divf %339, %340 : vector<8x1xf32>
    %342 = vector.broadcast %341 : vector<8x1xf32> to vector<8x128xf32>
    %343 = arith.subf %333, %342 : vector<8x128xf32>
    %344 = arith.mulf %343, %343 : vector<8x128xf32>
    %cst_130 = arith.constant dense<0.000000e+00> : vector<8xf32>
    %345 = vector.multi_reduction <add>, %344, %cst_130 [1] : vector<8x128xf32> to vector<8xf32>
    %346 = vector.shape_cast %345 : vector<8xf32> to vector<8x1xf32>
    %cst_131 = arith.constant 1.280000e+02 : f32
    %347 = vector.broadcast %cst_131 : f32 to vector<8x1xf32>
    %348 = arith.divf %346, %347 : vector<8x1xf32>
    %349 = vector.broadcast %341 : vector<8x1xf32> to vector<8x128xf32>
    %350 = arith.subf %333, %349 : vector<8x128xf32>
    %cst_132 = arith.constant 9.99999996E-13 : f32
    %351 = vector.broadcast %cst_132 : f32 to vector<8x1xf32>
    %352 = arith.addf %348, %351 : vector<8x1xf32>
    %353 = math.rsqrt %352 : vector<8x1xf32>
    %354 = vector.broadcast %353 : vector<8x1xf32> to vector<8x128xf32>
    %355 = arith.mulf %350, %354 : vector<8x128xf32>
    %356 = vector.broadcast %335 : vector<1x128xf32> to vector<8x128xf32>
    %357 = arith.mulf %355, %356 : vector<8x128xf32>
    %358 = vector.broadcast %337 : vector<1x128xf32> to vector<8x128xf32>
    %359 = arith.addf %357, %358 : vector<8x128xf32>
    %360 = arith.truncf %359 : vector<8x128xf32> to vector<8x128xbf16>
    %c1_133 = arith.constant 1 : index
    %c0_134 = arith.constant 0 : index
    %c0_135 = arith.constant 0 : index
    %361 = vector.load %arg11[%c1_133, %c0_134, %c0_135] : memref<2x128x512xbf16, #tpu.memory_space<vmem>>, vector<1x128x512xbf16>
    %362 = vector.shape_cast %361 : vector<1x128x512xbf16> to vector<128x512xbf16>
    %cst_136 = arith.constant dense<0.000000e+00> : vector<8x512xf32>
    %363 = tpu.matmul %360, %362, %cst_136 {dimension_numbers = #tpu.dot_dimension_numbers<[1], [0], [0], [1], [0, 0, 1, 1], [], []>} : vector<8x128xbf16>, vector<128x512xbf16>, vector<8x512xf32> -> vector<8x512xf32>
    %c1_137 = arith.constant 1 : index
    %c0_138 = arith.constant 0 : index
    %c0_139 = arith.constant 0 : index
    %364 = vector.load %arg12[%c1_137, %c0_138, %c0_139] : memref<2x1x512xf32, #tpu.memory_space<vmem>>, vector<1x1x512xf32>
    %365 = vector.shape_cast %364 : vector<1x1x512xf32> to vector<1x512xf32>
    %366 = vector.broadcast %365 : vector<1x512xf32> to vector<8x512xf32>
    %367 = arith.addf %363, %366 : vector<8x512xf32>
    %cst_140 = arith.constant 5.000000e-01 : f32
    %368 = vector.broadcast %cst_140 : f32 to vector<8x512xf32>
    %369 = arith.mulf %368, %367 : vector<8x512xf32>
    %cst_141 = arith.constant 4.471500e-02 : f32
    %370 = vector.broadcast %cst_141 : f32 to vector<8x512xf32>
    %371 = arith.mulf %370, %367 : vector<8x512xf32>
    %372 = arith.mulf %371, %367 : vector<8x512xf32>
    %373 = arith.mulf %372, %367 : vector<8x512xf32>
    %374 = arith.addf %367, %373 : vector<8x512xf32>
    %cst_142 = arith.constant 0.797884583 : f32
    %375 = vector.broadcast %cst_142 : f32 to vector<8x512xf32>
    %376 = arith.mulf %375, %374 : vector<8x512xf32>
    %377 = math.tanh %376 : vector<8x512xf32>
    %cst_143 = arith.constant 1.000000e+00 : f32
    %378 = vector.broadcast %cst_143 : f32 to vector<8x512xf32>
    %379 = arith.addf %378, %377 : vector<8x512xf32>
    %380 = arith.mulf %369, %379 : vector<8x512xf32>
    %381 = arith.truncf %380 : vector<8x512xf32> to vector<8x512xbf16>
    %c1_144 = arith.constant 1 : index
    %c0_145 = arith.constant 0 : index
    %c0_146 = arith.constant 0 : index
    %382 = vector.load %arg13[%c1_144, %c0_145, %c0_146] : memref<2x512x128xbf16, #tpu.memory_space<vmem>>, vector<1x512x128xbf16>
    %383 = vector.shape_cast %382 : vector<1x512x128xbf16> to vector<512x128xbf16>
    %cst_147 = arith.constant dense<0.000000e+00> : vector<8x128xf32>
    %384 = tpu.matmul %381, %383, %cst_147 {dimension_numbers = #tpu.dot_dimension_numbers<[1], [0], [0], [1], [0, 0, 1, 1], [], []>} : vector<8x512xbf16>, vector<512x128xbf16>, vector<8x128xf32> -> vector<8x128xf32>
    %c1_148 = arith.constant 1 : index
    %c0_149 = arith.constant 0 : index
    %c0_150 = arith.constant 0 : index
    %385 = vector.load %arg14[%c1_148, %c0_149, %c0_150] : memref<2x1x128xf32, #tpu.memory_space<vmem>>, vector<1x1x128xf32>
    %386 = vector.shape_cast %385 : vector<1x1x128xf32> to vector<1x128xf32>
    %387 = vector.broadcast %386 : vector<1x128xf32> to vector<8x128xf32>
    %388 = arith.addf %384, %387 : vector<8x128xf32>
    %389 = arith.addf %359, %388 : vector<8x128xf32>
    %c1_151 = arith.constant 1 : index
    %c0_152 = arith.constant 0 : index
    %c0_153 = arith.constant 0 : index
    %390 = vector.load %arg15[%c1_151, %c0_152, %c0_153] : memref<2x1x128xf32, #tpu.memory_space<vmem>>, vector<1x1x128xf32>
    %391 = vector.shape_cast %390 : vector<1x1x128xf32> to vector<1x128xf32>
    %c1_154 = arith.constant 1 : index
    %c0_155 = arith.constant 0 : index
    %c0_156 = arith.constant 0 : index
    %392 = vector.load %arg16[%c1_154, %c0_155, %c0_156] : memref<2x1x128xf32, #tpu.memory_space<vmem>>, vector<1x1x128xf32>
    %393 = vector.shape_cast %392 : vector<1x1x128xf32> to vector<1x128xf32>
    %cst_157 = arith.constant dense<0.000000e+00> : vector<8xf32>
    %394 = vector.multi_reduction <add>, %389, %cst_157 [1] : vector<8x128xf32> to vector<8xf32>
    %395 = vector.shape_cast %394 : vector<8xf32> to vector<8x1xf32>
    %cst_158 = arith.constant 1.280000e+02 : f32
    %396 = vector.broadcast %cst_158 : f32 to vector<8x1xf32>
    %397 = arith.divf %395, %396 : vector<8x1xf32>
    %398 = vector.broadcast %397 : vector<8x1xf32> to vector<8x128xf32>
    %399 = arith.subf %389, %398 : vector<8x128xf32>
    %400 = arith.mulf %399, %399 : vector<8x128xf32>
    %cst_159 = arith.constant dense<0.000000e+00> : vector<8xf32>
    %401 = vector.multi_reduction <add>, %400, %cst_159 [1] : vector<8x128xf32> to vector<8xf32>
    %402 = vector.shape_cast %401 : vector<8xf32> to vector<8x1xf32>
    %cst_160 = arith.constant 1.280000e+02 : f32
    %403 = vector.broadcast %cst_160 : f32 to vector<8x1xf32>
    %404 = arith.divf %402, %403 : vector<8x1xf32>
    %405 = vector.broadcast %397 : vector<8x1xf32> to vector<8x128xf32>
    %406 = arith.subf %389, %405 : vector<8x128xf32>
    %cst_161 = arith.constant 9.99999996E-13 : f32
    %407 = vector.broadcast %cst_161 : f32 to vector<8x1xf32>
    %408 = arith.addf %404, %407 : vector<8x1xf32>
    %409 = math.rsqrt %408 : vector<8x1xf32>
    %410 = vector.broadcast %409 : vector<8x1xf32> to vector<8x128xf32>
    %411 = arith.mulf %406, %410 : vector<8x128xf32>
    %412 = vector.broadcast %391 : vector<1x128xf32> to vector<8x128xf32>
    %413 = arith.mulf %411, %412 : vector<8x128xf32>
    %414 = vector.broadcast %393 : vector<1x128xf32> to vector<8x128xf32>
    %415 = arith.addf %413, %414 : vector<8x128xf32>
    %416 = vector.extract_strided_slice %415 {offsets = [0, 0], sizes = [1, 128], strides = [1, 1]} : vector<8x128xf32> to vector<1x128xf32>
    %c0_162 = arith.constant 0 : index
    %c0_163 = arith.constant 0 : index
    %c0_164 = arith.constant 0 : index
    %417 = vector.load %arg17[%c0_162, %c0_163, %c0_164] : memref<1x1x128xf32, #tpu.memory_space<vmem>>, vector<1x1x128xf32>
    %418 = vector.shape_cast %417 : vector<1x1x128xf32> to vector<1x128xf32>
    %419 = vector.shape_cast %416 : vector<1x128xf32> to vector<1x1x128xf32>
    tpu.vector_store %arg17[%c0_162, %c0_163, %c0_164], %419 {strides = array<i32>} : memref<1x1x128xf32, #tpu.memory_space<vmem>>, vector<1x1x128xf32>,
    return
  }
  func.func @transform_0(%arg0: i32) -> (i32, i32, i32) {
    %c0_i32 = arith.constant 0 : i32
    %c0_i32_0 = arith.constant 0 : i32
    %c0_i32_1 = arith.constant 0 : i32
    return %arg0, %c0_i32, %c0_i32_0 : i32, i32, i32
  }
  func.func @transform_1(%arg0: i32) -> (i32, i32, i32) {
    %c0_i32 = arith.constant 0 : i32
    %c0_i32_0 = arith.constant 0 : i32
    %c0_i32_1 = arith.constant 0 : i32
    return %arg0, %c0_i32, %c0_i32_0 : i32, i32, i32
  }
  func.func @transform_2(%arg0: i32) -> (i32, i32) {
    %c0_i32 = arith.constant 0 : i32
    %c0_i32_0 = arith.constant 0 : i32
    %c0_i32_1 = arith.constant 0 : i32
    return %c0_i32, %c0_i32_0 : i32, i32
  }
  func.func @transform_3(%arg0: i32) -> (i32, i32) {
    %c0_i32 = arith.constant 0 : i32
    %c0_i32_0 = arith.constant 0 : i32
    %c0_i32_1 = arith.constant 0 : i32
    return %c0_i32, %c0_i32_0 : i32, i32
  }
  func.func @transform_4(%arg0: i32) -> (i32, i32, i32) {
    %c0_i32 = arith.constant 0 : i32
    %c0_i32_0 = arith.constant 0 : i32
    %c0_i32_1 = arith.constant 0 : i32
    %c0_i32_2 = arith.constant 0 : i32
    return %c0_i32, %c0_i32_0, %c0_i32_1 : i32, i32, i32
  }
  func.func @transform_5(%arg0: i32) -> (i32, i32, i32) {
    %c0_i32 = arith.constant 0 : i32
    %c0_i32_0 = arith.constant 0 : i32
    %c0_i32_1 = arith.constant 0 : i32
    %c0_i32_2 = arith.constant 0 : i32
    return %c0_i32, %c0_i32_0, %c0_i32_1 : i32, i32, i32
  }
  func.func @transform_6(%arg0: i32) -> (i32, i32, i32) {
    %c0_i32 = arith.constant 0 : i32
    %c0_i32_0 = arith.constant 0 : i32
    %c0_i32_1 = arith.constant 0 : i32
    %c0_i32_2 = arith.constant 0 : i32
    return %c0_i32, %c0_i32_0, %c0_i32_1 : i32, i32, i32
  }
  func.func @transform_7(%arg0: i32) -> (i32, i32, i32) {
    %c0_i32 = arith.constant 0 : i32
    %c0_i32_0 = arith.constant 0 : i32
    %c0_i32_1 = arith.constant 0 : i32
    %c0_i32_2 = arith.constant 0 : i32
    return %c0_i32, %c0_i32_0, %c0_i32_1 : i32, i32, i32
  }
  func.func @transform_8(%arg0: i32) -> (i32, i32, i32) {
    %c0_i32 = arith.constant 0 : i32
    %c0_i32_0 = arith.constant 0 : i32
    %c0_i32_1 = arith.constant 0 : i32
    %c0_i32_2 = arith.constant 0 : i32
    return %c0_i32, %c0_i32_0, %c0_i32_1 : i32, i32, i32
  }
  func.func @transform_9(%arg0: i32) -> (i32, i32, i32) {
    %c0_i32 = arith.constant 0 : i32
    %c0_i32_0 = arith.constant 0 : i32
    %c0_i32_1 = arith.constant 0 : i32
    %c0_i32_2 = arith.constant 0 : i32
    return %c0_i32, %c0_i32_0, %c0_i32_1 : i32, i32, i32
  }
  func.func @transform_10(%arg0: i32) -> (i32, i32, i32) {
    %c0_i32 = arith.constant 0 : i32
    %c0_i32_0 = arith.constant 0 : i32
    %c0_i32_1 = arith.constant 0 : i32
    %c0_i32_2 = arith.constant 0 : i32
    return %c0_i32, %c0_i32_0, %c0_i32_1 : i32, i32, i32
  }
  func.func @transform_11(%arg0: i32) -> (i32, i32, i32) {
    %c0_i32 = arith.constant 0 : i32
    %c0_i32_0 = arith.constant 0 : i32
    %c0_i32_1 = arith.constant 0 : i32
    %c0_i32_2 = arith.constant 0 : i32
    return %c0_i32, %c0_i32_0, %c0_i32_1 : i32, i32, i32
  }
  func.func @transform_12(%arg0: i32) -> (i32, i32, i32) {
    %c0_i32 = arith.constant 0 : i32
    %c0_i32_0 = arith.constant 0 : i32
    %c0_i32_1 = arith.constant 0 : i32
    %c0_i32_2 = arith.constant 0 : i32
    return %c0_i32, %c0_i32_0, %c0_i32_1 : i32, i32, i32
  }
  func.func @transform_13(%arg0: i32) -> (i32, i32, i32) {
    %c0_i32 = arith.constant 0 : i32
    %c0_i32_0 = arith.constant 0 : i32
    %c0_i32_1 = arith.constant 0 : i32
    %c0_i32_2 = arith.constant 0 : i32
    return %c0_i32, %c0_i32_0, %c0_i32_1 : i32, i32, i32
  }
  func.func @transform_14(%arg0: i32) -> (i32, i32, i32) {
    %c0_i32 = arith.constant 0 : i32
    %c0_i32_0 = arith.constant 0 : i32
    %c0_i32_1 = arith.constant 0 : i32
    %c0_i32_2 = arith.constant 0 : i32
    return %c0_i32, %c0_i32_0, %c0_i32_1 : i32, i32, i32
  }
  func.func @transform_15(%arg0: i32) -> (i32, i32, i32) {
    %c0_i32 = arith.constant 0 : i32
    %c0_i32_0 = arith.constant 0 : i32
    %c0_i32_1 = arith.constant 0 : i32
    %c0_i32_2 = arith.constant 0 : i32
    return %c0_i32, %c0_i32_0, %c0_i32_1 : i32, i32, i32
  }
  func.func @transform_16(%arg0: i32) -> (i32, i32, i32) {
    %c0_i32 = arith.constant 0 : i32
    %c0_i32_0 = arith.constant 0 : i32
    %c0_i32_1 = arith.constant 0 : i32
    return %arg0, %c0_i32, %c0_i32_0 : i32, i32, i32
  }
}

</mosaic_0001>

<llo_original>
// kernel: tpu_custom_call.1
$region0: #{tpu_custom_call.1}
  #allocation0 [shape = 'u32[]', space=smem, size = 0x4, offset = 0x4, fixed_abs, tag = 'smem constant byte address 0x4 - core index']
  #allocation1 [shape = 'u32[144,128]{1,0:T(1,128)}', space=vmem, size = 0x12000, scoped, tag = 'internal scratch']
  %s0 = inlined_call_operand.hbm [shape: f32[2,8,128], index: 0, kind: input, shape index: {}]
  %s1 = inlined_call_operand.hbm [shape: f32[2,1,8], index: 1, kind: input, shape index: {}]
  %s2 = inlined_call_operand.hbm [shape: f32[1,128], index: 2, kind: input, shape index: {}]
  %s3 = inlined_call_operand.hbm [shape: f32[1,128], index: 3, kind: input, shape index: {}]
  %s4 = inlined_call_operand.hbm [shape: bf16[2,128,384], index: 4, kind: input, shape index: {}]
  %s5 = inlined_call_operand.vmem [shape: f32[2,1,384], index: 5, kind: input, shape index: {}]
  %s6 = inlined_call_operand.hbm [shape: bf16[2,128,128], index: 6, kind: input, shape index: {}]
  %s7 = inlined_call_operand.vmem [shape: f32[2,1,128], index: 7, kind: input, shape index: {}]
  %s8 = inlined_call_operand.vmem [shape: f32[2,1,128], index: 8, kind: input, shape index: {}]
  %s9 = inlined_call_operand.vmem [shape: f32[2,1,128], index: 9, kind: input, shape index: {}]
  %s10 = inlined_call_operand.hbm [shape: bf16[2,128,512], index: 10, kind: input, shape index: {}]
  %s11 = inlined_call_operand.vmem [shape: f32[2,1,512], index: 11, kind: input, shape index: {}]
  %s12 = inlined_call_operand.hbm [shape: bf16[2,512,128], index: 12, kind: input, shape index: {}]
  %s13 = inlined_call_operand.vmem [shape: f32[2,1,128], index: 13, kind: input, shape index: {}]
  %s14 = inlined_call_operand.vmem [shape: f32[2,1,128], index: 14, kind: input, shape index: {}]
  %s15 = inlined_call_operand.vmem [shape: f32[2,1,128], index: 15, kind: input, shape index: {}]
  %s16 = inlined_call_operand.hbm [shape: f32[2,1,128], index: 16, kind: output, shape index: {}]
  %s17 = sld [smem:[#allocation0]]
  $region129: #{tpu_custom_call.1} parent=0
    _
  %s19 = ssub.s32 1, %s17
  %s20 = scalar_select 0, %s19, %s17
  $region1: #{tpu_custom_call.1} parent=0
    #allocation2 [shape = 'u8[8192]{0}', space=vmem, size = 0x2000, scoped, tag = 'input window, operand 0']
    #allocation3 [shape = 's32[2]{0}', space=sflag, size = 0x8, scoped, tag = 'scoped memory for tpu_custom_call.1']
    #allocation4 [shape = 's32[2]{0}', space=sflag, size = 0x8, scoped, tag = 'scoped memory for tpu_custom_call.1']
    #allocation5 [shape = 'u8[1024]{0}', space=vmem, size = 0x400, scoped, tag = 'input window, operand 1']
    #allocation6 [shape = 's32[2]{0}', space=sflag, size = 0x8, scoped, tag = 'scoped memory for tpu_custom_call.1']
    #allocation7 [shape = 'u8[512]{0}', space=vmem, size = 0x400, scoped, tag = 'input window, operand 2, single buffered']
    #allocation8 [shape = 'u8[512]{0}', space=vmem, size = 0x400, scoped, tag = 'input window, operand 3, single buffered']
    #allocation9 [shape = 's32[1]{0}', space=sflag, size = 0x4, scoped, tag = 'scoped memory for tpu_custom_call.1']
    #allocation10 [shape = 'u8[196608]{0}', space=vmem, size = 0x30000, scoped, tag = 'input window, operand 4, single buffered']
    #allocation11 [shape = 'u8[65536]{0}', space=vmem, size = 0x10000, scoped, tag = 'input window, operand 6, single buffered']
    #allocation12 [shape = 's32[1]{0}', space=sflag, size = 0x4, scoped, tag = 'scoped memory for tpu_custom_call.1']
    #allocation13 [shape = 'u8[262144]{0}', space=vmem, size = 0x40000, scoped, tag = 'input window, operand 10, single buffered']
    #allocation14 [shape = 'u8[262144]{0}', space=vmem, size = 0x40000, scoped, tag = 'input window, operand 12, single buffered']
    #allocation15 [shape = 's32[1]{0}', space=sflag, size = 0x4, scoped, tag = 'scoped memory for tpu_custom_call.1']
    #allocation16 [shape = 'u8[1024]{0}', space=vmem, size = 0x400, scoped, tag = 'output window, operand 0']
    %21 = vsyncpa [#allocation3], 0
    %s22 = scalar_lea.sflag [#allocation3], 1
    %23 = vsyncpa %s22, 0
    %24 = vsyncpa [#allocation6], 0
    %s25 = scalar_lea.sflag [#allocation6], 1
    %26 = vsyncpa %s25, 0
    %27 = vsyncpa [#allocation9], 0
    %28 = vsyncpa [#allocation12], 0
    %29 = vsyncpa [#allocation15], 0
    %30 = vsyncpa [#allocation4], 0
    %s31 = scalar_lea.sflag [#allocation4], 1
    %32 = vsyncpa %s31, 0
    loop: start=0, step=1, limit=4
    $region2: #{tpu_custom_call.1} parent=1 // loop_pre_header
      _
    $region3: #{tpu_custom_call.1} parent=1 // loop_header
      %s34 = sphi 0, %s38
      %p35 = scmp.ge.s32.totalorder %s34, 4
      %s44 = sphi 0, %s46
      %s47 = sphi 0, %s44
      %s48 = sphi 0, %s47
      %s64 = sphi 0, %s48
      %s70 = sphi 0, %s72
      %s73 = sphi 0, %s70
      %s74 = sphi 0, %s73
      %s90 = sphi 0, %s74
      %s94 = sphi 0, %s94
      %s96 = sphi 0, %s94
      %s97 = sphi 0, %s96
      %s111 = sphi 0, %s97
      %s115 = sphi 0, %s115
      %s117 = sphi 0, %s115
      %s118 = sphi 0, %s117
      %s132 = sphi 0, %s118
      %s136 = sphi 0, %s136
      %s138 = sphi 0, %s136
      %s139 = sphi 0, %s138
      %s153 = sphi 0, %s139
      %s157 = sphi 0, %s157
      %s159 = sphi 0, %s157
      %s160 = sphi 0, %s159
      %s174 = sphi 0, %s160
      %s178 = sphi 0, %s178
      %s180 = sphi 0, %s178
      %s181 = sphi 0, %s180
      %s195 = sphi 0, %s181
      %s199 = sphi 0, %s199
      %s201 = sphi 0, %s199
      %s202 = sphi 0, %s201
      %s216 = sphi 0, %s202
      %s220 = sphi 0, %s220
      %s222 = sphi 0, %s220
      %s223 = sphi 0, %s222
      %s237 = sphi 0, %s223
      %s241 = sphi 0, %s241
      %s243 = sphi 0, %s241
      %s244 = sphi 0, %s243
      %s258 = sphi 0, %s244
      %s262 = sphi 0, %s262
      %s264 = sphi 0, %s262
      %s265 = sphi 0, %s264
      %s279 = sphi 0, %s265
      %s283 = sphi 0, %s283
      %s285 = sphi 0, %s283
      %s286 = sphi 0, %s285
      %s300 = sphi 0, %s286
      %s304 = sphi 0, %s304
      %s306 = sphi 0, %s304
      %s307 = sphi 0, %s306
      %s321 = sphi 0, %s307
      %s325 = sphi 0, %s325
      %s327 = sphi 0, %s325
      %s328 = sphi 0, %s327
      %s342 = sphi 0, %s328
      %s346 = sphi 0, %s346
      %s348 = sphi 0, %s346
      %s349 = sphi 0, %s348
      %s363 = sphi 0, %s349
      %s367 = sphi 0, %s367
      %s369 = sphi 0, %s367
      %s370 = sphi 0, %s369
      %s384 = sphi 0, %s370
      %s390 = sphi 0, %s392
      %s393 = sphi 0, %s390
      %s394 = sphi 0, %s393
      %s410 = sphi 0, %s394
    $region4: #{tpu_custom_call.1} parent=1 // loop_header_branch
      %37 = sbr.rel (%p35) target = $region8
    $region5: #{tpu_custom_call.1} parent=1 // loop_body
      %s39 = ssub.s32 %s34, 1
      %s40 = ssub.s32 %s34, 2
      %s41 = sadd.s32 %s34, 1
      %s42 = ssub.s32 %s34, %s41
      %p43 = scmp.eq.s32.totalorder %s42, 0
      %s45 = sadd.s32 %s44, 1
      %s46 = scalar_select %p43, %s44, %s45
      %p49 = pneg %p43
      %p50 = scmp.eq.s32.totalorder %s34, 1
      %p51 = por %p49, %p50
      %p52 = scmp.ne.s32.totalorder %s44, %s47
      %p53 = scmp.eq.s32.totalorder %s34, 0
      %p54 = por %p52, %p53
      %p55 = scmp.ne.s32.totalorder %s44, %s47
      %p56 = scmp.eq.s32.totalorder %s39, 1
      %p57 = por %p55, %p56
      %p58 = scmp.ne.s32.totalorder %s47, %s48
      %p59 = scmp.eq.s32.totalorder %s39, 0
      %p60 = por %p58, %p59
      %p61 = scmp.ne.s32.totalorder %s47, %s48
      %p62 = scmp.eq.s32.totalorder %s40, 1
      %p63 = por %p61, %p62
      %p65 = scmp.ne.s32.totalorder %s48, %s64
      %p66 = scmp.eq.s32.totalorder %s40, 0
      %p67 = por %p65, %p66
      %s68 = ssub.s32 %s34, %s41
      %p69 = scmp.eq.s32.totalorder %s68, 0
      %s71 = sadd.s32 %s70, 1
      %s72 = scalar_select %p69, %s70, %s71
      %p75 = pneg %p69
      %p76 = scmp.eq.s32.totalorder %s34, 1
      %p77 = por %p75, %p76
      %p78 = scmp.ne.s32.totalorder %s70, %s73
      %p79 = scmp.eq.s32.totalorder %s34, 0
      %p80 = por %p78, %p79
      %p81 = scmp.ne.s32.totalorder %s70, %s73
      %p82 = scmp.eq.s32.totalorder %s39, 1
      %p83 = por %p81, %p82
      %p84 = scmp.ne.s32.totalorder %s73, %s74
      %p85 = scmp.eq.s32.totalorder %s39, 0
      %p86 = por %p84, %p85
      %p87 = scmp.ne.s32.totalorder %s73, %s74
      %p88 = scmp.eq.s32.totalorder %s40, 1
      %p89 = por %p87, %p88
      %p91 = scmp.ne.s32.totalorder %s74, %s90
      %p92 = scmp.eq.s32.totalorder %s40, 0
      %p93 = por %p91, %p92
      %s95 = sadd.s32 %s94, 1
      %p98 = scmp.eq.s32.totalorder %s34, 1
      %p99 = scmp.ne.s32.totalorder %s94, %s96
      %p100 = scmp.eq.s32.totalorder %s34, 0
      %p101 = por %p99, %p100
      %p102 = scmp.ne.s32.totalorder %s94, %s96
      %p103 = scmp.eq.s32.totalorder %s39, 1
      %p104 = por %p102, %p103
      %p105 = scmp.ne.s32.totalorder %s96, %s97
      %p106 = scmp.eq.s32.totalorder %s39, 0
      %p107 = por %p105, %p106
      %p108 = scmp.ne.s32.totalorder %s96, %s97
      %p109 = scmp.eq.s32.totalorder %s40, 1
      %p110 = por %p108, %p109
      %p112 = scmp.ne.s32.totalorder %s97, %s111
      %p113 = scmp.eq.s32.totalorder %s40, 0
      %p114 = por %p112, %p113
      %s116 = sadd.s32 %s115, 1
      %p119 = scmp.eq.s32.totalorder %s34, 1
      %p120 = scmp.ne.s32.totalorder %s115, %s117
      %p121 = scmp.eq.s32.totalorder %s34, 0
      %p122 = por %p120, %p121
      %p123 = scmp.ne.s32.totalorder %s115, %s117
      %p124 = scmp.eq.s32.totalorder %s39, 1
      %p125 = por %p123, %p124
      %p126 = scmp.ne.s32.totalorder %s117, %s118
      %p127 = scmp.eq.s32.totalorder %s39, 0
      %p128 = por %p126, %p127
      %p129 = scmp.ne.s32.totalorder %s117, %s118
      %p130 = scmp.eq.s32.totalorder %s40, 1
      %p131 = por %p129, %p130
      %p133 = scmp.ne.s32.totalorder %s118, %s132
      %p134 = scmp.eq.s32.totalorder %s40, 0
      %p135 = por %p133, %p134
      %s137 = sadd.s32 %s136, 1
      %p140 = scmp.eq.s32.totalorder %s34, 1
      %p141 = scmp.ne.s32.totalorder %s136, %s138
      %p142 = scmp.eq.s32.totalorder %s34, 0
      %p143 = por %p141, %p142
      %p144 = scmp.ne.s32.totalorder %s136, %s138
      %p145 = scmp.eq.s32.totalorder %s39, 1
      %p146 = por %p144, %p145
      %p147 = scmp.ne.s32.totalorder %s138, %s139
      %p148 = scmp.eq.s32.totalorder %s39, 0
      %p149 = por %p147, %p148
      %p150 = scmp.ne.s32.totalorder %s138, %s139
      %p151 = scmp.eq.s32.totalorder %s40, 1
      %p152 = por %p150, %p151
      %p154 = scmp.ne.s32.totalorder %s139, %s153
      %p155 = scmp.eq.s32.totalorder %s40, 0
      %p156 = por %p154, %p155
      %s158 = sadd.s32 %s157, 1
      %p161 = scmp.eq.s32.totalorder %s34, 1
      %p162 = scmp.ne.s32.totalorder %s157, %s159
      %p163 = scmp.eq.s32.totalorder %s34, 0
      %p164 = por %p162, %p163
      %p165 = scmp.ne.s32.totalorder %s157, %s159
      %p166 = scmp.eq.s32.totalorder %s39, 1
      %p167 = por %p165, %p166
      %p168 = scmp.ne.s32.totalorder %s159, %s160
      %p169 = scmp.eq.s32.totalorder %s39, 0
      %p170 = por %p168, %p169
      %p171 = scmp.ne.s32.totalorder %s159, %s160
      %p172 = scmp.eq.s32.totalorder %s40, 1
      %p173 = por %p171, %p172
      %p175 = scmp.ne.s32.totalorder %s160, %s174
      %p176 = scmp.eq.s32.totalorder %s40, 0
      %p177 = por %p175, %p176
      %s179 = sadd.s32 %s178, 1
      %p182 = scmp.eq.s32.totalorder %s34, 1
      %p183 = scmp.ne.s32.totalorder %s178, %s180
      %p184 = scmp.eq.s32.totalorder %s34, 0
      %p185 = por %p183, %p184
      %p186 = scmp.ne.s32.totalorder %s178, %s180
      %p187 = scmp.eq.s32.totalorder %s39, 1
      %p188 = por %p186, %p187
      %p189 = scmp.ne.s32.totalorder %s180, %s181
      %p190 = scmp.eq.s32.totalorder %s39, 0
      %p191 = por %p189, %p190
      %p192 = scmp.ne.s32.totalorder %s180, %s181
      %p193 = scmp.eq.s32.totalorder %s40, 1
      %p194 = por %p192, %p193
      %p196 = scmp.ne.s32.totalorder %s181, %s195
      %p197 = scmp.eq.s32.totalorder %s40, 0
      %p198 = por %p196, %p197
      %s200 = sadd.s32 %s199, 1
      %p203 = scmp.eq.s32.totalorder %s34, 1
      %p204 = scmp.ne.s32.totalorder %s199, %s201
      %p205 = scmp.eq.s32.totalorder %s34, 0
      %p206 = por %p204, %p205
      %p207 = scmp.ne.s32.totalorder %s199, %s201
      %p208 = scmp.eq.s32.totalorder %s39, 1
      %p209 = por %p207, %p208
      %p210 = scmp.ne.s32.totalorder %s201, %s202
      %p211 = scmp.eq.s32.totalorder %s39, 0
      %p212 = por %p210, %p211
      %p213 = scmp.ne.s32.totalorder %s201, %s202
      %p214 = scmp.eq.s32.totalorder %s40, 1
      %p215 = por %p213, %p214
      %p217 = scmp.ne.s32.totalorder %s202, %s216
      %p218 = scmp.eq.s32.totalorder %s40, 0
      %p219 = por %p217, %p218
      %s221 = sadd.s32 %s220, 1
      %p224 = scmp.eq.s32.totalorder %s34, 1
      %p225 = scmp.ne.s32.totalorder %s220, %s222
      %p226 = scmp.eq.s32.totalorder %s34, 0
      %p227 = por %p225, %p226
      %p228 = scmp.ne.s32.totalorder %s220, %s222
      %p229 = scmp.eq.s32.totalorder %s39, 1
      %p230 = por %p228, %p229
      %p231 = scmp.ne.s32.totalorder %s222, %s223
      %p232 = scmp.eq.s32.totalorder %s39, 0
      %p233 = por %p231, %p232
      %p234 = scmp.ne.s32.totalorder %s222, %s223
      %p235 = scmp.eq.s32.totalorder %s40, 1
      %p236 = por %p234, %p235
      %p238 = scmp.ne.s32.totalorder %s223, %s237
      %p239 = scmp.eq.s32.totalorder %s40, 0
      %p240 = por %p238, %p239
      %s242 = sadd.s32 %s241, 1
      %p245 = scmp.eq.s32.totalorder %s34, 1
      %p246 = scmp.ne.s32.totalorder %s241, %s243
      %p247 = scmp.eq.s32.totalorder %s34, 0
      %p248 = por %p246, %p247
      %p249 = scmp.ne.s32.totalorder %s241, %s243
      %p250 = scmp.eq.s32.totalorder %s39, 1
      %p251 = por %p249, %p250
      %p252 = scmp.ne.s32.totalorder %s243, %s244
      %p253 = scmp.eq.s32.totalorder %s39, 0
      %p254 = por %p252, %p253
      %p255 = scmp.ne.s32.totalorder %s243, %s244
      %p256 = scmp.eq.s32.totalorder %s40, 1
      %p257 = por %p255, %p256
      %p259 = scmp.ne.s32.totalorder %s244, %s258
      %p260 = scmp.eq.s32.totalorder %s40, 0
      %p261 = por %p259, %p260
      %s263 = sadd.s32 %s262, 1
      %p266 = scmp.eq.s32.totalorder %s34, 1
      %p267 = scmp.ne.s32.totalorder %s262, %s264
      %p268 = scmp.eq.s32.totalorder %s34, 0
      %p269 = por %p267, %p268
      %p270 = scmp.ne.s32.totalorder %s262, %s264
      %p271 = scmp.eq.s32.totalorder %s39, 1
      %p272 = por %p270, %p271
      %p273 = scmp.ne.s32.totalorder %s264, %s265
      %p274 = scmp.eq.s32.totalorder %s39, 0
      %p275 = por %p273, %p274
      %p276 = scmp.ne.s32.totalorder %s264, %s265
      %p277 = scmp.eq.s32.totalorder %s40, 1
      %p278 = por %p276, %p277
      %p280 = scmp.ne.s32.totalorder %s265, %s279
      %p281 = scmp.eq.s32.totalorder %s40, 0
      %p282 = por %p280, %p281
      %s284 = sadd.s32 %s283, 1
      %p287 = scmp.eq.s32.totalorder %s34, 1
      %p288 = scmp.ne.s32.totalorder %s283, %s285
      %p289 = scmp.eq.s32.totalorder %s34, 0
      %p290 = por %p288, %p289
      %p291 = scmp.ne.s32.totalorder %s283, %s285
      %p292 = scmp.eq.s32.totalorder %s39, 1
      %p293 = por %p291, %p292
      %p294 = scmp.ne.s32.totalorder %s285, %s286
      %p295 = scmp.eq.s32.totalorder %s39, 0
      %p296 = por %p294, %p295
      %p297 = scmp.ne.s32.totalorder %s285, %s286
      %p298 = scmp.eq.s32.totalorder %s40, 1
      %p299 = por %p297, %p298
      %p301 = scmp.ne.s32.totalorder %s286, %s300
      %p302 = scmp.eq.s32.totalorder %s40, 0
      %p303 = por %p301, %p302
      %s305 = sadd.s32 %s304, 1
      %p308 = scmp.eq.s32.totalorder %s34, 1
      %p309 = scmp.ne.s32.totalorder %s304, %s306
      %p310 = scmp.eq.s32.totalorder %s34, 0
      %p311 = por %p309, %p310
      %p312 = scmp.ne.s32.totalorder %s304, %s306
      %p313 = scmp.eq.s32.totalorder %s39, 1
      %p314 = por %p312, %p313
      %p315 = scmp.ne.s32.totalorder %s306, %s307
      %p316 = scmp.eq.s32.totalorder %s39, 0
      %p317 = por %p315, %p316
      %p318 = scmp.ne.s32.totalorder %s306, %s307
      %p319 = scmp.eq.s32.totalorder %s40, 1
      %p320 = por %p318, %p319
      %p322 = scmp.ne.s32.totalorder %s307, %s321
      %p323 = scmp.eq.s32.totalorder %s40, 0
      %p324 = por %p322, %p323
      %s326 = sadd.s32 %s325, 1
      %p329 = scmp.eq.s32.totalorder %s34, 1
      %p330 = scmp.ne.s32.totalorder %s325, %s327
      %p331 = scmp.eq.s32.totalorder %s34, 0
      %p332 = por %p330, %p331
      %p333 = scmp.ne.s32.totalorder %s325, %s327
      %p334 = scmp.eq.s32.totalorder %s39, 1
      %p335 = por %p333, %p334
      %p336 = scmp.ne.s32.totalorder %s327, %s328
      %p337 = scmp.eq.s32.totalorder %s39, 0
      %p338 = por %p336, %p337
      %p339 = scmp.ne.s32.totalorder %s327, %s328
      %p340 = scmp.eq.s32.totalorder %s40, 1
      %p341 = por %p339, %p340
      %p343 = scmp.ne.s32.totalorder %s328, %s342
      %p344 = scmp.eq.s32.totalorder %s40, 0
      %p345 = por %p343, %p344
      %s347 = sadd.s32 %s346, 1
      %p350 = scmp.eq.s32.totalorder %s34, 1
      %p351 = scmp.ne.s32.totalorder %s346, %s348
      %p352 = scmp.eq.s32.totalorder %s34, 0
      %p353 = por %p351, %p352
      %p354 = scmp.ne.s32.totalorder %s346, %s348
      %p355 = scmp.eq.s32.totalorder %s39, 1
      %p356 = por %p354, %p355
      %p357 = scmp.ne.s32.totalorder %s348, %s349
      %p358 = scmp.eq.s32.totalorder %s39, 0
      %p359 = por %p357, %p358
      %p360 = scmp.ne.s32.totalorder %s348, %s349
      %p361 = scmp.eq.s32.totalorder %s40, 1
      %p362 = por %p360, %p361
      %p364 = scmp.ne.s32.totalorder %s349, %s363
      %p365 = scmp.eq.s32.totalorder %s40, 0
      %p366 = por %p364, %p365
      %s368 = sadd.s32 %s367, 1
      %p371 = scmp.eq.s32.totalorder %s34, 1
      %p372 = scmp.ne.s32.totalorder %s367, %s369
      %p373 = scmp.eq.s32.totalorder %s34, 0
      %p374 = por %p372, %p373
      %p375 = scmp.ne.s32.totalorder %s367, %s369
      %p376 = scmp.eq.s32.totalorder %s39, 1
      %p377 = por %p375, %p376
      %p378 = scmp.ne.s32.totalorder %s369, %s370
      %p379 = scmp.eq.s32.totalorder %s39, 0
      %p380 = por %p378, %p379
      %p381 = scmp.ne.s32.totalorder %s369, %s370
      %p382 = scmp.eq.s32.totalorder %s40, 1
      %p383 = por %p381, %p382
      %p385 = scmp.ne.s32.totalorder %s370, %s384
      %p386 = scmp.eq.s32.totalorder %s40, 0
      %p387 = por %p385, %p386
      %s388 = ssub.s32 %s34, %s41
      %p389 = scmp.eq.s32.totalorder %s388, 0
      %s391 = sadd.s32 %s390, 1
      %s392 = scalar_select %p389, %s390, %s391
      %p395 = pneg %p389
      %p396 = scmp.eq.s32.totalorder %s34, 1
      %p397 = por %p395, %p396
      %p398 = scmp.ne.s32.totalorder %s390, %s393
      %p399 = scmp.eq.s32.totalorder %s34, 0
      %p400 = por %p398, %p399
      %p401 = scmp.ne.s32.totalorder %s390, %s393
      %p402 = scmp.eq.s32.totalorder %s39, 1
      %p403 = por %p401, %p402
      %p404 = scmp.ne.s32.totalorder %s393, %s394
      %p405 = scmp.eq.s32.totalorder %s39, 0
      %p406 = por %p404, %p405
      %p407 = scmp.ne.s32.totalorder %s393, %s394
      %p408 = scmp.eq.s32.totalorder %s40, 1
      %p409 = por %p407, %p408
      %p411 = scmp.ne.s32.totalorder %s394, %s410
      %p412 = scmp.eq.s32.totalorder %s40, 0
      %p413 = por %p411, %p412
      %p414 = scmp.le.s32.totalorder 1, %s34
      %p415 = scmp.lt.s32.totalorder %s34, 3
      %p416 = pnand %p414, %p415
      %p417 = pneg %p416
      // Predicated region
      $region9: #{tpu_custom_call.1} parent=5 // pred_check
        _
      $region10: #{tpu_custom_call.1} parent=5 // pred_check_branch
        %419 = sbr.rel (%p416) target = $region12
      $region11: #{tpu_custom_call.1} parent=5 // pred_region
        %s420 = ssub.s32 %s34, 1
        // Predicated region
        $region13: #{tpu_custom_call.1} parent=11 // pred_check
          %p421 = pneg %p107
        $region14: #{tpu_custom_call.1} parent=11 // pred_check_branch
          %423 = sbr.rel (%p421) target = $region16
        $region15: #{tpu_custom_call.1} parent=11 // pred_region
          %s425 = ssub.s32 16, 16
          %426 = vsyncadd [#allocation6], %s425
          %s428 = sshll.u32 [#allocation7], 4
          %s429 = int_to_ptr.vmem [resolvable:$true] %s428
          %431 = dma.hbm_to_vmem [thread:$0]  %s2, 16, %s429, [#allocation6]
        $region16: #{tpu_custom_call.1} parent=11 // pred_fallthru
          _
        // Predicated region
        $region17: #{tpu_custom_call.1} parent=11 // pred_check
          %p432 = pneg %p128
        $region18: #{tpu_custom_call.1} parent=11 // pred_check_branch
          %434 = sbr.rel (%p432) target = $region20
        $region19: #{tpu_custom_call.1} parent=11 // pred_region
          %s436 = ssub.s32 16, 16
          %437 = vsyncadd [#allocation9], %s436
          %s439 = sshll.u32 [#allocation8], 4
          %s440 = int_to_ptr.vmem [resolvable:$true] %s439
          %442 = dma.hbm_to_vmem [thread:$0]  %s3, 16, %s440, [#allocation9]
        $region20: #{tpu_custom_call.1} parent=11 // pred_fallthru
          _
        // Predicated region
        $region21: #{tpu_custom_call.1} parent=11 // pred_check
          %p443 = pneg %p149
        $region22: #{tpu_custom_call.1} parent=11 // pred_check_branch
          %445 = sbr.rel (%p443) target = $region24
        $region23: #{tpu_custom_call.1} parent=11 // pred_region
          %s447 = ssub.s32 6144, 6144
          %448 = vsyncadd [#allocation9], %s447
          %s449 = sshll.u32 [#allocation10], 4
          %s450 = int_to_ptr.vmem [resolvable:$true] %s449
          %455 = dma.hbm_to_vmem [thread:$0]  %s4, 6144, %s450, [#allocation9], 192, 192, 12
        $region24: #{tpu_custom_call.1} parent=11 // pred_fallthru
          _
        // Predicated region
        $region25: #{tpu_custom_call.1} parent=11 // pred_check
          %p456 = pneg %p170
        $region26: #{tpu_custom_call.1} parent=11 // pred_check_branch
          %458 = sbr.rel (%p456) target = $region28
        $region27: #{tpu_custom_call.1} parent=11 // pred_region
          _
        $region28: #{tpu_custom_call.1} parent=11 // pred_fallthru
          _
        // Predicated region
        $region29: #{tpu_custom_call.1} parent=11 // pred_check
          %p459 = pneg %p191
        $region30: #{tpu_custom_call.1} parent=11 // pred_check_branch
          %461 = sbr.rel (%p459) target = $region32
        $region31: #{tpu_custom_call.1} parent=11 // pred_region
          %s463 = ssub.s32 2048, 2048
          %464 = vsyncadd [#allocation12], %s463
          %s465 = sshll.u32 [#allocation11], 4
          %s466 = int_to_ptr.vmem [resolvable:$true] %s465
          %471 = dma.hbm_to_vmem [thread:$0]  %s6, 2048, %s466, [#allocation12], 64, 64, 4
        $region32: #{tpu_custom_call.1} parent=11 // pred_fallthru
          _
        // Predicated region
        $region33: #{tpu_custom_call.1} parent=11 // pred_check
          %p472 = pneg %p212
        $region34: #{tpu_custom_call.1} parent=11 // pred_check_branch
          %474 = sbr.rel (%p472) target = $region36
        $region35: #{tpu_custom_call.1} parent=11 // pred_region
          _
        $region36: #{tpu_custom_call.1} parent=11 // pred_fallthru
          _
        // Predicated region
        $region37: #{tpu_custom_call.1} parent=11 // pred_check
          %p475 = pneg %p233
        $region38: #{tpu_custom_call.1} parent=11 // pred_check_branch
          %477 = sbr.rel (%p475) target = $region40
        $region39: #{tpu_custom_call.1} parent=11 // pred_region
          _
        $region40: #{tpu_custom_call.1} parent=11 // pred_fallthru
          _
        // Predicated region
        $region41: #{tpu_custom_call.1} parent=11 // pred_check
          %p478 = pneg %p254
        $region42: #{tpu_custom_call.1} parent=11 // pred_check_branch
          %480 = sbr.rel (%p478) target = $region44
        $region43: #{tpu_custom_call.1} parent=11 // pred_region
          _
        $region44: #{tpu_custom_call.1} parent=11 // pred_fallthru
          _
        // Predicated region
        $region45: #{tpu_custom_call.1} parent=11 // pred_check
          %p481 = pneg %p275
        $region46: #{tpu_custom_call.1} parent=11 // pred_check_branch
          %483 = sbr.rel (%p481) target = $region48
        $region47: #{tpu_custom_call.1} parent=11 // pred_region
          %s485 = ssub.s32 8192, 8192
          %486 = vsyncadd [#allocation12], %s485
          %s487 = sshll.u32 [#allocation13], 4
          %s488 = int_to_ptr.vmem [resolvable:$true] %s487
          %493 = dma.hbm_to_vmem [thread:$0]  %s10, 8192, %s488, [#allocation12], 256, 256, 16
        $region48: #{tpu_custom_call.1} parent=11 // pred_fallthru
          _
        // Predicated region
        $region49: #{tpu_custom_call.1} parent=11 // pred_check
          %p494 = pneg %p296
        $region50: #{tpu_custom_call.1} parent=11 // pred_check_branch
          %496 = sbr.rel (%p494) target = $region52
        $region51: #{tpu_custom_call.1} parent=11 // pred_region
          _
        $region52: #{tpu_custom_call.1} parent=11 // pred_fallthru
          _
        // Predicated region
        $region53: #{tpu_custom_call.1} parent=11 // pred_check
          %p497 = pneg %p317
        $region54: #{tpu_custom_call.1} parent=11 // pred_check_branch
          %499 = sbr.rel (%p497) target = $region56
        $region55: #{tpu_custom_call.1} parent=11 // pred_region
          %s501 = ssub.s32 8192, 8192
          %502 = vsyncadd [#allocation15], %s501
          %s503 = sshll.u32 [#allocation14], 4
          %s504 = int_to_ptr.vmem [resolvable:$true] %s503
          %509 = dma.hbm_to_vmem [thread:$0]  %s12, 8192, %s504, [#allocation15], 64, 64, 4
        $region56: #{tpu_custom_call.1} parent=11 // pred_fallthru
          _
        // Predicated region
        $region57: #{tpu_custom_call.1} parent=11 // pred_check
          %p510 = pneg %p338
        $region58: #{tpu_custom_call.1} parent=11 // pred_check_branch
          %512 = sbr.rel (%p510) target = $region60
        $region59: #{tpu_custom_call.1} parent=11 // pred_region
          _
        $region60: #{tpu_custom_call.1} parent=11 // pred_fallthru
          _
        // Predicated region
        $region61: #{tpu_custom_call.1} parent=11 // pred_check
          %p513 = pneg %p359
        $region62: #{tpu_custom_call.1} parent=11 // pred_check_branch
          %515 = sbr.rel (%p513) target = $region64
        $region63: #{tpu_custom_call.1} parent=11 // pred_region
          _
        $region64: #{tpu_custom_call.1} parent=11 // pred_fallthru
          _
        // Predicated region
        $region65: #{tpu_custom_call.1} parent=11 // pred_check
          %p516 = pneg %p380
        $region66: #{tpu_custom_call.1} parent=11 // pred_check_branch
          %518 = sbr.rel (%p516) target = $region68
        $region67: #{tpu_custom_call.1} parent=11 // pred_region
          _
        $region68: #{tpu_custom_call.1} parent=11 // pred_fallthru
          _
      $region12: #{tpu_custom_call.1} parent=5 // pred_fallthru
        _
      %p519 = scmp.lt.s32.totalorder %s34, 2
      // Predicated region
      $region69: #{tpu_custom_call.1} parent=5 // pred_check
        %p520 = pneg %p519
      $region70: #{tpu_custom_call.1} parent=5 // pred_check_branch
        %522 = sbr.rel (%p520) target = $region72
      $region71: #{tpu_custom_call.1} parent=5 // pred_region
        // Predicated region
        $region73: #{tpu_custom_call.1} parent=71 // pred_check
          %p523 = pneg %p54
        $region74: #{tpu_custom_call.1} parent=71 // pred_check_branch
          %525 = sbr.rel (%p523) target = $region76
        $region75: #{tpu_custom_call.1} parent=71 // pred_region
          %s526 = sand.u32 %s44, 1
          %s527 = scalar_lea.sflag [#allocation3], %s526
          %s528 = sand.u32 %s44, 1
          %s529 = smul.addr %s528, 8
          %s530 = scalar_lea.vmem [#allocation2], %s529
          %s532 = ssub.s32 128, 128
          %533 = vsyncadd %s527, %s532
          %s534 = smul.addr %s34, 128
          %s535 = scalar_lea.hbm %s0, %s534
          %s537 = sshll.u32 %s530, 4
          %s538 = int_to_ptr.vmem [resolvable:$true] %s537
          %540 = dma.hbm_to_vmem [thread:$0]  %s535, 128, %s538, %s527
        $region76: #{tpu_custom_call.1} parent=71 // pred_fallthru
          _
        // Predicated region
        $region77: #{tpu_custom_call.1} parent=71 // pred_check
          %p541 = pneg %p80
        $region78: #{tpu_custom_call.1} parent=71 // pred_check_branch
          %543 = sbr.rel (%p541) target = $region80
        $region79: #{tpu_custom_call.1} parent=71 // pred_region
          %s544 = sand.u32 %s34, 1
          %s545 = scalar_lea.sflag [#allocation6], %s544
          %s546 = sand.u32 %s70, 1
          %s547 = scalar_lea.vmem [#allocation5], %s546
          %s549 = ssub.s32 16, 16
          %550 = vsyncadd %s545, %s549
          %s551 = smul.addr %s34, 16
          %s552 = scalar_lea.hbm %s1, %s551
          %s554 = sshll.u32 %s547, 4
          %s555 = int_to_ptr.vmem [resolvable:$true] %s554
          %557 = dma.hbm_to_vmem [thread:$0]  %s552, 16, %s555, %s545
        $region80: #{tpu_custom_call.1} parent=71 // pred_fallthru
          _
      $region72: #{tpu_custom_call.1} parent=5 // pred_fallthru
        _
      %p558 = scmp.le.s32.totalorder 1, %s34
      %p559 = scmp.lt.s32.totalorder %s34, 3
      %p560 = pnand %p558, %p559
      %p561 = pneg %p560
      // Predicated region
      $region81: #{tpu_custom_call.1} parent=5 // pred_check
        _
      $region82: #{tpu_custom_call.1} parent=5 // pred_check_branch
        %563 = sbr.rel (%p560) target = $region84
      $region83: #{tpu_custom_call.1} parent=5 // pred_region
        %s564 = ssub.s32 %s34, 1
        %s565 = sand.u32 %s47, 1
        %s566 = scalar_lea.sflag [#allocation3], %s565
        %s567 = sand.u32 %s47, 1
        %s568 = smul.addr %s567, 8
        %s569 = scalar_lea.vmem [#allocation2], %s568
        // Predicated region
        $region85: #{tpu_custom_call.1} parent=83 // pred_check
          %p570 = pneg %p60
        $region86: #{tpu_custom_call.1} parent=83 // pred_check_branch
          %572 = sbr.rel (%p570) target = $region88
        $region87: #{tpu_custom_call.1} parent=83 // pred_region
          %573 = dma.done %s566, 128
        $region88: #{tpu_custom_call.1} parent=83 // pred_fallthru
          _
        %s574 = sand.u32 %s39, 1
        %s575 = scalar_lea.sflag [#allocation6], %s574
        %s576 = sand.u32 %s73, 1
        %s577 = scalar_lea.vmem [#allocation5], %s576
        // Predicated region
        $region89: #{tpu_custom_call.1} parent=83 // pred_check
          %p578 = pneg %p86
        $region90: #{tpu_custom_call.1} parent=83 // pred_check_branch
          %580 = sbr.rel (%p578) target = $region92
        $region91: #{tpu_custom_call.1} parent=83 // pred_region
          %581 = dma.done %s575, 16
        $region92: #{tpu_custom_call.1} parent=83 // pred_fallthru
          _
        // Predicated region
        $region93: #{tpu_custom_call.1} parent=83 // pred_check
          %p582 = pneg %p107
        $region94: #{tpu_custom_call.1} parent=83 // pred_check_branch
          %584 = sbr.rel (%p582) target = $region96
        $region95: #{tpu_custom_call.1} parent=83 // pred_region
          %585 = dma.done [#allocation6], 16
        $region96: #{tpu_custom_call.1} parent=83 // pred_fallthru
          _
        // Predicated region
        $region97: #{tpu_custom_call.1} parent=83 // pred_check
          %p586 = pneg %p128
        $region98: #{tpu_custom_call.1} parent=83 // pred_check_branch
          %588 = sbr.rel (%p586) target = $region100
        $region99: #{tpu_custom_call.1} parent=83 // pred_region
          %589 = dma.done [#allocation9], 16
        $region100: #{tpu_custom_call.1} parent=83 // pred_fallthru
          _
        // Predicated region
        $region101: #{tpu_custom_call.1} parent=83 // pred_check
          %p590 = pneg %p149
        $region102: #{tpu_custom_call.1} parent=83 // pred_check_branch
          %592 = sbr.rel (%p590) target = $region104
        $region103: #{tpu_custom_call.1} parent=83 // pred_region
          %593 = dma.done [#allocation9], 6144
        $region104: #{tpu_custom_call.1} parent=83 // pred_fallthru
          _
        // Predicated region
        $region105: #{tpu_custom_call.1} parent=83 // pred_check
          %p594 = pneg %p191
        $region106: #{tpu_custom_call.1} parent=83 // pred_check_branch
          %596 = sbr.rel (%p594) target = $region108
        $region107: #{tpu_custom_call.1} parent=83 // pred_region
          %597 = dma.done [#allocation12], 2048
        $region108: #{tpu_custom_call.1} parent=83 // pred_fallthru
          _
        // Predicated region
        $region109: #{tpu_custom_call.1} parent=83 // pred_check
          %p598 = pneg %p275
        $region110: #{tpu_custom_call.1} parent=83 // pred_check_branch
          %600 = sbr.rel (%p598) target = $region112
        $region111: #{tpu_custom_call.1} parent=83 // pred_region
          %601 = dma.done [#allocation12], 8192
        $region112: #{tpu_custom_call.1} parent=83 // pred_fallthru
          _
        // Predicated region
        $region113: #{tpu_custom_call.1} parent=83 // pred_check
          %p602 = pneg %p317
        $region114: #{tpu_custom_call.1} parent=83 // pred_check_branch
          %604 = sbr.rel (%p602) target = $region116
        $region115: #{tpu_custom_call.1} parent=83 // pred_region
          %605 = dma.done [#allocation15], 8192
        $region116: #{tpu_custom_call.1} parent=83 // pred_fallthru
          _
        %s606 = sand.u32 %s47, 1
        %s607 = scalar_lea.sflag [#allocation3], %s606
        %s608 = sand.u32 %s47, 1
        %s609 = smul.addr %s608, 8
        %s610 = scalar_lea.vmem [#allocation2], %s609
        %p611 = pneg %p60
        %p612 = pneg %p57
        %s613 = sand.u32 %s39, 1
        %s614 = scalar_lea.sflag [#allocation6], %s613
        %s615 = sand.u32 %s73, 1
        %s616 = scalar_lea.vmem [#allocation5], %s615
        %p617 = pneg %p86
        %p618 = pneg %p83
        %p619 = pneg %p107
        %p620 = pneg %p104
        %p621 = pneg %p128
        %p622 = pneg %p125
        %p623 = pneg %p149
        %p624 = pneg %p146
        %p625 = pneg %p170
        %p626 = pneg %p167
        %p627 = pneg %p191
        %p628 = pneg %p188
        %p629 = pneg %p212
        %p630 = pneg %p209
        %p631 = pneg %p233
        %p632 = pneg %p230
        %p633 = pneg %p254
        %p634 = pneg %p251
        %p635 = pneg %p275
        %p636 = pneg %p272
        %p637 = pneg %p296
        %p638 = pneg %p293
        %p639 = pneg %p317
        %p640 = pneg %p314
        %p641 = pneg %p338
        %p642 = pneg %p335
        %p643 = pneg %p359
        %p644 = pneg %p356
        %p645 = pneg %p380
        %p646 = pneg %p377
        %p647 = pneg %p406
        %p648 = pneg %p403
        %s649 = sand.u32 %s393, 1
        %s650 = scalar_lea.sflag [#allocation4], %s649
        %s651 = sand.u32 %s393, 1
        %s652 = scalar_lea.vmem [#allocation16], %s651
        %v654 = vld [vmem:[%s569] sm:$0xff]
        %v655 = vld [vmem:[#allocation7] sm:$0x1]
        %v656 = vld [vmem:[#allocation8] sm:$0x1]
        %657 = vadd.xlane.f32.xlu0 %v654
        %v658 = vpop.xlane.xlu0 %657
        %v659 = vrcp.pop 128.0
        %v660 = vmul.f32 %v658, %v659
        %v661 = vsub.f32 %v654, %v660
        %v662 = vmul.f32 %v661, %v661
        %663 = vadd.xlane.f32.xlu0 %v662
        %v664 = vpop.xlane.xlu0 %663
        %v665 = vmul.f32 %v664, %v659
        %v666 = vadd.f32 %v665, 1e-12
        %v667 = vrsqrt.pop %v666
        %v668 = vmul.f32 %v661, %v667
        %v670 = vlaneseq
        %v671 = vshrl.u32 %v670, 7
        %v672 = vsub.s32 0, %v671
        %v673 = vrot.slane %v655, %v672
        %v675 = vmul.f32 %v668, %v673
        %v677 = vlaneseq
        %v678 = vshrl.u32 %v677, 7
        %v679 = vsub.s32 0, %v678
        %v680 = vrot.slane %v656, %v679
        %v682 = vadd.f32 %v675, %v680
        %v683 = vld [vmem:[%s577] sm:$0x1]
        %v684 = vsub.f32 1.0, %v683
        %v685 = vmul.f32 %v684, -1e+09
        %v686 = vpack.c.bf16 %v682, %v682
        %v687 = vld [vmem:[#allocation10] sm:$0xff]
        %v688 = vld [vmem:[#allocation10 + $0x8] sm:$0xf]
        %v689 = vld [vmem:[#allocation10 + $0xc] sm:$0xff]
        %v690 = vld [vmem:[#allocation10 + $0x14] sm:$0xf]
        %v691 = vld [vmem:[#allocation10 + $0x18] sm:$0xff]
        %v692 = vld [vmem:[#allocation10 + $0x20] sm:$0xf]
        %v693 = vld [vmem:[#allocation10 + $0x24] sm:$0xff]
        %v694 = vld [vmem:[#allocation10 + $0x2c] sm:$0xf]
        %v695 = vld [vmem:[#allocation10 + $0x30] sm:$0xff]
        %v696 = vld [vmem:[#allocation10 + $0x38] sm:$0xf]
        %v697 = vld [vmem:[#allocation10 + $0x3c] sm:$0xff]
        %v698 = vld [vmem:[#allocation10 + $0x44] sm:$0xf]
        %v699 = vld [vmem:[#allocation10 + $0x48] sm:$0xff]
        %v700 = vld [vmem:[#allocation10 + $0x50] sm:$0xf]
        %v701 = vld [vmem:[#allocation10 + $0x54] sm:$0xff]
        %v702 = vld [vmem:[#allocation10 + $0x5c] sm:$0xf]
        %v703 = vld [vmem:[#allocation10 + $0x60] sm:$0xff]
        %v704 = vld [vmem:[#allocation10 + $0x68] sm:$0xf]
        %v705 = vld [vmem:[#allocation10 + $0x6c] sm:$0xff]
        %v706 = vld [vmem:[#allocation10 + $0x74] sm:$0xf]
        %v707 = vld [vmem:[#allocation10 + $0x78] sm:$0xff]
        %v708 = vld [vmem:[#allocation10 + $0x80] sm:$0xf]
        %v709 = vld [vmem:[#allocation10 + $0x84] sm:$0xff]
        %v710 = vld [vmem:[#allocation10 + $0x8c] sm:$0xf]
        %v711 = vld [vmem:[#allocation10 + $0x90] sm:$0xff]
        %v712 = vld [vmem:[#allocation10 + $0x98] sm:$0xf]
        %v713 = vld [vmem:[#allocation10 + $0x9c] sm:$0xff]
        %v714 = vld [vmem:[#allocation10 + $0xa4] sm:$0xf]
        %v715 = vld [vmem:[#allocation10 + $0xa8] sm:$0xff]
        %v716 = vld [vmem:[#allocation10 + $0xb0] sm:$0xf]
        %v717 = vld [vmem:[#allocation10 + $0xb4] sm:$0xff]
        %v718 = vld [vmem:[#allocation10 + $0xbc] sm:$0xf]
        %v719 = vld [vmem:[%s5] sm:$0x7]
        %v721 = vlaneseq
        %v722 = vshrl.u32 %v721, 7
        %v723 = vsub.s32 0, %v722
        %v724 = vrot.slane %v719, %v723
        %v725 = vlaneseq
        %v726 = vshrl.u32 %v725, 7
        %v727 = vsub.s32 1, %v726
        %v728 = vrot.slane %v719, %v727
        %v729 = vlaneseq
        %v730 = vshrl.u32 %v729, 7
        %v731 = vsub.s32 2, %v730
        %v732 = vrot.slane %v719, %v731
        %v768 = vunpack.c.l.b16 %v687
        %v769 = vunpack.c.h.b16 %v687
        %v770 = vunpack.c.l.b16 %v688
        %v771 = vunpack.c.l.b16 %v689
        %v772 = vunpack.c.h.b16 %v689
        %v773 = vunpack.c.l.b16 %v690
        %v774 = vunpack.c.l.b16 %v691
        %v775 = vunpack.c.h.b16 %v691
        %v776 = vunpack.c.l.b16 %v692
        %v777 = vunpack.c.l.b16 %v693
        %v778 = vunpack.c.h.b16 %v693
        %v779 = vunpack.c.l.b16 %v694
        %v780 = vunpack.c.l.b16 %v695
        %v781 = vunpack.c.h.b16 %v695
        %v782 = vunpack.c.l.b16 %v696
        %v783 = vunpack.c.l.b16 %v697
        %v784 = vunpack.c.h.b16 %v697
        %v785 = vunpack.c.l.b16 %v698
        %v786 = vunpack.c.l.b16 %v699
        %v787 = vunpack.c.h.b16 %v699
        %v788 = vunpack.c.l.b16 %v700
        %v789 = vunpack.c.l.b16 %v701
        %v790 = vunpack.c.h.b16 %v701
        %v791 = vunpack.c.l.b16 %v702
        %v792 = vunpack.c.l.b16 %v703
        %v793 = vunpack.c.h.b16 %v703
        %v794 = vunpack.c.l.b16 %v704
        %v795 = vunpack.c.l.b16 %v705
        %v796 = vunpack.c.h.b16 %v705
        %v797 = vunpack.c.l.b16 %v706
        %v798 = vunpack.c.l.b16 %v707
        %v799 = vunpack.c.h.b16 %v707
        %v800 = vunpack.c.l.b16 %v708
        %v801 = vunpack.c.l.b16 %v709
        %v802 = vunpack.c.h.b16 %v709
        %v803 = vunpack.c.l.b16 %v710
        %v804 = vunpack.c.l.b16 %v711
        %v805 = vunpack.c.h.b16 %v711
        %v806 = vunpack.c.l.b16 %v712
        %v807 = vunpack.c.l.b16 %v713
        %v808 = vunpack.c.h.b16 %v713
        %v809 = vunpack.c.l.b16 %v714
        %v810 = vunpack.c.l.b16 %v715
        %v811 = vunpack.c.h.b16 %v715
        %v812 = vunpack.c.l.b16 %v716
        %v813 = vunpack.c.l.b16 %v717
        %v814 = vunpack.c.h.b16 %v717
        %v815 = vunpack.c.l.b16 %v718
        %v816 = vpack.c.b16 %v771, %v768
        %v817 = vpack.c.b16 %v772, %v769
        %v818 = vpack.c.b16 %v773, %v770
        %v819 = vpack.c.b16 %v777, %v774
        %v820 = vpack.c.b16 %v778, %v775
        %v821 = vpack.c.b16 %v779, %v776
        %v822 = vpack.c.b16 %v783, %v780
        %v823 = vpack.c.b16 %v784, %v781
        %v824 = vpack.c.b16 %v785, %v782
        %v825 = vpack.c.b16 %v789, %v786
        %v826 = vpack.c.b16 %v790, %v787
        %v827 = vpack.c.b16 %v791, %v788
        %v828 = vpack.c.b16 %v795, %v792
        %v829 = vpack.c.b16 %v796, %v793
        %v830 = vpack.c.b16 %v797, %v794
        %v831 = vpack.c.b16 %v801, %v798
        %v832 = vpack.c.b16 %v802, %v799
        %v833 = vpack.c.b16 %v803, %v800
        %v834 = vpack.c.b16 %v807, %v804
        %v835 = vpack.c.b16 %v808, %v805
        %v836 = vpack.c.b16 %v809, %v806
        %v837 = vpack.c.b16 %v813, %v810
        %v838 = vpack.c.b16 %v814, %v811
        %v839 = vpack.c.b16 %v815, %v812
        %864 = vmatprep.subr.bf16.mxu0 %v817
        %865 = vmatpush1.bf16.msra.mxu0 %v816
        %866 = vmatprep.subr.bf16.mxu0 %v820
        %867 = vmatpush1.bf16.msra.mxu0 %v819
        %868 = vmatprep.subr.bf16.mxu0 %v823
        %869 = vmatpush1.bf16.msra.mxu0 %v822
        %870 = vmatprep.subr.bf16.mxu0 %v826
        %871 = vmatpush1.bf16.msra.mxu0 %v825
        %872 = vmatprep.subr.bf16.mxu0 %v829
        %873 = vmatpush1.bf16.msra.mxu0 %v828
        %874 = vmatprep.subr.bf16.mxu0 %v832
        %875 = vmatpush1.bf16.msra.mxu0 %v831
        %876 = vmatprep.subr.bf16.mxu0 %v835
        %877 = vmatpush1.bf16.msra.mxu0 %v834
        %878 = vmatprep.subr.bf16.mxu0 %v838
        %879 = vmatpush1.bf16.msra.mxu0 %v837
        %880 = vmatprep.subr.bf16.mxu0 0
        %881 = vmatpush1.bf16.msra.mxu0 0
        %882 = vmatprep.subr.bf16.mxu0 0
        %883 = vmatpush1.bf16.msra.mxu0 0
        %884 = vmatprep.subr.bf16.mxu0 0
        %885 = vmatpush1.bf16.msra.mxu0 0
        %886 = vmatprep.subr.bf16.mxu0 0
        %887 = vmatpush1.bf16.msra.mxu0 0
        %888 = vmatprep.subr.bf16.mxu0 0
        %889 = vmatpush1.bf16.msra.mxu0 0
        %890 = vmatprep.subr.bf16.mxu0 0
        %891 = vmatpush1.bf16.msra.mxu0 0
        %892 = vmatprep.subr.bf16.mxu0 0
        %893 = vmatpush1.bf16.msra.mxu0 0
        %894 = vmatprep.subr.bf16.mxu0 0
        %895 = vmatpush1.bf16.msra.mxu0 0
        %896 = vmatprep.mubr.bf16.mxu0 0
        %897 = vmatmul.mubr.bf16.gmra.mrb[0].mxu0 %v686
        %v898 = vpop.f32.mrb[0].mxu0
        %v899 = vadd.f32 %v724, %v898
        %v900 = vpop.f32.mrb[0].mxu0
        %v901 = vadd.f32 %v728, %v900
        %v902 = vpop.f32.mrb[0].mxu0
        %v903 = vpop.f32.mrb[0].mxu0
        %904 = vdwg.mxu0
        %905 = vmatprep.subr.bf16.mxu0 0
        %906 = vmatpush1.bf16.msra.mxu0 %v818
        %907 = vmatprep.subr.bf16.mxu0 0
        %908 = vmatpush1.bf16.msra.mxu0 %v821
        %909 = vmatprep.subr.bf16.mxu0 0
        %910 = vmatpush1.bf16.msra.mxu0 %v824
        %911 = vmatprep.subr.bf16.mxu0 0
        %912 = vmatpush1.bf16.msra.mxu0 %v827
        %913 = vmatprep.subr.bf16.mxu0 0
        %914 = vmatpush1.bf16.msra.mxu0 %v830
        %915 = vmatprep.subr.bf16.mxu0 0
        %916 = vmatpush1.bf16.msra.mxu0 %v833
        %917 = vmatprep.subr.bf16.mxu0 0
        %918 = vmatpush1.bf16.msra.mxu0 %v836
        %919 = vmatprep.subr.bf16.mxu0 0
        %920 = vmatpush1.bf16.msra.mxu0 %v839
        %921 = vmatprep.subr.bf16.mxu0 0
        %922 = vmatpush1.bf16.msra.mxu0 0
        %923 = vmatprep.subr.bf16.mxu0 0
        %924 = vmatpush1.bf16.msra.mxu0 0
        %925 = vmatprep.subr.bf16.mxu0 0
        %926 = vmatpush1.bf16.msra.mxu0 0
        %927 = vmatprep.subr.bf16.mxu0 0
        %928 = vmatpush1.bf16.msra.mxu0 0
        %929 = vmatprep.subr.bf16.mxu0 0
        %930 = vmatpush1.bf16.msra.mxu0 0
        %931 = vmatprep.subr.bf16.mxu0 0
        %932 = vmatpush1.bf16.msra.mxu0 0
        %933 = vmatprep.subr.bf16.mxu0 0
        %934 = vmatpush1.bf16.msra.mxu0 0
        %935 = vmatprep.subr.bf16.mxu0 0
        %936 = vmatpush1.bf16.msra.mxu0 0
        %937 = vmatprep.mubr.bf16.mxu0 0
        %938 = vmatmul.mubr.bf16.gmra.mrb[0].mxu0 %v686
        %v939 = vpop.f32.mrb[0].mxu0
        %v940 = vadd.f32 %v732, %v939
        %v941 = vpop.f32.mrb[0].mxu0
        %v942 = vpop.f32.mrb[0].mxu0
        %v943 = vpop.f32.mrb[0].mxu0
        %944 = vdwg.mxu0
        %v945 = vpack.c.bf16 %v899, %v899
        %v946 = vpack.c.bf16 %v901, %v901
        %v947 = vpack.c.bf16 %v940, %v940
        %vm948 = vcmask 261120
        %v950 = vsel %vm948, %v945, 0
        %v953 = vsel %vm948, %v946, 0
        %955 = vmatprep.subr.bf16.mxu0 0
        %956 = vmatpush1.bf16.xpose.msra.mxu0 %v953
        %957 = vmatprep.subr.bf16.mxu0 0
        %958 = vmatpush1.bf16.xpose.msra.mxu0 0
        %959 = vmatprep.subr.bf16.mxu0 0
        %960 = vmatpush1.bf16.xpose.msra.mxu0 0
        %961 = vmatprep.subr.bf16.mxu0 0
        %962 = vmatpush1.bf16.xpose.msra.mxu0 0
        %963 = vmatprep.subr.bf16.mxu0 0
        %964 = vmatpush1.bf16.xpose.msra.mxu0 0
        %965 = vmatprep.subr.bf16.mxu0 0
        %966 = vmatpush1.bf16.xpose.msra.mxu0 0
        %967 = vmatprep.subr.bf16.mxu0 0
        %968 = vmatpush1.bf16.xpose.msra.mxu0 0
        %969 = vmatprep.subr.bf16.mxu0 0
        %970 = vmatpush1.bf16.xpose.msra.mxu0 0
        %971 = vmatprep.subr.bf16.mxu0 0
        %972 = vmatpush1.bf16.xpose.msra.mxu0 0
        %973 = vmatprep.subr.bf16.mxu0 0
        %974 = vmatpush1.bf16.xpose.msra.mxu0 0
        %975 = vmatprep.subr.bf16.mxu0 0
        %976 = vmatpush1.bf16.xpose.msra.mxu0 0
        %977 = vmatprep.subr.bf16.mxu0 0
        %978 = vmatpush1.bf16.xpose.msra.mxu0 0
        %979 = vmatprep.subr.bf16.mxu0 0
        %980 = vmatpush1.bf16.xpose.msra.mxu0 0
        %981 = vmatprep.subr.bf16.mxu0 0
        %982 = vmatpush1.bf16.xpose.msra.mxu0 0
        %983 = vmatprep.subr.bf16.mxu0 0
        %984 = vmatpush1.bf16.xpose.msra.mxu0 0
        %985 = vmatprep.subr.bf16.mxu0 0
        %986 = vmatpush1.bf16.xpose.msra.mxu0 0
        %987 = vmatprep.mubr.bf16.mxu0 0
        %988 = vmatmul.mubr.bf16.gmra.mrb[0].mxu0 %v950
        %v989 = vpop.f32.mrb[0].mxu0
        %v990 = vadd.f32 0.0, %v989
        %v991 = vpop.f32.mrb[0].mxu0
        %v992 = vpop.f32.mrb[0].mxu0
        %v993 = vpop.f32.mrb[0].mxu0
        %994 = vdwg.mxu0
        %v995 = vmul.f32 %v990, 0.17677669
        %v997 = vlaneseq
        %v998 = vshrl.u32 %v997, 7
        %v999 = vsub.s32 0, %v998
        %v1000 = vrot.slane %v685, %v999
        %v1002 = vadd.f32 %v995, %v1000
        %vm1003 = vcmask 64512
        %v1004 = vsel %vm1003, %v1002, -inf
        %1005 = vmax.xlane.f32.xlu0 %v1004
        %v1006 = vpop.xlane.xlu0 %1005
        %v1007 = vsub.f32 %v1002, %v1006
        %v1008 = vmul.f32 %v1007, 1.442695
        %v1009 = vpow.pop %v1008
        %v1010 = vsel %vm1003, %v1009, 0.0
        %1011 = vadd.xlane.f32.xlu0 %v1010
        %v1012 = vpop.xlane.xlu0 %1011
        %v1013 = vrcp.pop %v1012
        %v1014 = vmul.f32 %v1009, %v1013
        %v1015 = vpack.c.bf16 %v1014, %v1014
        %v1017 = vsel %vm1003, %v1015, 0
        %vm1019 = vcmask 1043456
        %v1021 = vsel %vm1019, %v947, 0
        %1023 = vmatprep.subr.bf16.mxu0 0
        %1024 = vmatpush1.bf16.msra.mxu0 %v1021
        %1025 = vmatprep.subr.bf16.mxu0 0
        %1026 = vmatpush1.bf16.msra.mxu0 0
        %1027 = vmatprep.subr.bf16.mxu0 0
        %1028 = vmatpush1.bf16.msra.mxu0 0
        %1029 = vmatprep.subr.bf16.mxu0 0
        %1030 = vmatpush1.bf16.msra.mxu0 0
        %1031 = vmatprep.subr.bf16.mxu0 0
        %1032 = vmatpush1.bf16.msra.mxu0 0
        %1033 = vmatprep.subr.bf16.mxu0 0
        %1034 = vmatpush1.bf16.msra.mxu0 0
        %1035 = vmatprep.subr.bf16.mxu0 0
        %1036 = vmatpush1.bf16.msra.mxu0 0
        %1037 = vmatprep.subr.bf16.mxu0 0
        %1038 = vmatpush1.bf16.msra.mxu0 0
        %1039 = vmatprep.subr.bf16.mxu0 0
        %1040 = vmatpush1.bf16.msra.mxu0 0
        %1041 = vmatprep.subr.bf16.mxu0 0
        %1042 = vmatpush1.bf16.msra.mxu0 0
        %1043 = vmatprep.subr.bf16.mxu0 0
        %1044 = vmatpush1.bf16.msra.mxu0 0
        %1045 = vmatprep.subr.bf16.mxu0 0
        %1046 = vmatpush1.bf16.msra.mxu0 0
        %1047 = vmatprep.subr.bf16.mxu0 0
        %1048 = vmatpush1.bf16.msra.mxu0 0
        %1049 = vmatprep.subr.bf16.mxu0 0
        %1050 = vmatpush1.bf16.msra.mxu0 0
        %1051 = vmatprep.subr.bf16.mxu0 0
        %1052 = vmatpush1.bf16.msra.mxu0 0
        %1053 = vmatprep.subr.bf16.mxu0 0
        %1054 = vmatpush1.bf16.msra.mxu0 0
        %1055 = vmatprep.mubr.bf16.mxu0 0
        %1056 = vmatmul.mubr.bf16.gmra.mrb[0].mxu0 %v1017
        %v1057 = vpop.f32.mrb[0].mxu0
        %v1058 = vadd.f32 0.0, %v1057
        %v1059 = vpop.f32.mrb[0].mxu0
        %v1060 = vpop.f32.mrb[0].mxu0
        %v1061 = vpop.f32.mrb[0].mxu0
        %1062 = vdwg.mxu0
        %1064 = vrot.lane.b32.xlu0 %v945, 96
        %v1065 = vpop.permute.xlu0 %1064
        %1067 = vrot.lane.b32.xlu0 %v946, 96
        %v1068 = vpop.permute.xlu0 %1067
        %v1070 = vsel %vm948, %v1065, 0
        %v1073 = vsel %vm948, %v1068, 0
        %1075 = vmatprep.subr.bf16.mxu0 0
        %1076 = vmatpush1.bf16.xpose.msra.mxu0 %v1073
        %1077 = vmatprep.subr.bf16.mxu0 0
        %1078 = vmatpush1.bf16.xpose.msra.mxu0 0
        %1079 = vmatprep.subr.bf16.mxu0 0
        %1080 = vmatpush1.bf16.xpose.msra.mxu0 0
        %1081 = vmatprep.subr.bf16.mxu0 0
        %1082 = vmatpush1.bf16.xpose.msra.mxu0 0
        %1083 = vmatprep.subr.bf16.mxu0 0
        %1084 = vmatpush1.bf16.xpose.msra.mxu0 0
        %1085 = vmatprep.subr.bf16.mxu0 0
        %1086 = vmatpush1.bf16.xpose.msra.mxu0 0
        %1087 = vmatprep.subr.bf16.mxu0 0
        %1088 = vmatpush1.bf16.xpose.msra.mxu0 0
        %1089 = vmatprep.subr.bf16.mxu0 0
        %1090 = vmatpush1.bf16.xpose.msra.mxu0 0
        %1091 = vmatprep.subr.bf16.mxu0 0
        %1092 = vmatpush1.bf16.xpose.msra.mxu0 0
        %1093 = vmatprep.subr.bf16.mxu0 0
        %1094 = vmatpush1.bf16.xpose.msra.mxu0 0
        %1095 = vmatprep.subr.bf16.mxu0 0
        %1096 = vmatpush1.bf16.xpose.msra.mxu0 0
        %1097 = vmatprep.subr.bf16.mxu0 0
        %1098 = vmatpush1.bf16.xpose.msra.mxu0 0
        %1099 = vmatprep.subr.bf16.mxu0 0
        %1100 = vmatpush1.bf16.xpose.msra.mxu0 0
        %1101 = vmatprep.subr.bf16.mxu0 0
        %1102 = vmatpush1.bf16.xpose.msra.mxu0 0
        %1103 = vmatprep.subr.bf16.mxu0 0
        %1104 = vmatpush1.bf16.xpose.msra.mxu0 0
        %1105 = vmatprep.subr.bf16.mxu0 0
        %1106 = vmatpush1.bf16.xpose.msra.mxu0 0
        %1107 = vmatprep.mubr.bf16.mxu0 0
        %1108 = vmatmul.mubr.bf16.gmra.mrb[0].mxu0 %v1070
        %v1109 = vpop.f32.mrb[0].mxu0
        %v1110 = vadd.f32 0.0, %v1109
        %v1111 = vpop.f32.mrb[0].mxu0
        %v1112 = vpop.f32.mrb[0].mxu0
        %v1113 = vpop.f32.mrb[0].mxu0
        %1114 = vdwg.mxu0
        %v1115 = vmul.f32 %v1110, 0.17677669
        %v1116 = vadd.f32 %v1115, %v1000
        %v1117 = vsel %vm1003, %v1116, -inf
        %1118 = vmax.xlane.f32.xlu0 %v1117
        %v1119 = vpop.xlane.xlu0 %1118
        %v1120 = vsub.f32 %v1116, %v1119
        %v1121 = vmul.f32 %v1120, 1.442695
        %v1122 = vpow.pop %v1121
        %v1123 = vsel %vm1003, %v1122, 0.0
        %1124 = vadd.xlane.f32.xlu0 %v1123
        %v1125 = vpop.xlane.xlu0 %1124
        %v1126 = vrcp.pop %v1125
        %v1127 = vmul.f32 %v1122, %v1126
        %v1128 = vpack.c.bf16 %v1127, %v1127
        %1130 = vrot.lane.b32.xlu0 %v947, 96
        %v1131 = vpop.permute.xlu0 %1130
        %v1133 = vsel %vm1003, %v1128, 0
        %v1136 = vsel %vm1019, %v1131, 0
        %1138 = vmatprep.subr.bf16.mxu0 0
        %1139 = vmatpush1.bf16.msra.mxu0 %v1136
        %1140 = vmatprep.subr.bf16.mxu0 0
        %1141 = vmatpush1.bf16.msra.mxu0 0
        %1142 = vmatprep.subr.bf16.mxu0 0
        %1143 = vmatpush1.bf16.msra.mxu0 0
        %1144 = vmatprep.subr.bf16.mxu0 0
        %1145 = vmatpush1.bf16.msra.mxu0 0
        %1146 = vmatprep.subr.bf16.mxu0 0
        %1147 = vmatpush1.bf16.msra.mxu0 0
        %1148 = vmatprep.subr.bf16.mxu0 0
        %1149 = vmatpush1.bf16.msra.mxu0 0
        %1150 = vmatprep.subr.bf16.mxu0 0
        %1151 = vmatpush1.bf16.msra.mxu0 0
        %1152 = vmatprep.subr.bf16.mxu0 0
        %1153 = vmatpush1.bf16.msra.mxu0 0
        %1154 = vmatprep.subr.bf16.mxu0 0
        %1155 = vmatpush1.bf16.msra.mxu0 0
        %1156 = vmatprep.subr.bf16.mxu0 0
        %1157 = vmatpush1.bf16.msra.mxu0 0
        %1158 = vmatprep.subr.bf16.mxu0 0
        %1159 = vmatpush1.bf16.msra.mxu0 0
        %1160 = vmatprep.subr.bf16.mxu0 0
        %1161 = vmatpush1.bf16.msra.mxu0 0
        %1162 = vmatprep.subr.bf16.mxu0 0
        %1163 = vmatpush1.bf16.msra.mxu0 0
        %1164 = vmatprep.subr.bf16.mxu0 0
        %1165 = vmatpush1.bf16.msra.mxu0 0
        %1166 = vmatprep.subr.bf16.mxu0 0
        %1167 = vmatpush1.bf16.msra.mxu0 0
        %1168 = vmatprep.subr.bf16.mxu0 0
        %1169 = vmatpush1.bf16.msra.mxu0 0
        %1170 = vmatprep.mubr.bf16.mxu0 0
        %1171 = vmatmul.mubr.bf16.gmra.mrb[0].mxu0 %v1133
        %v1172 = vpop.f32.mrb[0].mxu0
        %v1173 = vadd.f32 0.0, %v1172
        %v1174 = vpop.f32.mrb[0].mxu0
        %v1175 = vpop.f32.mrb[0].mxu0
        %v1176 = vpop.f32.mrb[0].mxu0
        %1177 = vdwg.mxu0
        %1178 = vrot.lane.b32.xlu0 %v945, 64
        %v1179 = vpop.permute.xlu0 %1178
        %1180 = vrot.lane.b32.xlu0 %v946, 64
        %v1181 = vpop.permute.xlu0 %1180
        %v1183 = vsel %vm948, %v1179, 0
        %v1186 = vsel %vm948, %v1181, 0
        %1188 = vmatprep.subr.bf16.mxu0 0
        %1189 = vmatpush1.bf16.xpose.msra.mxu0 %v1186
        %1190 = vmatprep.subr.bf16.mxu0 0
        %1191 = vmatpush1.bf16.xpose.msra.mxu0 0
        %1192 = vmatprep.subr.bf16.mxu0 0
        %1193 = vmatpush1.bf16.xpose.msra.mxu0 0
        %1194 = vmatprep.subr.bf16.mxu0 0
        %1195 = vmatpush1.bf16.xpose.msra.mxu0 0
        %1196 = vmatprep.subr.bf16.mxu0 0
        %1197 = vmatpush1.bf16.xpose.msra.mxu0 0
        %1198 = vmatprep.subr.bf16.mxu0 0
        %1199 = vmatpush1.bf16.xpose.msra.mxu0 0
        %1200 = vmatprep.subr.bf16.mxu0 0
        %1201 = vmatpush1.bf16.xpose.msra.mxu0 0
        %1202 = vmatprep.subr.bf16.mxu0 0
        %1203 = vmatpush1.bf16.xpose.msra.mxu0 0
        %1204 = vmatprep.subr.bf16.mxu0 0
        %1205 = vmatpush1.bf16.xpose.msra.mxu0 0
        %1206 = vmatprep.subr.bf16.mxu0 0
        %1207 = vmatpush1.bf16.xpose.msra.mxu0 0
        %1208 = vmatprep.subr.bf16.mxu0 0
        %1209 = vmatpush1.bf16.xpose.msra.mxu0 0
        %1210 = vmatprep.subr.bf16.mxu0 0
        %1211 = vmatpush1.bf16.xpose.msra.mxu0 0
        %1212 = vmatprep.subr.bf16.mxu0 0
        %1213 = vmatpush1.bf16.xpose.msra.mxu0 0
        %1214 = vmatprep.subr.bf16.mxu0 0
        %1215 = vmatpush1.bf16.xpose.msra.mxu0 0
        %1216 = vmatprep.subr.bf16.mxu0 0
        %1217 = vmatpush1.bf16.xpose.msra.mxu0 0
        %1218 = vmatprep.subr.bf16.mxu0 0
        %1219 = vmatpush1.bf16.xpose.msra.mxu0 0
        %1220 = vmatprep.mubr.bf16.mxu0 0
        %1221 = vmatmul.mubr.bf16.gmra.mrb[0].mxu0 %v1183
        %v1222 = vpop.f32.mrb[0].mxu0
        %v1223 = vadd.f32 0.0, %v1222
        %v1224 = vpop.f32.mrb[0].mxu0
        %v1225 = vpop.f32.mrb[0].mxu0
        %v1226 = vpop.f32.mrb[0].mxu0
        %1227 = vdwg.mxu0
        %v1228 = vmul.f32 %v1223, 0.17677669
        %v1229 = vadd.f32 %v1228, %v1000
        %v1230 = vsel %vm1003, %v1229, -inf
        %1231 = vmax.xlane.f32.xlu0 %v1230
        %v1232 = vpop.xlane.xlu0 %1231
        %v1233 = vsub.f32 %v1229, %v1232
        %v1234 = vmul.f32 %v1233, 1.442695
        %v1235 = vpow.pop %v1234
        %v1236 = vsel %vm1003, %v1235, 0.0
        %1237 = vadd.xlane.f32.xlu0 %v1236
        %v1238 = vpop.xlane.xlu0 %1237
        %v1239 = vrcp.pop %v1238
        %v1240 = vmul.f32 %v1235, %v1239
        %v1241 = vpack.c.bf16 %v1240, %v1240
        %1242 = vrot.lane.b32.xlu0 %v947, 64
        %v1243 = vpop.permute.xlu0 %1242
        %v1245 = vsel %vm1003, %v1241, 0
        %v1248 = vsel %vm1019, %v1243, 0
        %1250 = vmatprep.subr.bf16.mxu0 0
        %1251 = vmatpush1.bf16.msra.mxu0 %v1248
        %1252 = vmatprep.subr.bf16.mxu0 0
        %1253 = vmatpush1.bf16.msra.mxu0 0
        %1254 = vmatprep.subr.bf16.mxu0 0
        %1255 = vmatpush1.bf16.msra.mxu0 0
        %1256 = vmatprep.subr.bf16.mxu0 0
        %1257 = vmatpush1.bf16.msra.mxu0 0
        %1258 = vmatprep.subr.bf16.mxu0 0
        %1259 = vmatpush1.bf16.msra.mxu0 0
        %1260 = vmatprep.subr.bf16.mxu0 0
        %1261 = vmatpush1.bf16.msra.mxu0 0
        %1262 = vmatprep.subr.bf16.mxu0 0
        %1263 = vmatpush1.bf16.msra.mxu0 0
        %1264 = vmatprep.subr.bf16.mxu0 0
        %1265 = vmatpush1.bf16.msra.mxu0 0
        %1266 = vmatprep.subr.bf16.mxu0 0
        %1267 = vmatpush1.bf16.msra.mxu0 0
        %1268 = vmatprep.subr.bf16.mxu0 0
        %1269 = vmatpush1.bf16.msra.mxu0 0
        %1270 = vmatprep.subr.bf16.mxu0 0
        %1271 = vmatpush1.bf16.msra.mxu0 0
        %1272 = vmatprep.subr.bf16.mxu0 0
        %1273 = vmatpush1.bf16.msra.mxu0 0
        %1274 = vmatprep.subr.bf16.mxu0 0
        %1275 = vmatpush1.bf16.msra.mxu0 0
        %1276 = vmatprep.subr.bf16.mxu0 0
        %1277 = vmatpush1.bf16.msra.mxu0 0
        %1278 = vmatprep.subr.bf16.mxu0 0
        %1279 = vmatpush1.bf16.msra.mxu0 0
        %1280 = vmatprep.subr.bf16.mxu0 0
        %1281 = vmatpush1.bf16.msra.mxu0 0
        %1282 = vmatprep.mubr.bf16.mxu0 0
        %1283 = vmatmul.mubr.bf16.gmra.mrb[0].mxu0 %v1245
        %v1284 = vpop.f32.mrb[0].mxu0
        %v1285 = vadd.f32 0.0, %v1284
        %v1286 = vpop.f32.mrb[0].mxu0
        %v1287 = vpop.f32.mrb[0].mxu0
        %v1288 = vpop.f32.mrb[0].mxu0
        %1289 = vdwg.mxu0
        %1290 = vrot.lane.b32.xlu0 %v945, 32
        %v1291 = vpop.permute.xlu0 %1290
        %1292 = vrot.lane.b32.xlu0 %v946, 32
        %v1293 = vpop.permute.xlu0 %1292
        %v1295 = vsel %vm948, %v1291, 0
        %v1298 = vsel %vm948, %v1293, 0
        %1300 = vmatprep.subr.bf16.mxu0 0
        %1301 = vmatpush1.bf16.xpose.msra.mxu0 %v1298
        %1302 = vmatprep.subr.bf16.mxu0 0
        %1303 = vmatpush1.bf16.xpose.msra.mxu0 0
        %1304 = vmatprep.subr.bf16.mxu0 0
        %1305 = vmatpush1.bf16.xpose.msra.mxu0 0
        %1306 = vmatprep.subr.bf16.mxu0 0
        %1307 = vmatpush1.bf16.xpose.msra.mxu0 0
        %1308 = vmatprep.subr.bf16.mxu0 0
        %1309 = vmatpush1.bf16.xpose.msra.mxu0 0
        %1310 = vmatprep.subr.bf16.mxu0 0
        %1311 = vmatpush1.bf16.xpose.msra.mxu0 0
        %1312 = vmatprep.subr.bf16.mxu0 0
        %1313 = vmatpush1.bf16.xpose.msra.mxu0 0
        %1314 = vmatprep.subr.bf16.mxu0 0
        %1315 = vmatpush1.bf16.xpose.msra.mxu0 0
        %1316 = vmatprep.subr.bf16.mxu0 0
        %1317 = vmatpush1.bf16.xpose.msra.mxu0 0
        %1318 = vmatprep.subr.bf16.mxu0 0
        %1319 = vmatpush1.bf16.xpose.msra.mxu0 0
        %1320 = vmatprep.subr.bf16.mxu0 0
        %1321 = vmatpush1.bf16.xpose.msra.mxu0 0
        %1322 = vmatprep.subr.bf16.mxu0 0
        %1323 = vmatpush1.bf16.xpose.msra.mxu0 0
        %1324 = vmatprep.subr.bf16.mxu0 0
        %1325 = vmatpush1.bf16.xpose.msra.mxu0 0
        %1326 = vmatprep.subr.bf16.mxu0 0
        %1327 = vmatpush1.bf16.xpose.msra.mxu0 0
        %1328 = vmatprep.subr.bf16.mxu0 0
        %1329 = vmatpush1.bf16.xpose.msra.mxu0 0
        %1330 = vmatprep.subr.bf16.mxu0 0
        %1331 = vmatpush1.bf16.xpose.msra.mxu0 0
        %1332 = vmatprep.mubr.bf16.mxu0 0
        %1333 = vmatmul.mubr.bf16.gmra.mrb[0].mxu0 %v1295
        %v1334 = vpop.f32.mrb[0].mxu0
        %v1335 = vadd.f32 0.0, %v1334
        %v1336 = vpop.f32.mrb[0].mxu0
        %v1337 = vpop.f32.mrb[0].mxu0
        %v1338 = vpop.f32.mrb[0].mxu0
        %1339 = vdwg.mxu0
        %v1340 = vmul.f32 %v1335, 0.17677669
        %v1341 = vadd.f32 %v1340, %v1000
        %v1342 = vsel %vm1003, %v1341, -inf
        %1343 = vmax.xlane.f32.xlu0 %v1342
        %v1344 = vpop.xlane.xlu0 %1343
        %v1345 = vsub.f32 %v1341, %v1344
        %v1346 = vmul.f32 %v1345, 1.442695
        %v1347 = vpow.pop %v1346
        %v1348 = vsel %vm1003, %v1347, 0.0
        %1349 = vadd.xlane.f32.xlu0 %v1348
        %v1350 = vpop.xlane.xlu0 %1349
        %v1351 = vrcp.pop %v1350
        %v1352 = vmul.f32 %v1347, %v1351
        %v1353 = vpack.c.bf16 %v1352, %v1352
        %1354 = vrot.lane.b32.xlu0 %v947, 32
        %v1355 = vpop.permute.xlu0 %1354
        %v1357 = vsel %vm1003, %v1353, 0
        %v1360 = vsel %vm1019, %v1355, 0
        %1362 = vmatprep.subr.bf16.mxu0 0
        %1363 = vmatpush1.bf16.msra.mxu0 %v1360
        %1364 = vmatprep.subr.bf16.mxu0 0
        %1365 = vmatpush1.bf16.msra.mxu0 0
        %1366 = vmatprep.subr.bf16.mxu0 0
        %1367 = vmatpush1.bf16.msra.mxu0 0
        %1368 = vmatprep.subr.bf16.mxu0 0
        %1369 = vmatpush1.bf16.msra.mxu0 0
        %1370 = vmatprep.subr.bf16.mxu0 0
        %1371 = vmatpush1.bf16.msra.mxu0 0
        %1372 = vmatprep.subr.bf16.mxu0 0
        %1373 = vmatpush1.bf16.msra.mxu0 0
        %1374 = vmatprep.subr.bf16.mxu0 0
        %1375 = vmatpush1.bf16.msra.mxu0 0
        %1376 = vmatprep.subr.bf16.mxu0 0
        %1377 = vmatpush1.bf16.msra.mxu0 0
        %1378 = vmatprep.subr.bf16.mxu0 0
        %1379 = vmatpush1.bf16.msra.mxu0 0
        %1380 = vmatprep.subr.bf16.mxu0 0
        %1381 = vmatpush1.bf16.msra.mxu0 0
        %1382 = vmatprep.subr.bf16.mxu0 0
        %1383 = vmatpush1.bf16.msra.mxu0 0
        %1384 = vmatprep.subr.bf16.mxu0 0
        %1385 = vmatpush1.bf16.msra.mxu0 0
        %1386 = vmatprep.subr.bf16.mxu0 0
        %1387 = vmatpush1.bf16.msra.mxu0 0
        %1388 = vmatprep.subr.bf16.mxu0 0
        %1389 = vmatpush1.bf16.msra.mxu0 0
        %1390 = vmatprep.subr.bf16.mxu0 0
        %1391 = vmatpush1.bf16.msra.mxu0 0
        %1392 = vmatprep.subr.bf16.mxu0 0
        %1393 = vmatpush1.bf16.msra.mxu0 0
        %1394 = vmatprep.mubr.bf16.mxu0 0
        %1395 = vmatmul.mubr.bf16.gmra.mrb[0].mxu0 %v1357
        %v1396 = vpop.f32.mrb[0].mxu0
        %v1397 = vadd.f32 0.0, %v1396
        %v1398 = vpop.f32.mrb[0].mxu0
        %v1399 = vpop.f32.mrb[0].mxu0
        %v1400 = vpop.f32.mrb[0].mxu0
        %1401 = vdwg.mxu0
        %1403 = vrot.lane.b32.xlu0 %v1173, 32
        %v1404 = vpop.permute.xlu0 %1403
        %1407 = vrot.lane.b32.xlu0 %v1285, 64
        %v1408 = vpop.permute.xlu0 %1407
        %1411 = vrot.lane.b32.xlu0 %v1397, 96
        %v1412 = vpop.permute.xlu0 %1411
        %v1414 = vsel %vm948, %v1058, %v1404
        %vm1415 = vcmask 523264
        %v1416 = vsel %vm1415, %v1414, %v1408
        %vm1417 = vcmask 785408
        %v1418 = vsel %vm1417, %v1416, %v1412
        %v1419 = vpack.c.bf16 %v1418, %v1418
        %v1420 = vld [vmem:[#allocation11] sm:$0xf]
        %v1421 = vld [vmem:[#allocation11 + $0x4] sm:$0xf]
        %v1422 = vld [vmem:[#allocation11 + $0x8] sm:$0xf]
        %v1423 = vld [vmem:[#allocation11 + $0xc] sm:$0xf]
        %v1424 = vld [vmem:[#allocation11 + $0x10] sm:$0xf]
        %v1425 = vld [vmem:[#allocation11 + $0x14] sm:$0xf]
        %v1426 = vld [vmem:[#allocation11 + $0x18] sm:$0xf]
        %v1427 = vld [vmem:[#allocation11 + $0x1c] sm:$0xf]
        %v1428 = vld [vmem:[#allocation11 + $0x20] sm:$0xf]
        %v1429 = vld [vmem:[#allocation11 + $0x24] sm:$0xf]
        %v1430 = vld [vmem:[#allocation11 + $0x28] sm:$0xf]
        %v1431 = vld [vmem:[#allocation11 + $0x2c] sm:$0xf]
        %v1432 = vld [vmem:[#allocation11 + $0x30] sm:$0xf]
        %v1433 = vld [vmem:[#allocation11 + $0x34] sm:$0xf]
        %v1434 = vld [vmem:[#allocation11 + $0x38] sm:$0xf]
        %v1435 = vld [vmem:[#allocation11 + $0x3c] sm:$0xf]
        %v1436 = vld [vmem:[%s7] sm:$0x1]
        %v1438 = vlaneseq
        %v1439 = vshrl.u32 %v1438, 7
        %v1440 = vsub.s32 0, %v1439
        %v1441 = vrot.slane %v1436, %v1440
        %v1459 = vunpack.c.l.b16 %v1420
        %v1460 = vunpack.c.l.b16 %v1421
        %v1461 = vunpack.c.l.b16 %v1422
        %v1462 = vunpack.c.l.b16 %v1423
        %v1463 = vunpack.c.l.b16 %v1424
        %v1464 = vunpack.c.l.b16 %v1425
        %v1465 = vunpack.c.l.b16 %v1426
        %v1466 = vunpack.c.l.b16 %v1427
        %v1467 = vunpack.c.l.b16 %v1428
        %v1468 = vunpack.c.l.b16 %v1429
        %v1469 = vunpack.c.l.b16 %v1430
        %v1470 = vunpack.c.l.b16 %v1431
        %v1471 = vunpack.c.l.b16 %v1432
        %v1472 = vunpack.c.l.b16 %v1433
        %v1473 = vunpack.c.l.b16 %v1434
        %v1474 = vunpack.c.l.b16 %v1435
        %v1475 = vpack.c.b16 %v1460, %v1459
        %v1476 = vpack.c.b16 %v1462, %v1461
        %v1477 = vpack.c.b16 %v1464, %v1463
        %v1478 = vpack.c.b16 %v1466, %v1465
        %v1479 = vpack.c.b16 %v1468, %v1467
        %v1480 = vpack.c.b16 %v1470, %v1469
        %v1481 = vpack.c.b16 %v1472, %v1471
        %v1482 = vpack.c.b16 %v1474, %v1473
        %1491 = vmatprep.subr.bf16.mxu0 0
        %1492 = vmatpush1.bf16.msra.mxu0 %v1475
        %1493 = vmatprep.subr.bf16.mxu0 0
        %1494 = vmatpush1.bf16.msra.mxu0 %v1476
        %1495 = vmatprep.subr.bf16.mxu0 0
        %1496 = vmatpush1.bf16.msra.mxu0 %v1477
        %1497 = vmatprep.subr.bf16.mxu0 0
        %1498 = vmatpush1.bf16.msra.mxu0 %v1478
        %1499 = vmatprep.subr.bf16.mxu0 0
        %1500 = vmatpush1.bf16.msra.mxu0 %v1479
        %1501 = vmatprep.subr.bf16.mxu0 0
        %1502 = vmatpush1.bf16.msra.mxu0 %v1480
        %1503 = vmatprep.subr.bf16.mxu0 0
        %1504 = vmatpush1.bf16.msra.mxu0 %v1481
        %1505 = vmatprep.subr.bf16.mxu0 0
        %1506 = vmatpush1.bf16.msra.mxu0 %v1482
        %1507 = vmatprep.subr.bf16.mxu0 0
        %1508 = vmatpush1.bf16.msra.mxu0 0
        %1509 = vmatprep.subr.bf16.mxu0 0
        %1510 = vmatpush1.bf16.msra.mxu0 0
        %1511 = vmatprep.subr.bf16.mxu0 0
        %1512 = vmatpush1.bf16.msra.mxu0 0
        %1513 = vmatprep.subr.bf16.mxu0 0
        %1514 = vmatpush1.bf16.msra.mxu0 0
        %1515 = vmatprep.subr.bf16.mxu0 0
        %1516 = vmatpush1.bf16.msra.mxu0 0
        %1517 = vmatprep.subr.bf16.mxu0 0
        %1518 = vmatpush1.bf16.msra.mxu0 0
        %1519 = vmatprep.subr.bf16.mxu0 0
        %1520 = vmatpush1.bf16.msra.mxu0 0
        %1521 = vmatprep.subr.bf16.mxu0 0
        %1522 = vmatpush1.bf16.msra.mxu0 0
        %1523 = vmatprep.mubr.bf16.mxu0 0
        %1524 = vmatmul.mubr.bf16.gmra.mrb[0].mxu0 %v1419
        %v1525 = vpop.f32.mrb[0].mxu0
        %v1526 = vadd.f32 %v1441, %v1525
        %v1527 = vpop.f32.mrb[0].mxu0
        %v1528 = vpop.f32.mrb[0].mxu0
        %v1529 = vpop.f32.mrb[0].mxu0
        %1530 = vdwg.mxu0
        %v1531 = vadd.f32 %v682, %v1526
        %v1532 = vld [vmem:[%s8] sm:$0x1]
        %v1533 = vld [vmem:[%s9] sm:$0x1]
        %1534 = vadd.xlane.f32.xlu0 %v1531
        %v1535 = vpop.xlane.xlu0 %1534
        %v1536 = vmul.f32 %v1535, %v659
        %v1537 = vsub.f32 %v1531, %v1536
        %v1538 = vmul.f32 %v1537, %v1537
        %1539 = vadd.xlane.f32.xlu0 %v1538
        %v1540 = vpop.xlane.xlu0 %1539
        %v1541 = vmul.f32 %v1540, %v659
        %v1542 = vadd.f32 %v1541, 1e-12
        %v1543 = vrsqrt.pop %v1542
        %v1544 = vmul.f32 %v1537, %v1543
        %v1546 = vlaneseq
        %v1547 = vshrl.u32 %v1546, 7
        %v1548 = vsub.s32 0, %v1547
        %v1549 = vrot.slane %v1532, %v1548
        %v1551 = vmul.f32 %v1544, %v1549
        %v1553 = vlaneseq
        %v1554 = vshrl.u32 %v1553, 7
        %v1555 = vsub.s32 0, %v1554
        %v1556 = vrot.slane %v1533, %v1555
        %v1558 = vadd.f32 %v1551, %v1556
        %v1559 = vpack.c.bf16 %v1558, %v1558
        %v1560 = vld [vmem:[#allocation13] sm:$0xff]
        %v1561 = vld [vmem:[#allocation13 + $0x8] sm:$0xff]
        %v1562 = vld [vmem:[#allocation13 + $0x10] sm:$0xff]
        %v1563 = vld [vmem:[#allocation13 + $0x18] sm:$0xff]
        %v1564 = vld [vmem:[#allocation13 + $0x20] sm:$0xff]
        %v1565 = vld [vmem:[#allocation13 + $0x28] sm:$0xff]
        %v1566 = vld [vmem:[#allocation13 + $0x30] sm:$0xff]
        %v1567 = vld [vmem:[#allocation13 + $0x38] sm:$0xff]
        %v1568 = vld [vmem:[#allocation13 + $0x40] sm:$0xff]
        %v1569 = vld [vmem:[#allocation13 + $0x48] sm:$0xff]
        %v1570 = vld [vmem:[#allocation13 + $0x50] sm:$0xff]
        %v1571 = vld [vmem:[#allocation13 + $0x58] sm:$0xff]
        %v1572 = vld [vmem:[#allocation13 + $0x60] sm:$0xff]
        %v1573 = vld [vmem:[#allocation13 + $0x68] sm:$0xff]
        %v1574 = vld [vmem:[#allocation13 + $0x70] sm:$0xff]
        %v1575 = vld [vmem:[#allocation13 + $0x78] sm:$0xff]
        %v1576 = vld [vmem:[#allocation13 + $0x80] sm:$0xff]
        %v1577 = vld [vmem:[#allocation13 + $0x88] sm:$0xff]
        %v1578 = vld [vmem:[#allocation13 + $0x90] sm:$0xff]
        %v1579 = vld [vmem:[#allocation13 + $0x98] sm:$0xff]
        %v1580 = vld [vmem:[#allocation13 + $0xa0] sm:$0xff]
        %v1581 = vld [vmem:[#allocation13 + $0xa8] sm:$0xff]
        %v1582 = vld [vmem:[#allocation13 + $0xb0] sm:$0xff]
        %v1583 = vld [vmem:[#allocation13 + $0xb8] sm:$0xff]
        %v1584 = vld [vmem:[#allocation13 + $0xc0] sm:$0xff]
        %v1585 = vld [vmem:[#allocation13 + $0xc8] sm:$0xff]
        %v1586 = vld [vmem:[#allocation13 + $0xd0] sm:$0xff]
        %v1587 = vld [vmem:[#allocation13 + $0xd8] sm:$0xff]
        %v1588 = vld [vmem:[#allocation13 + $0xe0] sm:$0xff]
        %v1589 = vld [vmem:[#allocation13 + $0xe8] sm:$0xff]
        %v1590 = vld [vmem:[#allocation13 + $0xf0] sm:$0xff]
        %v1591 = vld [vmem:[#allocation13 + $0xf8] sm:$0xff]
        %v1592 = vld [vmem:[%s11] sm:$0xf]
        %v1594 = vlaneseq
        %v1595 = vshrl.u32 %v1594, 7
        %v1596 = vsub.s32 0, %v1595
        %v1597 = vrot.slane %v1592, %v1596
        %v1598 = vlaneseq
        %v1599 = vshrl.u32 %v1598, 7
        %v1600 = vsub.s32 1, %v1599
        %v1601 = vrot.slane %v1592, %v1600
        %v1602 = vlaneseq
        %v1603 = vshrl.u32 %v1602, 7
        %v1604 = vsub.s32 2, %v1603
        %v1605 = vrot.slane %v1592, %v1604
        %v1606 = vlaneseq
        %v1607 = vshrl.u32 %v1606, 7
        %v1608 = vsub.s32 3, %v1607
        %v1609 = vrot.slane %v1592, %v1608
        %v1646 = vunpack.c.l.b16 %v1560
        %v1647 = vunpack.c.h.b16 %v1560
        %v1648 = vunpack.c.l.b16 %v1561
        %v1649 = vunpack.c.h.b16 %v1561
        %v1650 = vunpack.c.l.b16 %v1562
        %v1651 = vunpack.c.h.b16 %v1562
        %v1652 = vunpack.c.l.b16 %v1563
        %v1653 = vunpack.c.h.b16 %v1563
        %v1654 = vunpack.c.l.b16 %v1564
        %v1655 = vunpack.c.h.b16 %v1564
        %v1656 = vunpack.c.l.b16 %v1565
        %v1657 = vunpack.c.h.b16 %v1565
        %v1658 = vunpack.c.l.b16 %v1566
        %v1659 = vunpack.c.h.b16 %v1566
        %v1660 = vunpack.c.l.b16 %v1567
        %v1661 = vunpack.c.h.b16 %v1567
        %v1662 = vunpack.c.l.b16 %v1568
        %v1663 = vunpack.c.h.b16 %v1568
        %v1664 = vunpack.c.l.b16 %v1569
        %v1665 = vunpack.c.h.b16 %v1569
        %v1666 = vunpack.c.l.b16 %v1570
        %v1667 = vunpack.c.h.b16 %v1570
        %v1668 = vunpack.c.l.b16 %v1571
        %v1669 = vunpack.c.h.b16 %v1571
        %v1670 = vunpack.c.l.b16 %v1572
        %v1671 = vunpack.c.h.b16 %v1572
        %v1672 = vunpack.c.l.b16 %v1573
        %v1673 = vunpack.c.h.b16 %v1573
        %v1674 = vunpack.c.l.b16 %v1574
        %v1675 = vunpack.c.h.b16 %v1574
        %v1676 = vunpack.c.l.b16 %v1575
        %v1677 = vunpack.c.h.b16 %v1575
        %v1678 = vunpack.c.l.b16 %v1576
        %v1679 = vunpack.c.h.b16 %v1576
        %v1680 = vunpack.c.l.b16 %v1577
        %v1681 = vunpack.c.h.b16 %v1577
        %v1682 = vunpack.c.l.b16 %v1578
        %v1683 = vunpack.c.h.b16 %v1578
        %v1684 = vunpack.c.l.b16 %v1579
        %v1685 = vunpack.c.h.b16 %v1579
        %v1686 = vunpack.c.l.b16 %v1580
        %v1687 = vunpack.c.h.b16 %v1580
        %v1688 = vunpack.c.l.b16 %v1581
        %v1689 = vunpack.c.h.b16 %v1581
        %v1690 = vunpack.c.l.b16 %v1582
        %v1691 = vunpack.c.h.b16 %v1582
        %v1692 = vunpack.c.l.b16 %v1583
        %v1693 = vunpack.c.h.b16 %v1583
        %v1694 = vunpack.c.l.b16 %v1584
        %v1695 = vunpack.c.h.b16 %v1584
        %v1696 = vunpack.c.l.b16 %v1585
        %v1697 = vunpack.c.h.b16 %v1585
        %v1698 = vunpack.c.l.b16 %v1586
        %v1699 = vunpack.c.h.b16 %v1586
        %v1700 = vunpack.c.l.b16 %v1587
        %v1701 = vunpack.c.h.b16 %v1587
        %v1702 = vunpack.c.l.b16 %v1588
        %v1703 = vunpack.c.h.b16 %v1588
        %v1704 = vunpack.c.l.b16 %v1589
        %v1705 = vunpack.c.h.b16 %v1589
        %v1706 = vunpack.c.l.b16 %v1590
        %v1707 = vunpack.c.h.b16 %v1590
        %v1708 = vunpack.c.l.b16 %v1591
        %v1709 = vunpack.c.h.b16 %v1591
        %v1710 = vpack.c.b16 %v1650, %v1646
        %v1711 = vpack.c.b16 %v1651, %v1647
        %v1712 = vpack.c.b16 %v1652, %v1648
        %v1713 = vpack.c.b16 %v1653, %v1649
        %v1714 = vpack.c.b16 %v1658, %v1654
        %v1715 = vpack.c.b16 %v1659, %v1655
        %v1716 = vpack.c.b16 %v1660, %v1656
        %v1717 = vpack.c.b16 %v1661, %v1657
        %v1718 = vpack.c.b16 %v1666, %v1662
        %v1719 = vpack.c.b16 %v1667, %v1663
        %v1720 = vpack.c.b16 %v1668, %v1664
        %v1721 = vpack.c.b16 %v1669, %v1665
        %v1722 = vpack.c.b16 %v1674, %v1670
        %v1723 = vpack.c.b16 %v1675, %v1671
        %v1724 = vpack.c.b16 %v1676, %v1672
        %v1725 = vpack.c.b16 %v1677, %v1673
        %v1726 = vpack.c.b16 %v1682, %v1678
        %v1727 = vpack.c.b16 %v1683, %v1679
        %v1728 = vpack.c.b16 %v1684, %v1680
        %v1729 = vpack.c.b16 %v1685, %v1681
        %v1730 = vpack.c.b16 %v1690, %v1686
        %v1731 = vpack.c.b16 %v1691, %v1687
        %v1732 = vpack.c.b16 %v1692, %v1688
        %v1733 = vpack.c.b16 %v1693, %v1689
        %v1734 = vpack.c.b16 %v1698, %v1694
        %v1735 = vpack.c.b16 %v1699, %v1695
        %v1736 = vpack.c.b16 %v1700, %v1696
        %v1737 = vpack.c.b16 %v1701, %v1697
        %v1738 = vpack.c.b16 %v1706, %v1702
        %v1739 = vpack.c.b16 %v1707, %v1703
        %v1740 = vpack.c.b16 %v1708, %v1704
        %v1741 = vpack.c.b16 %v1709, %v1705
        %1774 = vmatprep.subr.bf16.mxu0 %v1711
        %1775 = vmatpush1.bf16.msra.mxu0 %v1710
        %1776 = vmatprep.subr.bf16.mxu0 %v1715
        %1777 = vmatpush1.bf16.msra.mxu0 %v1714
        %1778 = vmatprep.subr.bf16.mxu0 %v1719
        %1779 = vmatpush1.bf16.msra.mxu0 %v1718
        %1780 = vmatprep.subr.bf16.mxu0 %v1723
        %1781 = vmatpush1.bf16.msra.mxu0 %v1722
        %1782 = vmatprep.subr.bf16.mxu0 %v1727
        %1783 = vmatpush1.bf16.msra.mxu0 %v1726
        %1784 = vmatprep.subr.bf16.mxu0 %v1731
        %1785 = vmatpush1.bf16.msra.mxu0 %v1730
        %1786 = vmatprep.subr.bf16.mxu0 %v1735
        %1787 = vmatpush1.bf16.msra.mxu0 %v1734
        %1788 = vmatprep.subr.bf16.mxu0 %v1739
        %1789 = vmatpush1.bf16.msra.mxu0 %v1738
        %1790 = vmatprep.subr.bf16.mxu0 0
        %1791 = vmatpush1.bf16.msra.mxu0 0
        %1792 = vmatprep.subr.bf16.mxu0 0
        %1793 = vmatpush1.bf16.msra.mxu0 0
        %1794 = vmatprep.subr.bf16.mxu0 0
        %1795 = vmatpush1.bf16.msra.mxu0 0
        %1796 = vmatprep.subr.bf16.mxu0 0
        %1797 = vmatpush1.bf16.msra.mxu0 0
        %1798 = vmatprep.subr.bf16.mxu0 0
        %1799 = vmatpush1.bf16.msra.mxu0 0
        %1800 = vmatprep.subr.bf16.mxu0 0
        %1801 = vmatpush1.bf16.msra.mxu0 0
        %1802 = vmatprep.subr.bf16.mxu0 0
        %1803 = vmatpush1.bf16.msra.mxu0 0
        %1804 = vmatprep.subr.bf16.mxu0 0
        %1805 = vmatpush1.bf16.msra.mxu0 0
        %1806 = vmatprep.mubr.bf16.mxu0 0
        %1807 = vmatmul.mubr.bf16.gmra.mrb[0].mxu0 %v1559
        %v1808 = vpop.f32.mrb[0].mxu0
        %v1809 = vadd.f32 %v1597, %v1808
        %v1810 = vpop.f32.mrb[0].mxu0
        %v1811 = vadd.f32 %v1601, %v1810
        %v1812 = vpop.f32.mrb[0].mxu0
        %v1813 = vpop.f32.mrb[0].mxu0
        %1814 = vdwg.mxu0
        %1815 = vmatprep.subr.bf16.mxu0 %v1713
        %1816 = vmatpush1.bf16.msra.mxu0 %v1712
        %1817 = vmatprep.subr.bf16.mxu0 %v1717
        %1818 = vmatpush1.bf16.msra.mxu0 %v1716
        %1819 = vmatprep.subr.bf16.mxu0 %v1721
        %1820 = vmatpush1.bf16.msra.mxu0 %v1720
        %1821 = vmatprep.subr.bf16.mxu0 %v1725
        %1822 = vmatpush1.bf16.msra.mxu0 %v1724
        %1823 = vmatprep.subr.bf16.mxu0 %v1729
        %1824 = vmatpush1.bf16.msra.mxu0 %v1728
        %1825 = vmatprep.subr.bf16.mxu0 %v1733
        %1826 = vmatpush1.bf16.msra.mxu0 %v1732
        %1827 = vmatprep.subr.bf16.mxu0 %v1737
        %1828 = vmatpush1.bf16.msra.mxu0 %v1736
        %1829 = vmatprep.subr.bf16.mxu0 %v1741
        %1830 = vmatpush1.bf16.msra.mxu0 %v1740
        %1831 = vmatprep.subr.bf16.mxu0 0
        %1832 = vmatpush1.bf16.msra.mxu0 0
        %1833 = vmatprep.subr.bf16.mxu0 0
        %1834 = vmatpush1.bf16.msra.mxu0 0
        %1835 = vmatprep.subr.bf16.mxu0 0
        %1836 = vmatpush1.bf16.msra.mxu0 0
        %1837 = vmatprep.subr.bf16.mxu0 0
        %1838 = vmatpush1.bf16.msra.mxu0 0
        %1839 = vmatprep.subr.bf16.mxu0 0
        %1840 = vmatpush1.bf16.msra.mxu0 0
        %1841 = vmatprep.subr.bf16.mxu0 0
        %1842 = vmatpush1.bf16.msra.mxu0 0
        %1843 = vmatprep.subr.bf16.mxu0 0
        %1844 = vmatpush1.bf16.msra.mxu0 0
        %1845 = vmatprep.subr.bf16.mxu0 0
        %1846 = vmatpush1.bf16.msra.mxu0 0
        %1847 = vmatprep.mubr.bf16.mxu0 0
        %1848 = vmatmul.mubr.bf16.gmra.mrb[0].mxu0 %v1559
        %v1849 = vpop.f32.mrb[0].mxu0
        %v1850 = vadd.f32 %v1605, %v1849
        %v1851 = vpop.f32.mrb[0].mxu0
        %v1852 = vadd.f32 %v1609, %v1851
        %v1853 = vpop.f32.mrb[0].mxu0
        %v1854 = vpop.f32.mrb[0].mxu0
        %1855 = vdwg.mxu0
        %v1856 = vmul.f32 %v1809, 0.5
        %v1857 = vmul.f32 %v1811, 0.5
        %v1858 = vmul.f32 %v1850, 0.5
        %v1859 = vmul.f32 %v1852, 0.5
        %v1860 = vmul.f32 %v1809, 0.044715
        %v1861 = vmul.f32 %v1811, 0.044715
        %v1862 = vmul.f32 %v1850, 0.044715
        %v1863 = vmul.f32 %v1852, 0.044715
        %v1864 = vmul.f32 %v1860, %v1809
        %v1865 = vmul.f32 %v1861, %v1811
        %v1866 = vmul.f32 %v1862, %v1850
        %v1867 = vmul.f32 %v1863, %v1852
        %v1868 = vmul.f32 %v1864, %v1809
        %v1869 = vmul.f32 %v1865, %v1811
        %v1870 = vmul.f32 %v1866, %v1850
        %v1871 = vmul.f32 %v1867, %v1852
        %v1872 = vadd.f32 %v1809, %v1868
        %v1873 = vadd.f32 %v1811, %v1869
        %v1874 = vadd.f32 %v1850, %v1870
        %v1875 = vadd.f32 %v1852, %v1871
        %v1876 = vmul.f32 %v1872, 0.7978846
        %v1877 = vmul.f32 %v1873, 0.7978846
        %v1878 = vmul.f32 %v1874, 0.7978846
        %v1879 = vmul.f32 %v1875, 0.7978846
        %v1880 = vtanh.pop %v1876
        %v1881 = vtanh.pop %v1877
        %v1882 = vtanh.pop %v1878
        %v1883 = vtanh.pop %v1879
        %v1884 = vadd.f32 %v1880, 1.0
        %v1885 = vadd.f32 %v1881, 1.0
        %v1886 = vadd.f32 %v1882, 1.0
        %v1887 = vadd.f32 %v1883, 1.0
        %v1888 = vmul.f32 %v1856, %v1884
        %v1889 = vmul.f32 %v1857, %v1885
        %v1890 = vmul.f32 %v1858, %v1886
        %v1891 = vmul.f32 %v1859, %v1887
        %v1892 = vpack.c.bf16 %v1888, %v1888
        %v1893 = vpack.c.bf16 %v1889, %v1889
        %v1894 = vpack.c.bf16 %v1890, %v1890
        %v1895 = vpack.c.bf16 %v1891, %v1891
        %v1896 = vld [vmem:[#allocation14] sm:$0xf]
        %v1897 = vld [vmem:[#allocation14 + $0x4] sm:$0xf]
        %v1898 = vld [vmem:[#allocation14 + $0x8] sm:$0xf]
        %v1899 = vld [vmem:[#allocation14 + $0xc] sm:$0xf]
        %v1900 = vld [vmem:[#allocation14 + $0x10] sm:$0xf]
        %v1901 = vld [vmem:[#allocation14 + $0x14] sm:$0xf]
        %v1902 = vld [vmem:[#allocation14 + $0x18] sm:$0xf]
        %v1903 = vld [vmem:[#allocation14 + $0x1c] sm:$0xf]
        %v1904 = vld [vmem:[#allocation14 + $0x20] sm:$0xf]
        %v1905 = vld [vmem:[#allocation14 + $0x24] sm:$0xf]
        %v1906 = vld [vmem:[#allocation14 + $0x28] sm:$0xf]
        %v1907 = vld [vmem:[#allocation14 + $0x2c] sm:$0xf]
        %v1908 = vld [vmem:[#allocation14 + $0x30] sm:$0xf]
        %v1909 = vld [vmem:[#allocation14 + $0x34] sm:$0xf]
        %v1910 = vld [vmem:[#allocation14 + $0x38] sm:$0xf]
        %v1911 = vld [vmem:[#allocation14 + $0x3c] sm:$0xf]
        %v1912 = vld [vmem:[#allocation14 + $0x40] sm:$0xf]
        %v1913 = vld [vmem:[#allocation14 + $0x44] sm:$0xf]
        %v1914 = vld [vmem:[#allocation14 + $0x48] sm:$0xf]
        %v1915 = vld [vmem:[#allocation14 + $0x4c] sm:$0xf]
        %v1916 = vld [vmem:[#allocation14 + $0x50] sm:$0xf]
        %v1917 = vld [vmem:[#allocation14 + $0x54] sm:$0xf]
        %v1918 = vld [vmem:[#allocation14 + $0x58] sm:$0xf]
        %v1919 = vld [vmem:[#allocation14 + $0x5c] sm:$0xf]
        %v1920 = vld [vmem:[#allocation14 + $0x60] sm:$0xf]
        %v1921 = vld [vmem:[#allocation14 + $0x64] sm:$0xf]
        %v1922 = vld [vmem:[#allocation14 + $0x68] sm:$0xf]
        %v1923 = vld [vmem:[#allocation14 + $0x6c] sm:$0xf]
        %v1924 = vld [vmem:[#allocation14 + $0x70] sm:$0xf]
        %v1925 = vld [vmem:[#allocation14 + $0x74] sm:$0xf]
        %v1926 = vld [vmem:[#allocation14 + $0x78] sm:$0xf]
        %v1927 = vld [vmem:[#allocation14 + $0x7c] sm:$0xf]
        %v1928 = vld [vmem:[#allocation14 + $0x80] sm:$0xf]
        %v1929 = vld [vmem:[#allocation14 + $0x84] sm:$0xf]
        %v1930 = vld [vmem:[#allocation14 + $0x88] sm:$0xf]
        %v1931 = vld [vmem:[#allocation14 + $0x8c] sm:$0xf]
        %v1932 = vld [vmem:[#allocation14 + $0x90] sm:$0xf]
        %v1933 = vld [vmem:[#allocation14 + $0x94] sm:$0xf]
        %v1934 = vld [vmem:[#allocation14 + $0x98] sm:$0xf]
        %v1935 = vld [vmem:[#allocation14 + $0x9c] sm:$0xf]
        %v1936 = vld [vmem:[#allocation14 + $0xa0] sm:$0xf]
        %v1937 = vld [vmem:[#allocation14 + $0xa4] sm:$0xf]
        %v1938 = vld [vmem:[#allocation14 + $0xa8] sm:$0xf]
        %v1939 = vld [vmem:[#allocation14 + $0xac] sm:$0xf]
        %v1940 = vld [vmem:[#allocation14 + $0xb0] sm:$0xf]
        %v1941 = vld [vmem:[#allocation14 + $0xb4] sm:$0xf]
        %v1942 = vld [vmem:[#allocation14 + $0xb8] sm:$0xf]
        %v1943 = vld [vmem:[#allocation14 + $0xbc] sm:$0xf]
        %v1944 = vld [vmem:[#allocation14 + $0xc0] sm:$0xf]
        %v1945 = vld [vmem:[#allocation14 + $0xc4] sm:$0xf]
        %v1946 = vld [vmem:[#allocation14 + $0xc8] sm:$0xf]
        %v1947 = vld [vmem:[#allocation14 + $0xcc] sm:$0xf]
        %v1948 = vld [vmem:[#allocation14 + $0xd0] sm:$0xf]
        %v1949 = vld [vmem:[#allocation14 + $0xd4] sm:$0xf]
        %v1950 = vld [vmem:[#allocation14 + $0xd8] sm:$0xf]
        %v1951 = vld [vmem:[#allocation14 + $0xdc] sm:$0xf]
        %v1952 = vld [vmem:[#allocation14 + $0xe0] sm:$0xf]
        %v1953 = vld [vmem:[#allocation14 + $0xe4] sm:$0xf]
        %v1954 = vld [vmem:[#allocation14 + $0xe8] sm:$0xf]
        %v1955 = vld [vmem:[#allocation14 + $0xec] sm:$0xf]
        %v1956 = vld [vmem:[#allocation14 + $0xf0] sm:$0xf]
        %v1957 = vld [vmem:[#allocation14 + $0xf4] sm:$0xf]
        %v1958 = vld [vmem:[#allocation14 + $0xf8] sm:$0xf]
        %v1959 = vld [vmem:[#allocation14 + $0xfc] sm:$0xf]
        %v1960 = vld [vmem:[%s13] sm:$0x1]
        %v1962 = vlaneseq
        %v1963 = vshrl.u32 %v1962, 7
        %v1964 = vsub.s32 0, %v1963
        %v1965 = vrot.slane %v1960, %v1964
        %v2031 = vunpack.c.l.b16 %v1896
        %v2032 = vunpack.c.l.b16 %v1897
        %v2033 = vunpack.c.l.b16 %v1898
        %v2034 = vunpack.c.l.b16 %v1899
        %v2035 = vunpack.c.l.b16 %v1900
        %v2036 = vunpack.c.l.b16 %v1901
        %v2037 = vunpack.c.l.b16 %v1902
        %v2038 = vunpack.c.l.b16 %v1903
        %v2039 = vunpack.c.l.b16 %v1904
        %v2040 = vunpack.c.l.b16 %v1905
        %v2041 = vunpack.c.l.b16 %v1906
        %v2042 = vunpack.c.l.b16 %v1907
        %v2043 = vunpack.c.l.b16 %v1908
        %v2044 = vunpack.c.l.b16 %v1909
        %v2045 = vunpack.c.l.b16 %v1910
        %v2046 = vunpack.c.l.b16 %v1911
        %v2047 = vunpack.c.l.b16 %v1912
        %v2048 = vunpack.c.l.b16 %v1913
        %v2049 = vunpack.c.l.b16 %v1914
        %v2050 = vunpack.c.l.b16 %v1915
        %v2051 = vunpack.c.l.b16 %v1916
        %v2052 = vunpack.c.l.b16 %v1917
        %v2053 = vunpack.c.l.b16 %v1918
        %v2054 = vunpack.c.l.b16 %v1919
        %v2055 = vunpack.c.l.b16 %v1920
        %v2056 = vunpack.c.l.b16 %v1921
        %v2057 = vunpack.c.l.b16 %v1922
        %v2058 = vunpack.c.l.b16 %v1923
        %v2059 = vunpack.c.l.b16 %v1924
        %v2060 = vunpack.c.l.b16 %v1925
        %v2061 = vunpack.c.l.b16 %v1926
        %v2062 = vunpack.c.l.b16 %v1927
        %v2063 = vunpack.c.l.b16 %v1928
        %v2064 = vunpack.c.l.b16 %v1929
        %v2065 = vunpack.c.l.b16 %v1930
        %v2066 = vunpack.c.l.b16 %v1931
        %v2067 = vunpack.c.l.b16 %v1932
        %v2068 = vunpack.c.l.b16 %v1933
        %v2069 = vunpack.c.l.b16 %v1934
        %v2070 = vunpack.c.l.b16 %v1935
        %v2071 = vunpack.c.l.b16 %v1936
        %v2072 = vunpack.c.l.b16 %v1937
        %v2073 = vunpack.c.l.b16 %v1938
        %v2074 = vunpack.c.l.b16 %v1939
        %v2075 = vunpack.c.l.b16 %v1940
        %v2076 = vunpack.c.l.b16 %v1941
        %v2077 = vunpack.c.l.b16 %v1942
        %v2078 = vunpack.c.l.b16 %v1943
        %v2079 = vunpack.c.l.b16 %v1944
        %v2080 = vunpack.c.l.b16 %v1945
        %v2081 = vunpack.c.l.b16 %v1946
        %v2082 = vunpack.c.l.b16 %v1947
        %v2083 = vunpack.c.l.b16 %v1948
        %v2084 = vunpack.c.l.b16 %v1949
        %v2085 = vunpack.c.l.b16 %v1950
        %v2086 = vunpack.c.l.b16 %v1951
        %v2087 = vunpack.c.l.b16 %v1952
        %v2088 = vunpack.c.l.b16 %v1953
        %v2089 = vunpack.c.l.b16 %v1954
        %v2090 = vunpack.c.l.b16 %v1955
        %v2091 = vunpack.c.l.b16 %v1956
        %v2092 = vunpack.c.l.b16 %v1957
        %v2093 = vunpack.c.l.b16 %v1958
        %v2094 = vunpack.c.l.b16 %v1959
        %v2095 = vpack.c.b16 %v2032, %v2031
        %v2096 = vpack.c.b16 %v2034, %v2033
        %v2097 = vpack.c.b16 %v2036, %v2035
        %v2098 = vpack.c.b16 %v2038, %v2037
        %v2099 = vpack.c.b16 %v2040, %v2039
        %v2100 = vpack.c.b16 %v2042, %v2041
        %v2101 = vpack.c.b16 %v2044, %v2043
        %v2102 = vpack.c.b16 %v2046, %v2045
        %v2103 = vpack.c.b16 %v2048, %v2047
        %v2104 = vpack.c.b16 %v2050, %v2049
        %v2105 = vpack.c.b16 %v2052, %v2051
        %v2106 = vpack.c.b16 %v2054, %v2053
        %v2107 = vpack.c.b16 %v2056, %v2055
        %v2108 = vpack.c.b16 %v2058, %v2057
        %v2109 = vpack.c.b16 %v2060, %v2059
        %v2110 = vpack.c.b16 %v2062, %v2061
        %v2111 = vpack.c.b16 %v2064, %v2063
        %v2112 = vpack.c.b16 %v2066, %v2065
        %v2113 = vpack.c.b16 %v2068, %v2067
        %v2114 = vpack.c.b16 %v2070, %v2069
        %v2115 = vpack.c.b16 %v2072, %v2071
        %v2116 = vpack.c.b16 %v2074, %v2073
        %v2117 = vpack.c.b16 %v2076, %v2075
        %v2118 = vpack.c.b16 %v2078, %v2077
        %v2119 = vpack.c.b16 %v2080, %v2079
        %v2120 = vpack.c.b16 %v2082, %v2081
        %v2121 = vpack.c.b16 %v2084, %v2083
        %v2122 = vpack.c.b16 %v2086, %v2085
        %v2123 = vpack.c.b16 %v2088, %v2087
        %v2124 = vpack.c.b16 %v2090, %v2089
        %v2125 = vpack.c.b16 %v2092, %v2091
        %v2126 = vpack.c.b16 %v2094, %v2093
        %2159 = vmatprep.subr.bf16.mxu0 0
        %2160 = vmatpush1.bf16.msra.mxu0 %v2095
        %2161 = vmatprep.subr.bf16.mxu0 0
        %2162 = vmatpush1.bf16.msra.mxu0 %v2096
        %2163 = vmatprep.subr.bf16.mxu0 0
        %2164 = vmatpush1.bf16.msra.mxu0 %v2097
        %2165 = vmatprep.subr.bf16.mxu0 0
        %2166 = vmatpush1.bf16.msra.mxu0 %v2098
        %2167 = vmatprep.subr.bf16.mxu0 0
        %2168 = vmatpush1.bf16.msra.mxu0 %v2099
        %2169 = vmatprep.subr.bf16.mxu0 0
        %2170 = vmatpush1.bf16.msra.mxu0 %v2100
        %2171 = vmatprep.subr.bf16.mxu0 0
        %2172 = vmatpush1.bf16.msra.mxu0 %v2101
        %2173 = vmatprep.subr.bf16.mxu0 0
        %2174 = vmatpush1.bf16.msra.mxu0 %v2102
        %2175 = vmatprep.subr.bf16.mxu0 0
        %2176 = vmatpush1.bf16.msra.mxu0 %v2103
        %2177 = vmatprep.subr.bf16.mxu0 0
        %2178 = vmatpush1.bf16.msra.mxu0 %v2104
        %2179 = vmatprep.subr.bf16.mxu0 0
        %2180 = vmatpush1.bf16.msra.mxu0 %v2105
        %2181 = vmatprep.subr.bf16.mxu0 0
        %2182 = vmatpush1.bf16.msra.mxu0 %v2106
        %2183 = vmatprep.subr.bf16.mxu0 0
        %2184 = vmatpush1.bf16.msra.mxu0 %v2107
        %2185 = vmatprep.subr.bf16.mxu0 0
        %2186 = vmatpush1.bf16.msra.mxu0 %v2108
        %2187 = vmatprep.subr.bf16.mxu0 0
        %2188 = vmatpush1.bf16.msra.mxu0 %v2109
        %2189 = vmatprep.subr.bf16.mxu0 0
        %2190 = vmatpush1.bf16.msra.mxu0 %v2110
        %2191 = vmatprep.mubr.bf16.mxu0 %v1893
        %2192 = vmatmul.mubr.bf16.gmra.mrb[0].mxu0 %v1892
        %v2193 = vpop.f32.mrb[0].mxu0
        %v2194 = vadd.f32 %v1965, %v2193
        %v2195 = vpop.f32.mrb[0].mxu0
        %v2196 = vpop.f32.mrb[0].mxu0
        %v2197 = vpop.f32.mrb[0].mxu0
        %2198 = vdwg.mxu0
        %2199 = vmatprep.subr.bf16.mxu0 0
        %2200 = vmatpush1.bf16.msra.mxu0 %v2111
        %2201 = vmatprep.subr.bf16.mxu0 0
        %2202 = vmatpush1.bf16.msra.mxu0 %v2112
        %2203 = vmatprep.subr.bf16.mxu0 0
        %2204 = vmatpush1.bf16.msra.mxu0 %v2113
        %2205 = vmatprep.subr.bf16.mxu0 0
        %2206 = vmatpush1.bf16.msra.mxu0 %v2114
        %2207 = vmatprep.subr.bf16.mxu0 0
        %2208 = vmatpush1.bf16.msra.mxu0 %v2115
        %2209 = vmatprep.subr.bf16.mxu0 0
        %2210 = vmatpush1.bf16.msra.mxu0 %v2116
        %2211 = vmatprep.subr.bf16.mxu0 0
        %2212 = vmatpush1.bf16.msra.mxu0 %v2117
        %2213 = vmatprep.subr.bf16.mxu0 0
        %2214 = vmatpush1.bf16.msra.mxu0 %v2118
        %2215 = vmatprep.subr.bf16.mxu0 0
        %2216 = vmatpush1.bf16.msra.mxu0 %v2119
        %2217 = vmatprep.subr.bf16.mxu0 0
        %2218 = vmatpush1.bf16.msra.mxu0 %v2120
        %2219 = vmatprep.subr.bf16.mxu0 0
        %2220 = vmatpush1.bf16.msra.mxu0 %v2121
        %2221 = vmatprep.subr.bf16.mxu0 0
        %2222 = vmatpush1.bf16.msra.mxu0 %v2122
        %2223 = vmatprep.subr.bf16.mxu0 0
        %2224 = vmatpush1.bf16.msra.mxu0 %v2123
        %2225 = vmatprep.subr.bf16.mxu0 0
        %2226 = vmatpush1.bf16.msra.mxu0 %v2124
        %2227 = vmatprep.subr.bf16.mxu0 0
        %2228 = vmatpush1.bf16.msra.mxu0 %v2125
        %2229 = vmatprep.subr.bf16.mxu0 0
        %2230 = vmatpush1.bf16.msra.mxu0 %v2126
        %2231 = vmatprep.mubr.bf16.mxu0 %v1895
        %2232 = vmatmul.mubr.bf16.gmra.mrb[0].mxu0 %v1894
        %v2233 = vpop.f32.mrb[0].mxu0
        %v2234 = vadd.f32 %v2194, %v2233
        %v2235 = vpop.f32.mrb[0].mxu0
        %v2236 = vpop.f32.mrb[0].mxu0
        %v2237 = vpop.f32.mrb[0].mxu0
        %2238 = vdwg.mxu0
        %v2239 = vadd.f32 %v1558, %v2234
        %v2240 = vld [vmem:[%s14] sm:$0x1]
        %v2241 = vld [vmem:[%s15] sm:$0x1]
        %2242 = vadd.xlane.f32.xlu0 %v2239
        %v2243 = vpop.xlane.xlu0 %2242
        %v2244 = vmul.f32 %v2243, %v659
        %v2245 = vsub.f32 %v2239, %v2244
        %v2246 = vmul.f32 %v2245, %v2245
        %2247 = vadd.xlane.f32.xlu0 %v2246
        %v2248 = vpop.xlane.xlu0 %2247
        %v2249 = vmul.f32 %v2248, %v659
        %v2250 = vadd.f32 %v2249, 1e-12
        %v2251 = vrsqrt.pop %v2250
        %v2252 = vmul.f32 %v2245, %v2251
        %v2254 = vlaneseq
        %v2255 = vshrl.u32 %v2254, 7
        %v2256 = vsub.s32 0, %v2255
        %v2257 = vrot.slane %v2240, %v2256
        %v2259 = vmul.f32 %v2252, %v2257
        %v2261 = vlaneseq
        %v2262 = vshrl.u32 %v2261, 7
        %v2263 = vsub.s32 0, %v2262
        %v2264 = vrot.slane %v2241, %v2263
        %v2266 = vadd.f32 %v2259, %v2264
        %v2267 = vpack.c.bf16 %v2266, %v2266
        %s2268 = scalar_lea.vmem [#allocation10], 192
        %v2269 = vld [vmem:[%s2268] sm:$0xff]
        %v2270 = vld [vmem:[%s2268 + $0x8] sm:$0xf]
        %v2271 = vld [vmem:[%s2268 + $0xc] sm:$0xff]
        %v2272 = vld [vmem:[%s2268 + $0x14] sm:$0xf]
        %v2273 = vld [vmem:[%s2268 + $0x18] sm:$0xff]
        %v2274 = vld [vmem:[%s2268 + $0x20] sm:$0xf]
        %v2275 = vld [vmem:[%s2268 + $0x24] sm:$0xff]
        %v2276 = vld [vmem:[%s2268 + $0x2c] sm:$0xf]
        %v2277 = vld [vmem:[%s2268 + $0x30] sm:$0xff]
        %v2278 = vld [vmem:[%s2268 + $0x38] sm:$0xf]
        %v2279 = vld [vmem:[%s2268 + $0x3c] sm:$0xff]
        %v2280 = vld [vmem:[%s2268 + $0x44] sm:$0xf]
        %v2281 = vld [vmem:[%s2268 + $0x48] sm:$0xff]
        %v2282 = vld [vmem:[%s2268 + $0x50] sm:$0xf]
        %v2283 = vld [vmem:[%s2268 + $0x54] sm:$0xff]
        %v2284 = vld [vmem:[%s2268 + $0x5c] sm:$0xf]
        %v2285 = vld [vmem:[%s2268 + $0x60] sm:$0xff]
        %v2286 = vld [vmem:[%s2268 + $0x68] sm:$0xf]
        %v2287 = vld [vmem:[%s2268 + $0x6c] sm:$0xff]
        %v2288 = vld [vmem:[%s2268 + $0x74] sm:$0xf]
        %v2289 = vld [vmem:[%s2268 + $0x78] sm:$0xff]
        %v2290 = vld [vmem:[%s2268 + $0x80] sm:$0xf]
        %v2291 = vld [vmem:[%s2268 + $0x84] sm:$0xff]
        %v2292 = vld [vmem:[%s2268 + $0x8c] sm:$0xf]
        %v2293 = vld [vmem:[%s2268 + $0x90] sm:$0xff]
        %v2294 = vld [vmem:[%s2268 + $0x98] sm:$0xf]
        %v2295 = vld [vmem:[%s2268 + $0x9c] sm:$0xff]
        %v2296 = vld [vmem:[%s2268 + $0xa4] sm:$0xf]
        %v2297 = vld [vmem:[%s2268 + $0xa8] sm:$0xff]
        %v2298 = vld [vmem:[%s2268 + $0xb0] sm:$0xf]
        %v2299 = vld [vmem:[%s2268 + $0xb4] sm:$0xff]
        %v2300 = vld [vmem:[%s2268 + $0xbc] sm:$0xf]
        %s2301 = scalar_lea.vmem %s5, 3
        %v2302 = vld [vmem:[%s2301] sm:$0x7]
        %v2304 = vlaneseq
        %v2305 = vshrl.u32 %v2304, 7
        %v2306 = vsub.s32 0, %v2305
        %v2307 = vrot.slane %v2302, %v2306
        %v2308 = vlaneseq
        %v2309 = vshrl.u32 %v2308, 7
        %v2310 = vsub.s32 1, %v2309
        %v2311 = vrot.slane %v2302, %v2310
        %v2312 = vlaneseq
        %v2313 = vshrl.u32 %v2312, 7
        %v2314 = vsub.s32 2, %v2313
        %v2315 = vrot.slane %v2302, %v2314
        %v2351 = vunpack.c.l.b16 %v2269
        %v2352 = vunpack.c.h.b16 %v2269
        %v2353 = vunpack.c.l.b16 %v2270
        %v2354 = vunpack.c.l.b16 %v2271
        %v2355 = vunpack.c.h.b16 %v2271
        %v2356 = vunpack.c.l.b16 %v2272
        %v2357 = vunpack.c.l.b16 %v2273
        %v2358 = vunpack.c.h.b16 %v2273
        %v2359 = vunpack.c.l.b16 %v2274
        %v2360 = vunpack.c.l.b16 %v2275
        %v2361 = vunpack.c.h.b16 %v2275
        %v2362 = vunpack.c.l.b16 %v2276
        %v2363 = vunpack.c.l.b16 %v2277
        %v2364 = vunpack.c.h.b16 %v2277
        %v2365 = vunpack.c.l.b16 %v2278
        %v2366 = vunpack.c.l.b16 %v2279
        %v2367 = vunpack.c.h.b16 %v2279
        %v2368 = vunpack.c.l.b16 %v2280
        %v2369 = vunpack.c.l.b16 %v2281
        %v2370 = vunpack.c.h.b16 %v2281
        %v2371 = vunpack.c.l.b16 %v2282
        %v2372 = vunpack.c.l.b16 %v2283
        %v2373 = vunpack.c.h.b16 %v2283
        %v2374 = vunpack.c.l.b16 %v2284
        %v2375 = vunpack.c.l.b16 %v2285
        %v2376 = vunpack.c.h.b16 %v2285
        %v2377 = vunpack.c.l.b16 %v2286
        %v2378 = vunpack.c.l.b16 %v2287
        %v2379 = vunpack.c.h.b16 %v2287
        %v2380 = vunpack.c.l.b16 %v2288
        %v2381 = vunpack.c.l.b16 %v2289
        %v2382 = vunpack.c.h.b16 %v2289
        %v2383 = vunpack.c.l.b16 %v2290
        %v2384 = vunpack.c.l.b16 %v2291
        %v2385 = vunpack.c.h.b16 %v2291
        %v2386 = vunpack.c.l.b16 %v2292
        %v2387 = vunpack.c.l.b16 %v2293
        %v2388 = vunpack.c.h.b16 %v2293
        %v2389 = vunpack.c.l.b16 %v2294
        %v2390 = vunpack.c.l.b16 %v2295
        %v2391 = vunpack.c.h.b16 %v2295
        %v2392 = vunpack.c.l.b16 %v2296
        %v2393 = vunpack.c.l.b16 %v2297
        %v2394 = vunpack.c.h.b16 %v2297
        %v2395 = vunpack.c.l.b16 %v2298
        %v2396 = vunpack.c.l.b16 %v2299
        %v2397 = vunpack.c.h.b16 %v2299
        %v2398 = vunpack.c.l.b16 %v2300
        %v2399 = vpack.c.b16 %v2354, %v2351
        %v2400 = vpack.c.b16 %v2355, %v2352
        %v2401 = vpack.c.b16 %v2356, %v2353
        %v2402 = vpack.c.b16 %v2360, %v2357
        %v2403 = vpack.c.b16 %v2361, %v2358
        %v2404 = vpack.c.b16 %v2362, %v2359
        %v2405 = vpack.c.b16 %v2366, %v2363
        %v2406 = vpack.c.b16 %v2367, %v2364
        %v2407 = vpack.c.b16 %v2368, %v2365
        %v2408 = vpack.c.b16 %v2372, %v2369
        %v2409 = vpack.c.b16 %v2373, %v2370
        %v2410 = vpack.c.b16 %v2374, %v2371
        %v2411 = vpack.c.b16 %v2378, %v2375
        %v2412 = vpack.c.b16 %v2379, %v2376
        %v2413 = vpack.c.b16 %v2380, %v2377
        %v2414 = vpack.c.b16 %v2384, %v2381
        %v2415 = vpack.c.b16 %v2385, %v2382
        %v2416 = vpack.c.b16 %v2386, %v2383
        %v2417 = vpack.c.b16 %v2390, %v2387
        %v2418 = vpack.c.b16 %v2391, %v2388
        %v2419 = vpack.c.b16 %v2392, %v2389
        %v2420 = vpack.c.b16 %v2396, %v2393
        %v2421 = vpack.c.b16 %v2397, %v2394
        %v2422 = vpack.c.b16 %v2398, %v2395
        %2447 = vmatprep.subr.bf16.mxu0 %v2400
        %2448 = vmatpush1.bf16.msra.mxu0 %v2399
        %2449 = vmatprep.subr.bf16.mxu0 %v2403
        %2450 = vmatpush1.bf16.msra.mxu0 %v2402
        %2451 = vmatprep.subr.bf16.mxu0 %v2406
        %2452 = vmatpush1.bf16.msra.mxu0 %v2405
        %2453 = vmatprep.subr.bf16.mxu0 %v2409
        %2454 = vmatpush1.bf16.msra.mxu0 %v2408
        %2455 = vmatprep.subr.bf16.mxu0 %v2412
        %2456 = vmatpush1.bf16.msra.mxu0 %v2411
        %2457 = vmatprep.subr.bf16.mxu0 %v2415
        %2458 = vmatpush1.bf16.msra.mxu0 %v2414
        %2459 = vmatprep.subr.bf16.mxu0 %v2418
        %2460 = vmatpush1.bf16.msra.mxu0 %v2417
        %2461 = vmatprep.subr.bf16.mxu0 %v2421
        %2462 = vmatpush1.bf16.msra.mxu0 %v2420
        %2463 = vmatprep.subr.bf16.mxu0 0
        %2464 = vmatpush1.bf16.msra.mxu0 0
        %2465 = vmatprep.subr.bf16.mxu0 0
        %2466 = vmatpush1.bf16.msra.mxu0 0
        %2467 = vmatprep.subr.bf16.mxu0 0
        %2468 = vmatpush1.bf16.msra.mxu0 0
        %2469 = vmatprep.subr.bf16.mxu0 0
        %2470 = vmatpush1.bf16.msra.mxu0 0
        %2471 = vmatprep.subr.bf16.mxu0 0
        %2472 = vmatpush1.bf16.msra.mxu0 0
        %2473 = vmatprep.subr.bf16.mxu0 0
        %2474 = vmatpush1.bf16.msra.mxu0 0
        %2475 = vmatprep.subr.bf16.mxu0 0
        %2476 = vmatpush1.bf16.msra.mxu0 0
        %2477 = vmatprep.subr.bf16.mxu0 0
        %2478 = vmatpush1.bf16.msra.mxu0 0
        %2479 = vmatprep.mubr.bf16.mxu0 0
        %2480 = vmatmul.mubr.bf16.gmra.mrb[0].mxu0 %v2267
        %v2481 = vpop.f32.mrb[0].mxu0
        %v2482 = vadd.f32 %v2307, %v2481
        %v2483 = vpop.f32.mrb[0].mxu0
        %v2484 = vadd.f32 %v2311, %v2483
        %v2485 = vpop.f32.mrb[0].mxu0
        %v2486 = vpop.f32.mrb[0].mxu0
        %2487 = vdwg.mxu0
        %2488 = vmatprep.subr.bf16.mxu0 0
        %2489 = vmatpush1.bf16.msra.mxu0 %v2401
        %2490 = vmatprep.subr.bf16.mxu0 0
        %2491 = vmatpush1.bf16.msra.mxu0 %v2404
        %2492 = vmatprep.subr.bf16.mxu0 0
        %2493 = vmatpush1.bf16.msra.mxu0 %v2407
        %2494 = vmatprep.subr.bf16.mxu0 0
        %2495 = vmatpush1.bf16.msra.mxu0 %v2410
        %2496 = vmatprep.subr.bf16.mxu0 0
        %2497 = vmatpush1.bf16.msra.mxu0 %v2413
        %2498 = vmatprep.subr.bf16.mxu0 0
        %2499 = vmatpush1.bf16.msra.mxu0 %v2416
        %2500 = vmatprep.subr.bf16.mxu0 0
        %2501 = vmatpush1.bf16.msra.mxu0 %v2419
        %2502 = vmatprep.subr.bf16.mxu0 0
        %2503 = vmatpush1.bf16.msra.mxu0 %v2422
        %2504 = vmatprep.subr.bf16.mxu0 0
        %2505 = vmatpush1.bf16.msra.mxu0 0
        %2506 = vmatprep.subr.bf16.mxu0 0
        %2507 = vmatpush1.bf16.msra.mxu0 0
        %2508 = vmatprep.subr.bf16.mxu0 0
        %2509 = vmatpush1.bf16.msra.mxu0 0
        %2510 = vmatprep.subr.bf16.mxu0 0
        %2511 = vmatpush1.bf16.msra.mxu0 0
        %2512 = vmatprep.subr.bf16.mxu0 0
        %2513 = vmatpush1.bf16.msra.mxu0 0
        %2514 = vmatprep.subr.bf16.mxu0 0
        %2515 = vmatpush1.bf16.msra.mxu0 0
        %2516 = vmatprep.subr.bf16.mxu0 0
        %2517 = vmatpush1.bf16.msra.mxu0 0
        %2518 = vmatprep.subr.bf16.mxu0 0
        %2519 = vmatpush1.bf16.msra.mxu0 0
        %2520 = vmatprep.mubr.bf16.mxu0 0
        %2521 = vmatmul.mubr.bf16.gmra.mrb[0].mxu0 %v2267
        %v2522 = vpop.f32.mrb[0].mxu0
        %v2523 = vadd.f32 %v2315, %v2522
        %v2524 = vpop.f32.mrb[0].mxu0
        %v2525 = vpop.f32.mrb[0].mxu0
        %v2526 = vpop.f32.mrb[0].mxu0
        %2527 = vdwg.mxu0
        %v2528 = vpack.c.bf16 %v2482, %v2482
        %v2529 = vpack.c.bf16 %v2484, %v2484
        %v2530 = vpack.c.bf16 %v2523, %v2523
        %v2532 = vsel %vm948, %v2528, 0
        %v2535 = vsel %vm948, %v2529, 0
        %2537 = vmatprep.subr.bf16.mxu0 0
        %2538 = vmatpush1.bf16.xpose.msra.mxu0 %v2535
        %2539 = vmatprep.subr.bf16.mxu0 0
        %2540 = vmatpush1.bf16.xpose.msra.mxu0 0
        %2541 = vmatprep.subr.bf16.mxu0 0
        %2542 = vmatpush1.bf16.xpose.msra.mxu0 0
        %2543 = vmatprep.subr.bf16.mxu0 0
        %2544 = vmatpush1.bf16.xpose.msra.mxu0 0
        %2545 = vmatprep.subr.bf16.mxu0 0
        %2546 = vmatpush1.bf16.xpose.msra.mxu0 0
        %2547 = vmatprep.subr.bf16.mxu0 0
        %2548 = vmatpush1.bf16.xpose.msra.mxu0 0
        %2549 = vmatprep.subr.bf16.mxu0 0
        %2550 = vmatpush1.bf16.xpose.msra.mxu0 0
        %2551 = vmatprep.subr.bf16.mxu0 0
        %2552 = vmatpush1.bf16.xpose.msra.mxu0 0
        %2553 = vmatprep.subr.bf16.mxu0 0
        %2554 = vmatpush1.bf16.xpose.msra.mxu0 0
        %2555 = vmatprep.subr.bf16.mxu0 0
        %2556 = vmatpush1.bf16.xpose.msra.mxu0 0
        %2557 = vmatprep.subr.bf16.mxu0 0
        %2558 = vmatpush1.bf16.xpose.msra.mxu0 0
        %2559 = vmatprep.subr.bf16.mxu0 0
        %2560 = vmatpush1.bf16.xpose.msra.mxu0 0
        %2561 = vmatprep.subr.bf16.mxu0 0
        %2562 = vmatpush1.bf16.xpose.msra.mxu0 0
        %2563 = vmatprep.subr.bf16.mxu0 0
        %2564 = vmatpush1.bf16.xpose.msra.mxu0 0
        %2565 = vmatprep.subr.bf16.mxu0 0
        %2566 = vmatpush1.bf16.xpose.msra.mxu0 0
        %2567 = vmatprep.subr.bf16.mxu0 0
        %2568 = vmatpush1.bf16.xpose.msra.mxu0 0
        %2569 = vmatprep.mubr.bf16.mxu0 0
        %2570 = vmatmul.mubr.bf16.gmra.mrb[0].mxu0 %v2532
        %v2571 = vpop.f32.mrb[0].mxu0
        %v2572 = vadd.f32 0.0, %v2571
        %v2573 = vpop.f32.mrb[0].mxu0
        %v2574 = vpop.f32.mrb[0].mxu0
        %v2575 = vpop.f32.mrb[0].mxu0
        %2576 = vdwg.mxu0
        %v2577 = vmul.f32 %v2572, 0.17677669
        %v2578 = vadd.f32 %v2577, %v1000
        %v2579 = vsel %vm1003, %v2578, -inf
        %2580 = vmax.xlane.f32.xlu0 %v2579
        %v2581 = vpop.xlane.xlu0 %2580
        %v2582 = vsub.f32 %v2578, %v2581
        %v2583 = vmul.f32 %v2582, 1.442695
        %v2584 = vpow.pop %v2583
        %v2585 = vsel %vm1003, %v2584, 0.0
        %2586 = vadd.xlane.f32.xlu0 %v2585
        %v2587 = vpop.xlane.xlu0 %2586
        %v2588 = vrcp.pop %v2587
        %v2589 = vmul.f32 %v2584, %v2588
        %v2590 = vpack.c.bf16 %v2589, %v2589
        %v2592 = vsel %vm1003, %v2590, 0
        %v2595 = vsel %vm1019, %v2530, 0
        %2597 = vmatprep.subr.bf16.mxu0 0
        %2598 = vmatpush1.bf16.msra.mxu0 %v2595
        %2599 = vmatprep.subr.bf16.mxu0 0
        %2600 = vmatpush1.bf16.msra.mxu0 0
        %2601 = vmatprep.subr.bf16.mxu0 0
        %2602 = vmatpush1.bf16.msra.mxu0 0
        %2603 = vmatprep.subr.bf16.mxu0 0
        %2604 = vmatpush1.bf16.msra.mxu0 0
        %2605 = vmatprep.subr.bf16.mxu0 0
        %2606 = vmatpush1.bf16.msra.mxu0 0
        %2607 = vmatprep.subr.bf16.mxu0 0
        %2608 = vmatpush1.bf16.msra.mxu0 0
        %2609 = vmatprep.subr.bf16.mxu0 0
        %2610 = vmatpush1.bf16.msra.mxu0 0
        %2611 = vmatprep.subr.bf16.mxu0 0
        %2612 = vmatpush1.bf16.msra.mxu0 0
        %2613 = vmatprep.subr.bf16.mxu0 0
        %2614 = vmatpush1.bf16.msra.mxu0 0
        %2615 = vmatprep.subr.bf16.mxu0 0
        %2616 = vmatpush1.bf16.msra.mxu0 0
        %2617 = vmatprep.subr.bf16.mxu0 0
        %2618 = vmatpush1.bf16.msra.mxu0 0
        %2619 = vmatprep.subr.bf16.mxu0 0
        %2620 = vmatpush1.bf16.msra.mxu0 0
        %2621 = vmatprep.subr.bf16.mxu0 0
        %2622 = vmatpush1.bf16.msra.mxu0 0
        %2623 = vmatprep.subr.bf16.mxu0 0
        %2624 = vmatpush1.bf16.msra.mxu0 0
        %2625 = vmatprep.subr.bf16.mxu0 0
        %2626 = vmatpush1.bf16.msra.mxu0 0
        %2627 = vmatprep.subr.bf16.mxu0 0
        %2628 = vmatpush1.bf16.msra.mxu0 0
        %2629 = vmatprep.mubr.bf16.mxu0 0
        %2630 = vmatmul.mubr.bf16.gmra.mrb[0].mxu0 %v2592
        %v2631 = vpop.f32.mrb[0].mxu0
        %v2632 = vadd.f32 0.0, %v2631
        %v2633 = vpop.f32.mrb[0].mxu0
        %v2634 = vpop.f32.mrb[0].mxu0
        %v2635 = vpop.f32.mrb[0].mxu0
        %2636 = vdwg.mxu0
        %2638 = vrot.lane.b32.xlu0 %v2528, 96
        %v2639 = vpop.permute.xlu0 %2638
        %2641 = vrot.lane.b32.xlu0 %v2529, 96
        %v2642 = vpop.permute.xlu0 %2641
        %v2644 = vsel %vm948, %v2639, 0
        %v2647 = vsel %vm948, %v2642, 0
        %2649 = vmatprep.subr.bf16.mxu0 0
        %2650 = vmatpush1.bf16.xpose.msra.mxu0 %v2647
        %2651 = vmatprep.subr.bf16.mxu0 0
        %2652 = vmatpush1.bf16.xpose.msra.mxu0 0
        %2653 = vmatprep.subr.bf16.mxu0 0
        %2654 = vmatpush1.bf16.xpose.msra.mxu0 0
        %2655 = vmatprep.subr.bf16.mxu0 0
        %2656 = vmatpush1.bf16.xpose.msra.mxu0 0
        %2657 = vmatprep.subr.bf16.mxu0 0
        %2658 = vmatpush1.bf16.xpose.msra.mxu0 0
        %2659 = vmatprep.subr.bf16.mxu0 0
        %2660 = vmatpush1.bf16.xpose.msra.mxu0 0
        %2661 = vmatprep.subr.bf16.mxu0 0
        %2662 = vmatpush1.bf16.xpose.msra.mxu0 0
        %2663 = vmatprep.subr.bf16.mxu0 0
        %2664 = vmatpush1.bf16.xpose.msra.mxu0 0
        %2665 = vmatprep.subr.bf16.mxu0 0
        %2666 = vmatpush1.bf16.xpose.msra.mxu0 0
        %2667 = vmatprep.subr.bf16.mxu0 0
        %2668 = vmatpush1.bf16.xpose.msra.mxu0 0
        %2669 = vmatprep.subr.bf16.mxu0 0
        %2670 = vmatpush1.bf16.xpose.msra.mxu0 0
        %2671 = vmatprep.subr.bf16.mxu0 0
        %2672 = vmatpush1.bf16.xpose.msra.mxu0 0
        %2673 = vmatprep.subr.bf16.mxu0 0
        %2674 = vmatpush1.bf16.xpose.msra.mxu0 0
        %2675 = vmatprep.subr.bf16.mxu0 0
        %2676 = vmatpush1.bf16.xpose.msra.mxu0 0
        %2677 = vmatprep.subr.bf16.mxu0 0
        %2678 = vmatpush1.bf16.xpose.msra.mxu0 0
        %2679 = vmatprep.subr.bf16.mxu0 0
        %2680 = vmatpush1.bf16.xpose.msra.mxu0 0
        %2681 = vmatprep.mubr.bf16.mxu0 0
        %2682 = vmatmul.mubr.bf16.gmra.mrb[0].mxu0 %v2644
        %v2683 = vpop.f32.mrb[0].mxu0
        %v2684 = vadd.f32 0.0, %v2683
        %v2685 = vpop.f32.mrb[0].mxu0
        %v2686 = vpop.f32.mrb[0].mxu0
        %v2687 = vpop.f32.mrb[0].mxu0
        %2688 = vdwg.mxu0
        %v2689 = vmul.f32 %v2684, 0.17677669
        %v2690 = vadd.f32 %v2689, %v1000
        %v2691 = vsel %vm1003, %v2690, -inf
        %2692 = vmax.xlane.f32.xlu0 %v2691
        %v2693 = vpop.xlane.xlu0 %2692
        %v2694 = vsub.f32 %v2690, %v2693
        %v2695 = vmul.f32 %v2694, 1.442695
        %v2696 = vpow.pop %v2695
        %v2697 = vsel %vm1003, %v2696, 0.0
        %2698 = vadd.xlane.f32.xlu0 %v2697
        %v2699 = vpop.xlane.xlu0 %2698
        %v2700 = vrcp.pop %v2699
        %v2701 = vmul.f32 %v2696, %v2700
        %v2702 = vpack.c.bf16 %v2701, %v2701
        %2704 = vrot.lane.b32.xlu0 %v2530, 96
        %v2705 = vpop.permute.xlu0 %2704
        %v2707 = vsel %vm1003, %v2702, 0
        %v2710 = vsel %vm1019, %v2705, 0
        %2712 = vmatprep.subr.bf16.mxu0 0
        %2713 = vmatpush1.bf16.msra.mxu0 %v2710
        %2714 = vmatprep.subr.bf16.mxu0 0
        %2715 = vmatpush1.bf16.msra.mxu0 0
        %2716 = vmatprep.subr.bf16.mxu0 0
        %2717 = vmatpush1.bf16.msra.mxu0 0
        %2718 = vmatprep.subr.bf16.mxu0 0
        %2719 = vmatpush1.bf16.msra.mxu0 0
        %2720 = vmatprep.subr.bf16.mxu0 0
        %2721 = vmatpush1.bf16.msra.mxu0 0
        %2722 = vmatprep.subr.bf16.mxu0 0
        %2723 = vmatpush1.bf16.msra.mxu0 0
        %2724 = vmatprep.subr.bf16.mxu0 0
        %2725 = vmatpush1.bf16.msra.mxu0 0
        %2726 = vmatprep.subr.bf16.mxu0 0
        %2727 = vmatpush1.bf16.msra.mxu0 0
        %2728 = vmatprep.subr.bf16.mxu0 0
        %2729 = vmatpush1.bf16.msra.mxu0 0
        %2730 = vmatprep.subr.bf16.mxu0 0
        %2731 = vmatpush1.bf16.msra.mxu0 0
        %2732 = vmatprep.subr.bf16.mxu0 0
        %2733 = vmatpush1.bf16.msra.mxu0 0
        %2734 = vmatprep.subr.bf16.mxu0 0
        %2735 = vmatpush1.bf16.msra.mxu0 0
        %2736 = vmatprep.subr.bf16.mxu0 0
        %2737 = vmatpush1.bf16.msra.mxu0 0
        %2738 = vmatprep.subr.bf16.mxu0 0
        %2739 = vmatpush1.bf16.msra.mxu0 0
        %2740 = vmatprep.subr.bf16.mxu0 0
        %2741 = vmatpush1.bf16.msra.mxu0 0
        %2742 = vmatprep.subr.bf16.mxu0 0
        %2743 = vmatpush1.bf16.msra.mxu0 0
        %2744 = vmatprep.mubr.bf16.mxu0 0
        %2745 = vmatmul.mubr.bf16.gmra.mrb[0].mxu0 %v2707
        %v2746 = vpop.f32.mrb[0].mxu0
        %v2747 = vadd.f32 0.0, %v2746
        %v2748 = vpop.f32.mrb[0].mxu0
        %v2749 = vpop.f32.mrb[0].mxu0
        %v2750 = vpop.f32.mrb[0].mxu0
        %2751 = vdwg.mxu0
        %2752 = vrot.lane.b32.xlu0 %v2528, 64
        %v2753 = vpop.permute.xlu0 %2752
        %2754 = vrot.lane.b32.xlu0 %v2529, 64
        %v2755 = vpop.permute.xlu0 %2754
        %v2757 = vsel %vm948, %v2753, 0
        %v2760 = vsel %vm948, %v2755, 0
        %2762 = vmatprep.subr.bf16.mxu0 0
        %2763 = vmatpush1.bf16.xpose.msra.mxu0 %v2760
        %2764 = vmatprep.subr.bf16.mxu0 0
        %2765 = vmatpush1.bf16.xpose.msra.mxu0 0
        %2766 = vmatprep.subr.bf16.mxu0 0
        %2767 = vmatpush1.bf16.xpose.msra.mxu0 0
        %2768 = vmatprep.subr.bf16.mxu0 0
        %2769 = vmatpush1.bf16.xpose.msra.mxu0 0
        %2770 = vmatprep.subr.bf16.mxu0 0
        %2771 = vmatpush1.bf16.xpose.msra.mxu0 0
        %2772 = vmatprep.subr.bf16.mxu0 0
        %2773 = vmatpush1.bf16.xpose.msra.mxu0 0
        %2774 = vmatprep.subr.bf16.mxu0 0
        %2775 = vmatpush1.bf16.xpose.msra.mxu0 0
        %2776 = vmatprep.subr.bf16.mxu0 0
        %2777 = vmatpush1.bf16.xpose.msra.mxu0 0
        %2778 = vmatprep.subr.bf16.mxu0 0
        %2779 = vmatpush1.bf16.xpose.msra.mxu0 0
        %2780 = vmatprep.subr.bf16.mxu0 0
        %2781 = vmatpush1.bf16.xpose.msra.mxu0 0
        %2782 = vmatprep.subr.bf16.mxu0 0
        %2783 = vmatpush1.bf16.xpose.msra.mxu0 0
        %2784 = vmatprep.subr.bf16.mxu0 0
        %2785 = vmatpush1.bf16.xpose.msra.mxu0 0
        %2786 = vmatprep.subr.bf16.mxu0 0
        %2787 = vmatpush1.bf16.xpose.msra.mxu0 0
        %2788 = vmatprep.subr.bf16.mxu0 0
        %2789 = vmatpush1.bf16.xpose.msra.mxu0 0
        %2790 = vmatprep.subr.bf16.mxu0 0
        %2791 = vmatpush1.bf16.xpose.msra.mxu0 0
        %2792 = vmatprep.subr.bf16.mxu0 0
        %2793 = vmatpush1.bf16.xpose.msra.mxu0 0
        %2794 = vmatprep.mubr.bf16.mxu0 0
        %2795 = vmatmul.mubr.bf16.gmra.mrb[0].mxu0 %v2757
        %v2796 = vpop.f32.mrb[0].mxu0
        %v2797 = vadd.f32 0.0, %v2796
        %v2798 = vpop.f32.mrb[0].mxu0
        %v2799 = vpop.f32.mrb[0].mxu0
        %v2800 = vpop.f32.mrb[0].mxu0
        %2801 = vdwg.mxu0
        %v2802 = vmul.f32 %v2797, 0.17677669
        %v2803 = vadd.f32 %v2802, %v1000
        %v2804 = vsel %vm1003, %v2803, -inf
        %2805 = vmax.xlane.f32.xlu0 %v2804
        %v2806 = vpop.xlane.xlu0 %2805
        %v2807 = vsub.f32 %v2803, %v2806
        %v2808 = vmul.f32 %v2807, 1.442695
        %v2809 = vpow.pop %v2808
        %v2810 = vsel %vm1003, %v2809, 0.0
        %2811 = vadd.xlane.f32.xlu0 %v2810
        %v2812 = vpop.xlane.xlu0 %2811
        %v2813 = vrcp.pop %v2812
        %v2814 = vmul.f32 %v2809, %v2813
        %v2815 = vpack.c.bf16 %v2814, %v2814
        %2816 = vrot.lane.b32.xlu0 %v2530, 64
        %v2817 = vpop.permute.xlu0 %2816
        %v2819 = vsel %vm1003, %v2815, 0
        %v2822 = vsel %vm1019, %v2817, 0
        %2824 = vmatprep.subr.bf16.mxu0 0
        %2825 = vmatpush1.bf16.msra.mxu0 %v2822
        %2826 = vmatprep.subr.bf16.mxu0 0
        %2827 = vmatpush1.bf16.msra.mxu0 0
        %2828 = vmatprep.subr.bf16.mxu0 0
        %2829 = vmatpush1.bf16.msra.mxu0 0
        %2830 = vmatprep.subr.bf16.mxu0 0
        %2831 = vmatpush1.bf16.msra.mxu0 0
        %2832 = vmatprep.subr.bf16.mxu0 0
        %2833 = vmatpush1.bf16.msra.mxu0 0
        %2834 = vmatprep.subr.bf16.mxu0 0
        %2835 = vmatpush1.bf16.msra.mxu0 0
        %2836 = vmatprep.subr.bf16.mxu0 0
        %2837 = vmatpush1.bf16.msra.mxu0 0
        %2838 = vmatprep.subr.bf16.mxu0 0
        %2839 = vmatpush1.bf16.msra.mxu0 0
        %2840 = vmatprep.subr.bf16.mxu0 0
        %2841 = vmatpush1.bf16.msra.mxu0 0
        %2842 = vmatprep.subr.bf16.mxu0 0
        %2843 = vmatpush1.bf16.msra.mxu0 0
        %2844 = vmatprep.subr.bf16.mxu0 0
        %2845 = vmatpush1.bf16.msra.mxu0 0
        %2846 = vmatprep.subr.bf16.mxu0 0
        %2847 = vmatpush1.bf16.msra.mxu0 0
        %2848 = vmatprep.subr.bf16.mxu0 0
        %2849 = vmatpush1.bf16.msra.mxu0 0
        %2850 = vmatprep.subr.bf16.mxu0 0
        %2851 = vmatpush1.bf16.msra.mxu0 0
        %2852 = vmatprep.subr.bf16.mxu0 0
        %2853 = vmatpush1.bf16.msra.mxu0 0
        %2854 = vmatprep.subr.bf16.mxu0 0
        %2855 = vmatpush1.bf16.msra.mxu0 0
        %2856 = vmatprep.mubr.bf16.mxu0 0
        %2857 = vmatmul.mubr.bf16.gmra.mrb[0].mxu0 %v2819
        %v2858 = vpop.f32.mrb[0].mxu0
        %v2859 = vadd.f32 0.0, %v2858
        %v2860 = vpop.f32.mrb[0].mxu0
        %v2861 = vpop.f32.mrb[0].mxu0
        %v2862 = vpop.f32.mrb[0].mxu0
        %2863 = vdwg.mxu0
        %2864 = vrot.lane.b32.xlu0 %v2528, 32
        %v2865 = vpop.permute.xlu0 %2864
        %2866 = vrot.lane.b32.xlu0 %v2529, 32
        %v2867 = vpop.permute.xlu0 %2866
        %v2869 = vsel %vm948, %v2865, 0
        %v2872 = vsel %vm948, %v2867, 0
        %2874 = vmatprep.subr.bf16.mxu0 0
        %2875 = vmatpush1.bf16.xpose.msra.mxu0 %v2872
        %2876 = vmatprep.subr.bf16.mxu0 0
        %2877 = vmatpush1.bf16.xpose.msra.mxu0 0
        %2878 = vmatprep.subr.bf16.mxu0 0
        %2879 = vmatpush1.bf16.xpose.msra.mxu0 0
        %2880 = vmatprep.subr.bf16.mxu0 0
        %2881 = vmatpush1.bf16.xpose.msra.mxu0 0
        %2882 = vmatprep.subr.bf16.mxu0 0
        %2883 = vmatpush1.bf16.xpose.msra.mxu0 0
        %2884 = vmatprep.subr.bf16.mxu0 0
        %2885 = vmatpush1.bf16.xpose.msra.mxu0 0
        %2886 = vmatprep.subr.bf16.mxu0 0
        %2887 = vmatpush1.bf16.xpose.msra.mxu0 0
        %2888 = vmatprep.subr.bf16.mxu0 0
        %2889 = vmatpush1.bf16.xpose.msra.mxu0 0
        %2890 = vmatprep.subr.bf16.mxu0 0
        %2891 = vmatpush1.bf16.xpose.msra.mxu0 0
        %2892 = vmatprep.subr.bf16.mxu0 0
        %2893 = vmatpush1.bf16.xpose.msra.mxu0 0
        %2894 = vmatprep.subr.bf16.mxu0 0
        %2895 = vmatpush1.bf16.xpose.msra.mxu0 0
        %2896 = vmatprep.subr.bf16.mxu0 0
        %2897 = vmatpush1.bf16.xpose.msra.mxu0 0
        %2898 = vmatprep.subr.bf16.mxu0 0
        %2899 = vmatpush1.bf16.xpose.msra.mxu0 0
        %2900 = vmatprep.subr.bf16.mxu0 0
        %2901 = vmatpush1.bf16.xpose.msra.mxu0 0
        %2902 = vmatprep.subr.bf16.mxu0 0
        %2903 = vmatpush1.bf16.xpose.msra.mxu0 0
        %2904 = vmatprep.subr.bf16.mxu0 0
        %2905 = vmatpush1.bf16.xpose.msra.mxu0 0
        %2906 = vmatprep.mubr.bf16.mxu0 0
        %2907 = vmatmul.mubr.bf16.gmra.mrb[0].mxu0 %v2869
        %v2908 = vpop.f32.mrb[0].mxu0
        %v2909 = vadd.f32 0.0, %v2908
        %v2910 = vpop.f32.mrb[0].mxu0
        %v2911 = vpop.f32.mrb[0].mxu0
        %v2912 = vpop.f32.mrb[0].mxu0
        %2913 = vdwg.mxu0
        %v2914 = vmul.f32 %v2909, 0.17677669
        %v2915 = vadd.f32 %v2914, %v1000
        %v2916 = vsel %vm1003, %v2915, -inf
        %2917 = vmax.xlane.f32.xlu0 %v2916
        %v2918 = vpop.xlane.xlu0 %2917
        %v2919 = vsub.f32 %v2915, %v2918
        %v2920 = vmul.f32 %v2919, 1.442695
        %v2921 = vpow.pop %v2920
        %v2922 = vsel %vm1003, %v2921, 0.0
        %2923 = vadd.xlane.f32.xlu0 %v2922
        %v2924 = vpop.xlane.xlu0 %2923
        %v2925 = vrcp.pop %v2924
        %v2926 = vmul.f32 %v2921, %v2925
        %v2927 = vpack.c.bf16 %v2926, %v2926
        %2928 = vrot.lane.b32.xlu0 %v2530, 32
        %v2929 = vpop.permute.xlu0 %2928
        %v2931 = vsel %vm1003, %v2927, 0
        %v2934 = vsel %vm1019, %v2929, 0
        %2936 = vmatprep.subr.bf16.mxu0 0
        %2937 = vmatpush1.bf16.msra.mxu0 %v2934
        %2938 = vmatprep.subr.bf16.mxu0 0
        %2939 = vmatpush1.bf16.msra.mxu0 0
        %2940 = vmatprep.subr.bf16.mxu0 0
        %2941 = vmatpush1.bf16.msra.mxu0 0
        %2942 = vmatprep.subr.bf16.mxu0 0
        %2943 = vmatpush1.bf16.msra.mxu0 0
        %2944 = vmatprep.subr.bf16.mxu0 0
        %2945 = vmatpush1.bf16.msra.mxu0 0
        %2946 = vmatprep.subr.bf16.mxu0 0
        %2947 = vmatpush1.bf16.msra.mxu0 0
        %2948 = vmatprep.subr.bf16.mxu0 0
        %2949 = vmatpush1.bf16.msra.mxu0 0
        %2950 = vmatprep.subr.bf16.mxu0 0
        %2951 = vmatpush1.bf16.msra.mxu0 0
        %2952 = vmatprep.subr.bf16.mxu0 0
        %2953 = vmatpush1.bf16.msra.mxu0 0
        %2954 = vmatprep.subr.bf16.mxu0 0
        %2955 = vmatpush1.bf16.msra.mxu0 0
        %2956 = vmatprep.subr.bf16.mxu0 0
        %2957 = vmatpush1.bf16.msra.mxu0 0
        %2958 = vmatprep.subr.bf16.mxu0 0
        %2959 = vmatpush1.bf16.msra.mxu0 0
        %2960 = vmatprep.subr.bf16.mxu0 0
        %2961 = vmatpush1.bf16.msra.mxu0 0
        %2962 = vmatprep.subr.bf16.mxu0 0
        %2963 = vmatpush1.bf16.msra.mxu0 0
        %2964 = vmatprep.subr.bf16.mxu0 0
        %2965 = vmatpush1.bf16.msra.mxu0 0
        %2966 = vmatprep.subr.bf16.mxu0 0
        %2967 = vmatpush1.bf16.msra.mxu0 0
        %2968 = vmatprep.mubr.bf16.mxu0 0
        %2969 = vmatmul.mubr.bf16.gmra.mrb[0].mxu0 %v2931
        %v2970 = vpop.f32.mrb[0].mxu0
        %v2971 = vadd.f32 0.0, %v2970
        %v2972 = vpop.f32.mrb[0].mxu0
        %v2973 = vpop.f32.mrb[0].mxu0
        %v2974 = vpop.f32.mrb[0].mxu0
        %2975 = vdwg.mxu0
        %2977 = vrot.lane.b32.xlu0 %v2747, 32
        %v2978 = vpop.permute.xlu0 %2977
        %2981 = vrot.lane.b32.xlu0 %v2859, 64
        %v2982 = vpop.permute.xlu0 %2981
        %2985 = vrot.lane.b32.xlu0 %v2971, 96
        %v2986 = vpop.permute.xlu0 %2985
        %v2988 = vsel %vm948, %v2632, %v2978
        %v2989 = vsel %vm1415, %v2988, %v2982
        %v2990 = vsel %vm1417, %v2989, %v2986
        %v2991 = vpack.c.bf16 %v2990, %v2990
        %s2992 = scalar_lea.vmem [#allocation11], 64
        %v2993 = vld [vmem:[%s2992] sm:$0xf]
        %v2994 = vld [vmem:[%s2992 + $0x4] sm:$0xf]
        %v2995 = vld [vmem:[%s2992 + $0x8] sm:$0xf]
        %v2996 = vld [vmem:[%s2992 + $0xc] sm:$0xf]
        %v2997 = vld [vmem:[%s2992 + $0x10] sm:$0xf]
        %v2998 = vld [vmem:[%s2992 + $0x14] sm:$0xf]
        %v2999 = vld [vmem:[%s2992 + $0x18] sm:$0xf]
        %v3000 = vld [vmem:[%s2992 + $0x1c] sm:$0xf]
        %v3001 = vld [vmem:[%s2992 + $0x20] sm:$0xf]
        %v3002 = vld [vmem:[%s2992 + $0x24] sm:$0xf]
        %v3003 = vld [vmem:[%s2992 + $0x28] sm:$0xf]
        %v3004 = vld [vmem:[%s2992 + $0x2c] sm:$0xf]
        %v3005 = vld [vmem:[%s2992 + $0x30] sm:$0xf]
        %v3006 = vld [vmem:[%s2992 + $0x34] sm:$0xf]
        %v3007 = vld [vmem:[%s2992 + $0x38] sm:$0xf]
        %v3008 = vld [vmem:[%s2992 + $0x3c] sm:$0xf]
        %s3009 = scalar_lea.vmem %s7, 1
        %v3010 = vld [vmem:[%s3009] sm:$0x1]
        %v3012 = vlaneseq
        %v3013 = vshrl.u32 %v3012, 7
        %v3014 = vsub.s32 0, %v3013
        %v3015 = vrot.slane %v3010, %v3014
        %v3033 = vunpack.c.l.b16 %v2993
        %v3034 = vunpack.c.l.b16 %v2994
        %v3035 = vunpack.c.l.b16 %v2995
        %v3036 = vunpack.c.l.b16 %v2996
        %v3037 = vunpack.c.l.b16 %v2997
        %v3038 = vunpack.c.l.b16 %v2998
        %v3039 = vunpack.c.l.b16 %v2999
        %v3040 = vunpack.c.l.b16 %v3000
        %v3041 = vunpack.c.l.b16 %v3001
        %v3042 = vunpack.c.l.b16 %v3002
        %v3043 = vunpack.c.l.b16 %v3003
        %v3044 = vunpack.c.l.b16 %v3004
        %v3045 = vunpack.c.l.b16 %v3005
        %v3046 = vunpack.c.l.b16 %v3006
        %v3047 = vunpack.c.l.b16 %v3007
        %v3048 = vunpack.c.l.b16 %v3008
        %v3049 = vpack.c.b16 %v3034, %v3033
        %v3050 = vpack.c.b16 %v3036, %v3035
        %v3051 = vpack.c.b16 %v3038, %v3037
        %v3052 = vpack.c.b16 %v3040, %v3039
        %v3053 = vpack.c.b16 %v3042, %v3041
        %v3054 = vpack.c.b16 %v3044, %v3043
        %v3055 = vpack.c.b16 %v3046, %v3045
        %v3056 = vpack.c.b16 %v3048, %v3047
        %3065 = vmatprep.subr.bf16.mxu0 0
        %3066 = vmatpush1.bf16.msra.mxu0 %v3049
        %3067 = vmatprep.subr.bf16.mxu0 0
        %3068 = vmatpush1.bf16.msra.mxu0 %v3050
        %3069 = vmatprep.subr.bf16.mxu0 0
        %3070 = vmatpush1.bf16.msra.mxu0 %v3051
        %3071 = vmatprep.subr.bf16.mxu0 0
        %3072 = vmatpush1.bf16.msra.mxu0 %v3052
        %3073 = vmatprep.subr.bf16.mxu0 0
        %3074 = vmatpush1.bf16.msra.mxu0 %v3053
        %3075 = vmatprep.subr.bf16.mxu0 0
        %3076 = vmatpush1.bf16.msra.mxu0 %v3054
        %3077 = vmatprep.subr.bf16.mxu0 0
        %3078 = vmatpush1.bf16.msra.mxu0 %v3055
        %3079 = vmatprep.subr.bf16.mxu0 0
        %3080 = vmatpush1.bf16.msra.mxu0 %v3056
        %3081 = vmatprep.subr.bf16.mxu0 0
        %3082 = vmatpush1.bf16.msra.mxu0 0
        %3083 = vmatprep.subr.bf16.mxu0 0
        %3084 = vmatpush1.bf16.msra.mxu0 0
        %3085 = vmatprep.subr.bf16.mxu0 0
        %3086 = vmatpush1.bf16.msra.mxu0 0
        %3087 = vmatprep.subr.bf16.mxu0 0
        %3088 = vmatpush1.bf16.msra.mxu0 0
        %3089 = vmatprep.subr.bf16.mxu0 0
        %3090 = vmatpush1.bf16.msra.mxu0 0
        %3091 = vmatprep.subr.bf16.mxu0 0
        %3092 = vmatpush1.bf16.msra.mxu0 0
        %3093 = vmatprep.subr.bf16.mxu0 0
        %3094 = vmatpush1.bf16.msra.mxu0 0
        %3095 = vmatprep.subr.bf16.mxu0 0
        %3096 = vmatpush1.bf16.msra.mxu0 0
        %3097 = vmatprep.mubr.bf16.mxu0 0
        %3098 = vmatmul.mubr.bf16.gmra.mrb[0].mxu0 %v2991
        %v3099 = vpop.f32.mrb[0].mxu0
        %v3100 = vadd.f32 %v3015, %v3099
        %v3101 = vpop.f32.mrb[0].mxu0
        %v3102 = vpop.f32.mrb[0].mxu0
        %v3103 = vpop.f32.mrb[0].mxu0
        %3104 = vdwg.mxu0
        %v3105 = vadd.f32 %v2266, %v3100
        %s3106 = scalar_lea.vmem %s8, 1
        %v3107 = vld [vmem:[%s3106] sm:$0x1]
        %s3108 = scalar_lea.vmem %s9, 1
        %v3109 = vld [vmem:[%s3108] sm:$0x1]
        %3110 = vadd.xlane.f32.xlu0 %v3105
        %v3111 = vpop.xlane.xlu0 %3110
        %v3112 = vmul.f32 %v3111, %v659
        %v3113 = vsub.f32 %v3105, %v3112
        %v3114 = vmul.f32 %v3113, %v3113
        %3115 = vadd.xlane.f32.xlu0 %v3114
        %v3116 = vpop.xlane.xlu0 %3115
        %v3117 = vmul.f32 %v3116, %v659
        %v3118 = vadd.f32 %v3117, 1e-12
        %v3119 = vrsqrt.pop %v3118
        %v3120 = vmul.f32 %v3113, %v3119
        %v3122 = vlaneseq
        %v3123 = vshrl.u32 %v3122, 7
        %v3124 = vsub.s32 0, %v3123
        %v3125 = vrot.slane %v3107, %v3124
        %v3127 = vmul.f32 %v3120, %v3125
        %v3129 = vlaneseq
        %v3130 = vshrl.u32 %v3129, 7
        %v3131 = vsub.s32 0, %v3130
        %v3132 = vrot.slane %v3109, %v3131
        %v3134 = vadd.f32 %v3127, %v3132
        %v3135 = vpack.c.bf16 %v3134, %v3134
        %s3136 = scalar_lea.vmem [#allocation13], 256
        %v3137 = vld [vmem:[%s3136] sm:$0xff]
        %v3138 = vld [vmem:[%s3136 + $0x8] sm:$0xff]
        %v3139 = vld [vmem:[%s3136 + $0x10] sm:$0xff]
        %v3140 = vld [vmem:[%s3136 + $0x18] sm:$0xff]
        %v3141 = vld [vmem:[%s3136 + $0x20] sm:$0xff]
        %v3142 = vld [vmem:[%s3136 + $0x28] sm:$0xff]
        %v3143 = vld [vmem:[%s3136 + $0x30] sm:$0xff]
        %v3144 = vld [vmem:[%s3136 + $0x38] sm:$0xff]
        %v3145 = vld [vmem:[%s3136 + $0x40] sm:$0xff]
        %v3146 = vld [vmem:[%s3136 + $0x48] sm:$0xff]
        %v3147 = vld [vmem:[%s3136 + $0x50] sm:$0xff]
        %v3148 = vld [vmem:[%s3136 + $0x58] sm:$0xff]
        %v3149 = vld [vmem:[%s3136 + $0x60] sm:$0xff]
        %v3150 = vld [vmem:[%s3136 + $0x68] sm:$0xff]
        %v3151 = vld [vmem:[%s3136 + $0x70] sm:$0xff]
        %v3152 = vld [vmem:[%s3136 + $0x78] sm:$0xff]
        %v3153 = vld [vmem:[%s3136 + $0x80] sm:$0xff]
        %v3154 = vld [vmem:[%s3136 + $0x88] sm:$0xff]
        %v3155 = vld [vmem:[%s3136 + $0x90] sm:$0xff]
        %v3156 = vld [vmem:[%s3136 + $0x98] sm:$0xff]
        %v3157 = vld [vmem:[%s3136 + $0xa0] sm:$0xff]
        %v3158 = vld [vmem:[%s3136 + $0xa8] sm:$0xff]
        %v3159 = vld [vmem:[%s3136 + $0xb0] sm:$0xff]
        %v3160 = vld [vmem:[%s3136 + $0xb8] sm:$0xff]
        %v3161 = vld [vmem:[%s3136 + $0xc0] sm:$0xff]
        %v3162 = vld [vmem:[%s3136 + $0xc8] sm:$0xff]
        %v3163 = vld [vmem:[%s3136 + $0xd0] sm:$0xff]
        %v3164 = vld [vmem:[%s3136 + $0xd8] sm:$0xff]
        %v3165 = vld [vmem:[%s3136 + $0xe0] sm:$0xff]
        %v3166 = vld [vmem:[%s3136 + $0xe8] sm:$0xff]
        %v3167 = vld [vmem:[%s3136 + $0xf0] sm:$0xff]
        %v3168 = vld [vmem:[%s3136 + $0xf8] sm:$0xff]
        %s3169 = scalar_lea.vmem %s11, 4
        %v3170 = vld [vmem:[%s3169] sm:$0xf]
        %v3172 = vlaneseq
        %v3173 = vshrl.u32 %v3172, 7
        %v3174 = vsub.s32 0, %v3173
        %v3175 = vrot.slane %v3170, %v3174
        %v3176 = vlaneseq
        %v3177 = vshrl.u32 %v3176, 7
        %v3178 = vsub.s32 1, %v3177
        %v3179 = vrot.slane %v3170, %v3178
        %v3180 = vlaneseq
        %v3181 = vshrl.u32 %v3180, 7
        %v3182 = vsub.s32 2, %v3181
        %v3183 = vrot.slane %v3170, %v3182
        %v3184 = vlaneseq
        %v3185 = vshrl.u32 %v3184, 7
        %v3186 = vsub.s32 3, %v3185
        %v3187 = vrot.slane %v3170, %v3186
        %v3224 = vunpack.c.l.b16 %v3137
        %v3225 = vunpack.c.h.b16 %v3137
        %v3226 = vunpack.c.l.b16 %v3138
        %v3227 = vunpack.c.h.b16 %v3138
        %v3228 = vunpack.c.l.b16 %v3139
        %v3229 = vunpack.c.h.b16 %v3139
        %v3230 = vunpack.c.l.b16 %v3140
        %v3231 = vunpack.c.h.b16 %v3140
        %v3232 = vunpack.c.l.b16 %v3141
        %v3233 = vunpack.c.h.b16 %v3141
        %v3234 = vunpack.c.l.b16 %v3142
        %v3235 = vunpack.c.h.b16 %v3142
        %v3236 = vunpack.c.l.b16 %v3143
        %v3237 = vunpack.c.h.b16 %v3143
        %v3238 = vunpack.c.l.b16 %v3144
        %v3239 = vunpack.c.h.b16 %v3144
        %v3240 = vunpack.c.l.b16 %v3145
        %v3241 = vunpack.c.h.b16 %v3145
        %v3242 = vunpack.c.l.b16 %v3146
        %v3243 = vunpack.c.h.b16 %v3146
        %v3244 = vunpack.c.l.b16 %v3147
        %v3245 = vunpack.c.h.b16 %v3147
        %v3246 = vunpack.c.l.b16 %v3148
        %v3247 = vunpack.c.h.b16 %v3148
        %v3248 = vunpack.c.l.b16 %v3149
        %v3249 = vunpack.c.h.b16 %v3149
        %v3250 = vunpack.c.l.b16 %v3150
        %v3251 = vunpack.c.h.b16 %v3150
        %v3252 = vunpack.c.l.b16 %v3151
        %v3253 = vunpack.c.h.b16 %v3151
        %v3254 = vunpack.c.l.b16 %v3152
        %v3255 = vunpack.c.h.b16 %v3152
        %v3256 = vunpack.c.l.b16 %v3153
        %v3257 = vunpack.c.h.b16 %v3153
        %v3258 = vunpack.c.l.b16 %v3154
        %v3259 = vunpack.c.h.b16 %v3154
        %v3260 = vunpack.c.l.b16 %v3155
        %v3261 = vunpack.c.h.b16 %v3155
        %v3262 = vunpack.c.l.b16 %v3156
        %v3263 = vunpack.c.h.b16 %v3156
        %v3264 = vunpack.c.l.b16 %v3157
        %v3265 = vunpack.c.h.b16 %v3157
        %v3266 = vunpack.c.l.b16 %v3158
        %v3267 = vunpack.c.h.b16 %v3158
        %v3268 = vunpack.c.l.b16 %v3159
        %v3269 = vunpack.c.h.b16 %v3159
        %v3270 = vunpack.c.l.b16 %v3160
        %v3271 = vunpack.c.h.b16 %v3160
        %v3272 = vunpack.c.l.b16 %v3161
        %v3273 = vunpack.c.h.b16 %v3161
        %v3274 = vunpack.c.l.b16 %v3162
        %v3275 = vunpack.c.h.b16 %v3162
        %v3276 = vunpack.c.l.b16 %v3163
        %v3277 = vunpack.c.h.b16 %v3163
        %v3278 = vunpack.c.l.b16 %v3164
        %v3279 = vunpack.c.h.b16 %v3164
        %v3280 = vunpack.c.l.b16 %v3165
        %v3281 = vunpack.c.h.b16 %v3165
        %v3282 = vunpack.c.l.b16 %v3166
        %v3283 = vunpack.c.h.b16 %v3166
        %v3284 = vunpack.c.l.b16 %v3167
        %v3285 = vunpack.c.h.b16 %v3167
        %v3286 = vunpack.c.l.b16 %v3168
        %v3287 = vunpack.c.h.b16 %v3168
        %v3288 = vpack.c.b16 %v3228, %v3224
        %v3289 = vpack.c.b16 %v3229, %v3225
        %v3290 = vpack.c.b16 %v3230, %v3226
        %v3291 = vpack.c.b16 %v3231, %v3227
        %v3292 = vpack.c.b16 %v3236, %v3232
        %v3293 = vpack.c.b16 %v3237, %v3233
        %v3294 = vpack.c.b16 %v3238, %v3234
        %v3295 = vpack.c.b16 %v3239, %v3235
        %v3296 = vpack.c.b16 %v3244, %v3240
        %v3297 = vpack.c.b16 %v3245, %v3241
        %v3298 = vpack.c.b16 %v3246, %v3242
        %v3299 = vpack.c.b16 %v3247, %v3243
        %v3300 = vpack.c.b16 %v3252, %v3248
        %v3301 = vpack.c.b16 %v3253, %v3249
        %v3302 = vpack.c.b16 %v3254, %v3250
        %v3303 = vpack.c.b16 %v3255, %v3251
        %v3304 = vpack.c.b16 %v3260, %v3256
        %v3305 = vpack.c.b16 %v3261, %v3257
        %v3306 = vpack.c.b16 %v3262, %v3258
        %v3307 = vpack.c.b16 %v3263, %v3259
        %v3308 = vpack.c.b16 %v3268, %v3264
        %v3309 = vpack.c.b16 %v3269, %v3265
        %v3310 = vpack.c.b16 %v3270, %v3266
        %v3311 = vpack.c.b16 %v3271, %v3267
        %v3312 = vpack.c.b16 %v3276, %v3272
        %v3313 = vpack.c.b16 %v3277, %v3273
        %v3314 = vpack.c.b16 %v3278, %v3274
        %v3315 = vpack.c.b16 %v3279, %v3275
        %v3316 = vpack.c.b16 %v3284, %v3280
        %v3317 = vpack.c.b16 %v3285, %v3281
        %v3318 = vpack.c.b16 %v3286, %v3282
        %v3319 = vpack.c.b16 %v3287, %v3283
        %3352 = vmatprep.subr.bf16.mxu0 %v3289
        %3353 = vmatpush1.bf16.msra.mxu0 %v3288
        %3354 = vmatprep.subr.bf16.mxu0 %v3293
        %3355 = vmatpush1.bf16.msra.mxu0 %v3292
        %3356 = vmatprep.subr.bf16.mxu0 %v3297
        %3357 = vmatpush1.bf16.msra.mxu0 %v3296
        %3358 = vmatprep.subr.bf16.mxu0 %v3301
        %3359 = vmatpush1.bf16.msra.mxu0 %v3300
        %3360 = vmatprep.subr.bf16.mxu0 %v3305
        %3361 = vmatpush1.bf16.msra.mxu0 %v3304
        %3362 = vmatprep.subr.bf16.mxu0 %v3309
        %3363 = vmatpush1.bf16.msra.mxu0 %v3308
        %3364 = vmatprep.subr.bf16.mxu0 %v3313
        %3365 = vmatpush1.bf16.msra.mxu0 %v3312
        %3366 = vmatprep.subr.bf16.mxu0 %v3317
        %3367 = vmatpush1.bf16.msra.mxu0 %v3316
        %3368 = vmatprep.subr.bf16.mxu0 0
        %3369 = vmatpush1.bf16.msra.mxu0 0
        %3370 = vmatprep.subr.bf16.mxu0 0
        %3371 = vmatpush1.bf16.msra.mxu0 0
        %3372 = vmatprep.subr.bf16.mxu0 0
        %3373 = vmatpush1.bf16.msra.mxu0 0
        %3374 = vmatprep.subr.bf16.mxu0 0
        %3375 = vmatpush1.bf16.msra.mxu0 0
        %3376 = vmatprep.subr.bf16.mxu0 0
        %3377 = vmatpush1.bf16.msra.mxu0 0
        %3378 = vmatprep.subr.bf16.mxu0 0
        %3379 = vmatpush1.bf16.msra.mxu0 0
        %3380 = vmatprep.subr.bf16.mxu0 0
        %3381 = vmatpush1.bf16.msra.mxu0 0
        %3382 = vmatprep.subr.bf16.mxu0 0
        %3383 = vmatpush1.bf16.msra.mxu0 0
        %3384 = vmatprep.mubr.bf16.mxu0 0
        %3385 = vmatmul.mubr.bf16.gmra.mrb[0].mxu0 %v3135
        %v3386 = vpop.f32.mrb[0].mxu0
        %v3387 = vadd.f32 %v3175, %v3386
        %v3388 = vpop.f32.mrb[0].mxu0
        %v3389 = vadd.f32 %v3179, %v3388
        %v3390 = vpop.f32.mrb[0].mxu0
        %v3391 = vpop.f32.mrb[0].mxu0
        %3392 = vdwg.mxu0
        %3393 = vmatprep.subr.bf16.mxu0 %v3291
        %3394 = vmatpush1.bf16.msra.mxu0 %v3290
        %3395 = vmatprep.subr.bf16.mxu0 %v3295
        %3396 = vmatpush1.bf16.msra.mxu0 %v3294
        %3397 = vmatprep.subr.bf16.mxu0 %v3299
        %3398 = vmatpush1.bf16.msra.mxu0 %v3298
        %3399 = vmatprep.subr.bf16.mxu0 %v3303
        %3400 = vmatpush1.bf16.msra.mxu0 %v3302
        %3401 = vmatprep.subr.bf16.mxu0 %v3307
        %3402 = vmatpush1.bf16.msra.mxu0 %v3306
        %3403 = vmatprep.subr.bf16.mxu0 %v3311
        %3404 = vmatpush1.bf16.msra.mxu0 %v3310
        %3405 = vmatprep.subr.bf16.mxu0 %v3315
        %3406 = vmatpush1.bf16.msra.mxu0 %v3314
        %3407 = vmatprep.subr.bf16.mxu0 %v3319
        %3408 = vmatpush1.bf16.msra.mxu0 %v3318
        %3409 = vmatprep.subr.bf16.mxu0 0
        %3410 = vmatpush1.bf16.msra.mxu0 0
        %3411 = vmatprep.subr.bf16.mxu0 0
        %3412 = vmatpush1.bf16.msra.mxu0 0
        %3413 = vmatprep.subr.bf16.mxu0 0
        %3414 = vmatpush1.bf16.msra.mxu0 0
        %3415 = vmatprep.subr.bf16.mxu0 0
        %3416 = vmatpush1.bf16.msra.mxu0 0
        %3417 = vmatprep.subr.bf16.mxu0 0
        %3418 = vmatpush1.bf16.msra.mxu0 0
        %3419 = vmatprep.subr.bf16.mxu0 0
        %3420 = vmatpush1.bf16.msra.mxu0 0
        %3421 = vmatprep.subr.bf16.mxu0 0
        %3422 = vmatpush1.bf16.msra.mxu0 0
        %3423 = vmatprep.subr.bf16.mxu0 0
        %3424 = vmatpush1.bf16.msra.mxu0 0
        %3425 = vmatprep.mubr.bf16.mxu0 0
        %3426 = vmatmul.mubr.bf16.gmra.mrb[0].mxu0 %v3135
        %v3427 = vpop.f32.mrb[0].mxu0
        %v3428 = vadd.f32 %v3183, %v3427
        %v3429 = vpop.f32.mrb[0].mxu0
        %v3430 = vadd.f32 %v3187, %v3429
        %v3431 = vpop.f32.mrb[0].mxu0
        %v3432 = vpop.f32.mrb[0].mxu0
        %3433 = vdwg.mxu0
        %v3434 = vmul.f32 %v3387, 0.5
        %v3435 = vmul.f32 %v3389, 0.5
        %v3436 = vmul.f32 %v3428, 0.5
        %v3437 = vmul.f32 %v3430, 0.5
        %v3438 = vmul.f32 %v3387, 0.044715
        %v3439 = vmul.f32 %v3389, 0.044715
        %v3440 = vmul.f32 %v3428, 0.044715
        %v3441 = vmul.f32 %v3430, 0.044715
        %v3442 = vmul.f32 %v3438, %v3387
        %v3443 = vmul.f32 %v3439, %v3389
        %v3444 = vmul.f32 %v3440, %v3428
        %v3445 = vmul.f32 %v3441, %v3430
        %v3446 = vmul.f32 %v3442, %v3387
        %v3447 = vmul.f32 %v3443, %v3389
        %v3448 = vmul.f32 %v3444, %v3428
        %v3449 = vmul.f32 %v3445, %v3430
        %v3450 = vadd.f32 %v3387, %v3446
        %v3451 = vadd.f32 %v3389, %v3447
        %v3452 = vadd.f32 %v3428, %v3448
        %v3453 = vadd.f32 %v3430, %v3449
        %v3454 = vmul.f32 %v3450, 0.7978846
        %v3455 = vmul.f32 %v3451, 0.7978846
        %v3456 = vmul.f32 %v3452, 0.7978846
        %v3457 = vmul.f32 %v3453, 0.7978846
        %v3458 = vtanh.pop %v3454
        %v3459 = vtanh.pop %v3455
        %v3460 = vtanh.pop %v3456
        %v3461 = vtanh.pop %v3457
        %v3462 = vadd.f32 %v3458, 1.0
        %v3463 = vadd.f32 %v3459, 1.0
        %v3464 = vadd.f32 %v3460, 1.0
        %v3465 = vadd.f32 %v3461, 1.0
        %v3466 = vmul.f32 %v3434, %v3462
        %v3467 = vmul.f32 %v3435, %v3463
        %v3468 = vmul.f32 %v3436, %v3464
        %v3469 = vmul.f32 %v3437, %v3465
        %v3470 = vpack.c.bf16 %v3466, %v3466
        %v3471 = vpack.c.bf16 %v3467, %v3467
        %v3472 = vpack.c.bf16 %v3468, %v3468
        %v3473 = vpack.c.bf16 %v3469, %v3469
        %s3474 = scalar_lea.vmem [#allocation14], 256
        %v3475 = vld [vmem:[%s3474] sm:$0xf]
        %v3476 = vld [vmem:[%s3474 + $0x4] sm:$0xf]
        %v3477 = vld [vmem:[%s3474 + $0x8] sm:$0xf]
        %v3478 = vld [vmem:[%s3474 + $0xc] sm:$0xf]
        %v3479 = vld [vmem:[%s3474 + $0x10] sm:$0xf]
        %v3480 = vld [vmem:[%s3474 + $0x14] sm:$0xf]
        %v3481 = vld [vmem:[%s3474 + $0x18] sm:$0xf]
        %v3482 = vld [vmem:[%s3474 + $0x1c] sm:$0xf]
        %v3483 = vld [vmem:[%s3474 + $0x20] sm:$0xf]
        %v3484 = vld [vmem:[%s3474 + $0x24] sm:$0xf]
        %v3485 = vld [vmem:[%s3474 + $0x28] sm:$0xf]
        %v3486 = vld [vmem:[%s3474 + $0x2c] sm:$0xf]
        %v3487 = vld [vmem:[%s3474 + $0x30] sm:$0xf]
        %v3488 = vld [vmem:[%s3474 + $0x34] sm:$0xf]
        %v3489 = vld [vmem:[%s3474 + $0x38] sm:$0xf]
        %v3490 = vld [vmem:[%s3474 + $0x3c] sm:$0xf]
        %v3491 = vld [vmem:[%s3474 + $0x40] sm:$0xf]
        %v3492 = vld [vmem:[%s3474 + $0x44] sm:$0xf]
        %v3493 = vld [vmem:[%s3474 + $0x48] sm:$0xf]
        %v3494 = vld [vmem:[%s3474 + $0x4c] sm:$0xf]
        %v3495 = vld [vmem:[%s3474 + $0x50] sm:$0xf]
        %v3496 = vld [vmem:[%s3474 + $0x54] sm:$0xf]
        %v3497 = vld [vmem:[%s3474 + $0x58] sm:$0xf]
        %v3498 = vld [vmem:[%s3474 + $0x5c] sm:$0xf]
        %v3499 = vld [vmem:[%s3474 + $0x60] sm:$0xf]
        %v3500 = vld [vmem:[%s3474 + $0x64] sm:$0xf]
        %v3501 = vld [vmem:[%s3474 + $0x68] sm:$0xf]
        %v3502 = vld [vmem:[%s3474 + $0x6c] sm:$0xf]
        %v3503 = vld [vmem:[%s3474 + $0x70] sm:$0xf]
        %v3504 = vld [vmem:[%s3474 + $0x74] sm:$0xf]
        %v3505 = vld [vmem:[%s3474 + $0x78] sm:$0xf]
        %v3506 = vld [vmem:[%s3474 + $0x7c] sm:$0xf]
        %v3507 = vld [vmem:[%s3474 + $0x80] sm:$0xf]
        %v3508 = vld [vmem:[%s3474 + $0x84] sm:$0xf]
        %v3509 = vld [vmem:[%s3474 + $0x88] sm:$0xf]
        %v3510 = vld [vmem:[%s3474 + $0x8c] sm:$0xf]
        %v3511 = vld [vmem:[%s3474 + $0x90] sm:$0xf]
        %v3512 = vld [vmem:[%s3474 + $0x94] sm:$0xf]
        %v3513 = vld [vmem:[%s3474 + $0x98] sm:$0xf]
        %v3514 = vld [vmem:[%s3474 + $0x9c] sm:$0xf]
        %v3515 = vld [vmem:[%s3474 + $0xa0] sm:$0xf]
        %v3516 = vld [vmem:[%s3474 + $0xa4] sm:$0xf]
        %v3517 = vld [vmem:[%s3474 + $0xa8] sm:$0xf]
        %v3518 = vld [vmem:[%s3474 + $0xac] sm:$0xf]
        %v3519 = vld [vmem:[%s3474 + $0xb0] sm:$0xf]
        %v3520 = vld [vmem:[%s3474 + $0xb4] sm:$0xf]
        %v3521 = vld [vmem:[%s3474 + $0xb8] sm:$0xf]
        %v3522 = vld [vmem:[%s3474 + $0xbc] sm:$0xf]
        %v3523 = vld [vmem:[%s3474 + $0xc0] sm:$0xf]
        %v3524 = vld [vmem:[%s3474 + $0xc4] sm:$0xf]
        %v3525 = vld [vmem:[%s3474 + $0xc8] sm:$0xf]
        %v3526 = vld [vmem:[%s3474 + $0xcc] sm:$0xf]
        %v3527 = vld [vmem:[%s3474 + $0xd0] sm:$0xf]
        %v3528 = vld [vmem:[%s3474 + $0xd4] sm:$0xf]
        %v3529 = vld [vmem:[%s3474 + $0xd8] sm:$0xf]
        %v3530 = vld [vmem:[%s3474 + $0xdc] sm:$0xf]
        %v3531 = vld [vmem:[%s3474 + $0xe0] sm:$0xf]
        %v3532 = vld [vmem:[%s3474 + $0xe4] sm:$0xf]
        %v3533 = vld [vmem:[%s3474 + $0xe8] sm:$0xf]
        %v3534 = vld [vmem:[%s3474 + $0xec] sm:$0xf]
        %v3535 = vld [vmem:[%s3474 + $0xf0] sm:$0xf]
        %v3536 = vld [vmem:[%s3474 + $0xf4] sm:$0xf]
        %v3537 = vld [vmem:[%s3474 + $0xf8] sm:$0xf]
        %v3538 = vld [vmem:[%s3474 + $0xfc] sm:$0xf]
        %s3539 = scalar_lea.vmem %s13, 1
        %v3540 = vld [vmem:[%s3539] sm:$0x1]
        %v3542 = vlaneseq
        %v3543 = vshrl.u32 %v3542, 7
        %v3544 = vsub.s32 0, %v3543
        %v3545 = vrot.slane %v3540, %v3544
        %v3611 = vunpack.c.l.b16 %v3475
        %v3612 = vunpack.c.l.b16 %v3476
        %v3613 = vunpack.c.l.b16 %v3477
        %v3614 = vunpack.c.l.b16 %v3478
        %v3615 = vunpack.c.l.b16 %v3479
        %v3616 = vunpack.c.l.b16 %v3480
        %v3617 = vunpack.c.l.b16 %v3481
        %v3618 = vunpack.c.l.b16 %v3482
        %v3619 = vunpack.c.l.b16 %v3483
        %v3620 = vunpack.c.l.b16 %v3484
        %v3621 = vunpack.c.l.b16 %v3485
        %v3622 = vunpack.c.l.b16 %v3486
        %v3623 = vunpack.c.l.b16 %v3487
        %v3624 = vunpack.c.l.b16 %v3488
        %v3625 = vunpack.c.l.b16 %v3489
        %v3626 = vunpack.c.l.b16 %v3490
        %v3627 = vunpack.c.l.b16 %v3491
        %v3628 = vunpack.c.l.b16 %v3492
        %v3629 = vunpack.c.l.b16 %v3493
        %v3630 = vunpack.c.l.b16 %v3494
        %v3631 = vunpack.c.l.b16 %v3495
        %v3632 = vunpack.c.l.b16 %v3496
        %v3633 = vunpack.c.l.b16 %v3497
        %v3634 = vunpack.c.l.b16 %v3498
        %v3635 = vunpack.c.l.b16 %v3499
        %v3636 = vunpack.c.l.b16 %v3500
        %v3637 = vunpack.c.l.b16 %v3501
        %v3638 = vunpack.c.l.b16 %v3502
        %v3639 = vunpack.c.l.b16 %v3503
        %v3640 = vunpack.c.l.b16 %v3504
        %v3641 = vunpack.c.l.b16 %v3505
        %v3642 = vunpack.c.l.b16 %v3506
        %v3643 = vunpack.c.l.b16 %v3507
        %v3644 = vunpack.c.l.b16 %v3508
        %v3645 = vunpack.c.l.b16 %v3509
        %v3646 = vunpack.c.l.b16 %v3510
        %v3647 = vunpack.c.l.b16 %v3511
        %v3648 = vunpack.c.l.b16 %v3512
        %v3649 = vunpack.c.l.b16 %v3513
        %v3650 = vunpack.c.l.b16 %v3514
        %v3651 = vunpack.c.l.b16 %v3515
        %v3652 = vunpack.c.l.b16 %v3516
        %v3653 = vunpack.c.l.b16 %v3517
        %v3654 = vunpack.c.l.b16 %v3518
        %v3655 = vunpack.c.l.b16 %v3519
        %v3656 = vunpack.c.l.b16 %v3520
        %v3657 = vunpack.c.l.b16 %v3521
        %v3658 = vunpack.c.l.b16 %v3522
        %v3659 = vunpack.c.l.b16 %v3523
        %v3660 = vunpack.c.l.b16 %v3524
        %v3661 = vunpack.c.l.b16 %v3525
        %v3662 = vunpack.c.l.b16 %v3526
        %v3663 = vunpack.c.l.b16 %v3527
        %v3664 = vunpack.c.l.b16 %v3528
        %v3665 = vunpack.c.l.b16 %v3529
        %v3666 = vunpack.c.l.b16 %v3530
        %v3667 = vunpack.c.l.b16 %v3531
        %v3668 = vunpack.c.l.b16 %v3532
        %v3669 = vunpack.c.l.b16 %v3533
        %v3670 = vunpack.c.l.b16 %v3534
        %v3671 = vunpack.c.l.b16 %v3535
        %v3672 = vunpack.c.l.b16 %v3536
        %v3673 = vunpack.c.l.b16 %v3537
        %v3674 = vunpack.c.l.b16 %v3538
        %v3675 = vpack.c.b16 %v3612, %v3611
        %v3676 = vpack.c.b16 %v3614, %v3613
        %v3677 = vpack.c.b16 %v3616, %v3615
        %v3678 = vpack.c.b16 %v3618, %v3617
        %v3679 = vpack.c.b16 %v3620, %v3619
        %v3680 = vpack.c.b16 %v3622, %v3621
        %v3681 = vpack.c.b16 %v3624, %v3623
        %v3682 = vpack.c.b16 %v3626, %v3625
        %v3683 = vpack.c.b16 %v3628, %v3627
        %v3684 = vpack.c.b16 %v3630, %v3629
        %v3685 = vpack.c.b16 %v3632, %v3631
        %v3686 = vpack.c.b16 %v3634, %v3633
        %v3687 = vpack.c.b16 %v3636, %v3635
        %v3688 = vpack.c.b16 %v3638, %v3637
        %v3689 = vpack.c.b16 %v3640, %v3639
        %v3690 = vpack.c.b16 %v3642, %v3641
        %v3691 = vpack.c.b16 %v3644, %v3643
        %v3692 = vpack.c.b16 %v3646, %v3645
        %v3693 = vpack.c.b16 %v3648, %v3647
        %v3694 = vpack.c.b16 %v3650, %v3649
        %v3695 = vpack.c.b16 %v3652, %v3651
        %v3696 = vpack.c.b16 %v3654, %v3653
        %v3697 = vpack.c.b16 %v3656, %v3655
        %v3698 = vpack.c.b16 %v3658, %v3657
        %v3699 = vpack.c.b16 %v3660, %v3659
        %v3700 = vpack.c.b16 %v3662, %v3661
        %v3701 = vpack.c.b16 %v3664, %v3663
        %v3702 = vpack.c.b16 %v3666, %v3665
        %v3703 = vpack.c.b16 %v3668, %v3667
        %v3704 = vpack.c.b16 %v3670, %v3669
        %v3705 = vpack.c.b16 %v3672, %v3671
        %v3706 = vpack.c.b16 %v3674, %v3673
        %3739 = vmatprep.subr.bf16.mxu0 0
        %3740 = vmatpush1.bf16.msra.mxu0 %v3675
        %3741 = vmatprep.subr.bf16.mxu0 0
        %3742 = vmatpush1.bf16.msra.mxu0 %v3676
        %3743 = vmatprep.subr.bf16.mxu0 0
        %3744 = vmatpush1.bf16.msra.mxu0 %v3677
        %3745 = vmatprep.subr.bf16.mxu0 0
        %3746 = vmatpush1.bf16.msra.mxu0 %v3678
        %3747 = vmatprep.subr.bf16.mxu0 0
        %3748 = vmatpush1.bf16.msra.mxu0 %v3679
        %3749 = vmatprep.subr.bf16.mxu0 0
        %3750 = vmatpush1.bf16.msra.mxu0 %v3680
        %3751 = vmatprep.subr.bf16.mxu0 0
        %3752 = vmatpush1.bf16.msra.mxu0 %v3681
        %3753 = vmatprep.subr.bf16.mxu0 0
        %3754 = vmatpush1.bf16.msra.mxu0 %v3682
        %3755 = vmatprep.subr.bf16.mxu0 0
        %3756 = vmatpush1.bf16.msra.mxu0 %v3683
        %3757 = vmatprep.subr.bf16.mxu0 0
        %3758 = vmatpush1.bf16.msra.mxu0 %v3684
        %3759 = vmatprep.subr.bf16.mxu0 0
        %3760 = vmatpush1.bf16.msra.mxu0 %v3685
        %3761 = vmatprep.subr.bf16.mxu0 0
        %3762 = vmatpush1.bf16.msra.mxu0 %v3686
        %3763 = vmatprep.subr.bf16.mxu0 0
        %3764 = vmatpush1.bf16.msra.mxu0 %v3687
        %3765 = vmatprep.subr.bf16.mxu0 0
        %3766 = vmatpush1.bf16.msra.mxu0 %v3688
        %3767 = vmatprep.subr.bf16.mxu0 0
        %3768 = vmatpush1.bf16.msra.mxu0 %v3689
        %3769 = vmatprep.subr.bf16.mxu0 0
        %3770 = vmatpush1.bf16.msra.mxu0 %v3690
        %3771 = vmatprep.mubr.bf16.mxu0 %v3471
        %3772 = vmatmul.mubr.bf16.gmra.mrb[0].mxu0 %v3470
        %v3773 = vpop.f32.mrb[0].mxu0
        %v3774 = vadd.f32 %v3545, %v3773
        %v3775 = vpop.f32.mrb[0].mxu0
        %v3776 = vpop.f32.mrb[0].mxu0
        %v3777 = vpop.f32.mrb[0].mxu0
        %3778 = vdwg.mxu0
        %3779 = vmatprep.subr.bf16.mxu0 0
        %3780 = vmatpush1.bf16.msra.mxu0 %v3691
        %3781 = vmatprep.subr.bf16.mxu0 0
        %3782 = vmatpush1.bf16.msra.mxu0 %v3692
        %3783 = vmatprep.subr.bf16.mxu0 0
        %3784 = vmatpush1.bf16.msra.mxu0 %v3693
        %3785 = vmatprep.subr.bf16.mxu0 0
        %3786 = vmatpush1.bf16.msra.mxu0 %v3694
        %3787 = vmatprep.subr.bf16.mxu0 0
        %3788 = vmatpush1.bf16.msra.mxu0 %v3695
        %3789 = vmatprep.subr.bf16.mxu0 0
        %3790 = vmatpush1.bf16.msra.mxu0 %v3696
        %3791 = vmatprep.subr.bf16.mxu0 0
        %3792 = vmatpush1.bf16.msra.mxu0 %v3697
        %3793 = vmatprep.subr.bf16.mxu0 0
        %3794 = vmatpush1.bf16.msra.mxu0 %v3698
        %3795 = vmatprep.subr.bf16.mxu0 0
        %3796 = vmatpush1.bf16.msra.mxu0 %v3699
        %3797 = vmatprep.subr.bf16.mxu0 0
        %3798 = vmatpush1.bf16.msra.mxu0 %v3700
        %3799 = vmatprep.subr.bf16.mxu0 0
        %3800 = vmatpush1.bf16.msra.mxu0 %v3701
        %3801 = vmatprep.subr.bf16.mxu0 0
        %3802 = vmatpush1.bf16.msra.mxu0 %v3702
        %3803 = vmatprep.subr.bf16.mxu0 0
        %3804 = vmatpush1.bf16.msra.mxu0 %v3703
        %3805 = vmatprep.subr.bf16.mxu0 0
        %3806 = vmatpush1.bf16.msra.mxu0 %v3704
        %3807 = vmatprep.subr.bf16.mxu0 0
        %3808 = vmatpush1.bf16.msra.mxu0 %v3705
        %3809 = vmatprep.subr.bf16.mxu0 0
        %3810 = vmatpush1.bf16.msra.mxu0 %v3706
        %3811 = vmatprep.mubr.bf16.mxu0 %v3473
        %3812 = vmatmul.mubr.bf16.gmra.mrb[0].mxu0 %v3472
        %v3813 = vpop.f32.mrb[0].mxu0
        %v3814 = vadd.f32 %v3774, %v3813
        %v3815 = vpop.f32.mrb[0].mxu0
        %v3816 = vpop.f32.mrb[0].mxu0
        %v3817 = vpop.f32.mrb[0].mxu0
        %3818 = vdwg.mxu0
        %v3819 = vadd.f32 %v3134, %v3814
        %s3820 = scalar_lea.vmem %s14, 1
        %v3821 = vld [vmem:[%s3820] sm:$0x1]
        %s3822 = scalar_lea.vmem %s15, 1
        %v3823 = vld [vmem:[%s3822] sm:$0x1]
        %3824 = vadd.xlane.f32.xlu0 %v3819
        %v3825 = vpop.xlane.xlu0 %3824
        %v3826 = vmul.f32 %v3825, %v659
        %v3827 = vsub.f32 %v3819, %v3826
        %v3828 = vmul.f32 %v3827, %v3827
        %3829 = vadd.xlane.f32.xlu0 %v3828
        %v3830 = vpop.xlane.xlu0 %3829
        %v3831 = vmul.f32 %v3830, %v659
        %v3832 = vadd.f32 %v3831, 1e-12
        %v3833 = vrsqrt.pop %v3832
        %v3834 = vmul.f32 %v3827, %v3833
        %v3836 = vlaneseq
        %v3837 = vshrl.u32 %v3836, 7
        %v3838 = vsub.s32 0, %v3837
        %v3839 = vrot.slane %v3821, %v3838
        %v3841 = vmul.f32 %v3834, %v3839
        %v3843 = vlaneseq
        %v3844 = vshrl.u32 %v3843, 7
        %v3845 = vsub.s32 0, %v3844
        %v3846 = vrot.slane %v3823, %v3845
        %v3848 = vadd.f32 %v3841, %v3846
        %3849 = vst [vmem:[%s652] sm:$0x1] %v3848
        %s3850 = sand.u32 %s393, 1
        %s3851 = scalar_lea.sflag [#allocation4], %s3850
        %s3852 = sand.u32 %s393, 1
        %s3853 = scalar_lea.vmem [#allocation16], %s3852
        // Predicated region
        $region117: #{tpu_custom_call.1} parent=83 // pred_check
          %p3854 = pneg %p403
        $region118: #{tpu_custom_call.1} parent=83 // pred_check_branch
          %3856 = sbr.rel (%p3854) target = $region120
        $region119: #{tpu_custom_call.1} parent=83 // pred_region
          %s3858 = ssub.s32 16, 16
          %3859 = vsyncadd %s3851, %s3858
          %s3860 = smul.addr %s39, 16
          %s3861 = scalar_lea.hbm %s16, %s3860
          %s3863 = sshll.u32 %s3853, 4
          %s3864 = int_to_ptr.vmem [resolvable:$true] %s3863
          %3866 = dma.vmem_to_hbm [thread:$0]  %s3864, 16, %s3861, %s3851
        $region120: #{tpu_custom_call.1} parent=83 // pred_fallthru
          _
      $region84: #{tpu_custom_call.1} parent=5 // pred_fallthru
        _
      %p3867 = scmp.le.s32.totalorder 2, %s34
      // Predicated region
      $region121: #{tpu_custom_call.1} parent=5 // pred_check
        %p3868 = pneg %p3867
      $region122: #{tpu_custom_call.1} parent=5 // pred_check_branch
        %3870 = sbr.rel (%p3868) target = $region124
      $region123: #{tpu_custom_call.1} parent=5 // pred_region
        %s3871 = ssub.s32 %s34, 2
        // Predicated region
        $region125: #{tpu_custom_call.1} parent=123 // pred_check
          %p3872 = pneg %p409
        $region126: #{tpu_custom_call.1} parent=123 // pred_check_branch
          %3874 = sbr.rel (%p3872) target = $region128
        $region127: #{tpu_custom_call.1} parent=123 // pred_region
          %s3875 = sand.u32 %s394, 1
          %s3876 = scalar_lea.sflag [#allocation4], %s3875
          %s3877 = sand.u32 %s394, 1
          %s3878 = scalar_lea.vmem [#allocation16], %s3877
          %3879 = dma.done %s3876, 16
        $region128: #{tpu_custom_call.1} parent=123 // pred_fallthru
          _
      $region124: #{tpu_custom_call.1} parent=5 // pred_fallthru
        _
    $region6: #{tpu_custom_call.1} parent=1 // loop_footer
      %s38 = sadd.s32 1, %s34
    $region7: #{tpu_custom_call.1} parent=1 // loop_footer_branch
      %33 = sbr.rel target = $region3
    $region8: #{tpu_custom_call.1} parent=1 // loop_exit
      _
    %3880 = vsyncpa [#allocation3], 1
    %s3881 = scalar_lea.sflag [#allocation3], 1
    %3882 = vsyncpa %s3881, 1
    %3883 = vsyncpa [#allocation6], 1
    %s3884 = scalar_lea.sflag [#allocation6], 1
    %3885 = vsyncpa %s3884, 1
    %3886 = vsyncpa [#allocation9], 1
    %3887 = vsyncpa [#allocation12], 1
    %3888 = vsyncpa [#allocation15], 1
    %3889 = vsyncpa [#allocation4], 1
    %s3890 = scalar_lea.sflag [#allocation4], 1
    %3891 = vsyncpa %s3890, 1

</llo_original>
